<compile_context>
chip_gen: v5e
topology: v5e:2x2
jax: 0.10.0
libtpu: 0.0.40
codegen_flags: <defaults>
</compile_context>

<pallas_src>
import jax
import jax.numpy as jnp
from jax import lax
from jax.experimental import pallas as pl
from jax.experimental.pallas import tpu as pltpu


def _round_up(a, b):
    return ((a + b - 1) // b) * b


def stacked_mirrored_zdilated_sepconv3d(x, dw_weights, pw_weight, *,
                                        kernel_size=3, xypadding=1,
                                        zdilations=(1, 2, 3), z_tile=8):
    """Forward of StackedMirroredZDilatedSeparableConv3d.

    x          : [1, C, X, Y, Z]   (batch must be 1, matching the PyTorch module)
    dw_weights : [B, C, k, k, k]   depthwise Conv3d weights, one per z-dilation
    pw_weight  : [Cout, B*C]       pointwise 1x1x1 Conv3d weight
    returns    : [1, Cout, X_out, Y_out, Z]
    """
    if x.shape[0] != 1:
        raise NotImplementedError("batch size > 1 not supported (matches ZPad3D)")
    k = int(kernel_size)
    if k % 2 != 1:
        raise NotImplementedError("only odd kernel_size supported")
    zdilations = tuple(int(d) for d in zdilations)
    B = len(zdilations)
    _, C, X, Y, Z = x.shape
    Cout, K = pw_weight.shape
    assert K == B * C
    assert dw_weights.shape == (B, C, k, k, k)

    # All branches must produce the same Z extent (the channel concat requires
    # it); for odd k this means 2*p_b == d*(k-1), i.e. k == 3 or all d == 1.
    for d in zdilations:
        if 2 * (d - 1 + k // 2) != d * (k - 1):
            raise NotImplementedError(
                "branch z-shapes differ; use kernel_size=3 (or all dilations==1)")

    zpad_max = max(zdilations) - 1 + k // 2          # == self.zpad in PyTorch
    if zpad_max > Z - 1:
        # single-reflection window trick (and torch reflect pad) needs pad < Z
        raise NotImplementedError("max z-padding must be < Z (single reflection)")

    X_out = X + 2 * xypadding - (k - 1)
    Y_out = Y + 2 * xypadding - (k - 1)
    assert X_out >= 1 and Y_out >= 1

    Xp, Yp = X + 2 * xypadding, Y + 2 * xypadding
    P = Xp * Yp
    PL = _round_up(P, 128)                 # fused (x, y) plane on the lane axis
    Zp = Z + 2 * zpad_max

    Tz = max(1, min(int(z_tile), Z))
    if Z % Tz != 0:
        Tz = Z                             # TODO(synk): ragged last tile
    nZ = Z // Tz
    ZW = Tz + 2 * zpad_max                 # z halo window per output tile
    R = B * k * k * k

    # ---------------- wrapper-side layout prep (XLA copy ops) ----------------
    # TODO(synk): fold this relayout into the kernel input DMA to save the
    #             extra HBM round trip at production volume sizes.
    x0 = jnp.moveaxis(x[0], -1, 0)                                  # [Z, C, X, Y]
    x0 = jnp.pad(x0, ((zpad_max, zpad_max), (0, 0), (0, 0), (0, 0)),
                 mode="reflect")            # one shared mirror pad (max window)
    x0 = jnp.pad(x0, ((0, 0), (0, 0), (xypadding, xypadding),
                      (xypadding, xypadding)))      # convs' zero xy-padding
    xp = x0.reshape(Zp, C, P)
    if PL != P:
        xp = jnp.pad(xp, ((0, 0), (0, 0), (0, PL - P)))             # lane-align

    # depthwise taps as [R, C, 1]: sublane-oriented per-channel weight columns
    # (broadcast natively along lanes/leading dims inside the kernel)
    dw_rows = jnp.transpose(dw_weights, (0, 2, 3, 4, 1)).reshape(R, C)[:, :, None]
    # pointwise as [B, Cout, C] so each branch slice is a leading-dim index
    pw_b = jnp.transpose(pw_weight.reshape(Cout, B, C), (1, 0, 2))

    def kernel(xp_ref, dw_ref, pw_ref, o_ref):
        t = pl.program_id(0)
        zstart = pl.multiple_of(t * Tz, Tz)
        xw = xp_ref[pl.ds(zstart, ZW)].astype(jnp.float32)          # [ZW, C, PL]

        # Hoisted lane rotations: one per (kx, ky), shared by every branch and
        # z-tap.  Wrapped tail lands beyond the valid output plane positions.
        xsh = []
        for kx in range(k):
            for ky in range(k):
                s = kx * Yp + ky
                if s == 0:
                    xsh.append(xw)
                else:
                    xsh.append(jnp.concatenate(
                        [xw[:, :, s:], xw[:, :, :s]], axis=-1))

        out_acc = jnp.zeros((Tz, Cout, PL), jnp.float32)
        for b, d in enumerate(zdilations):
            z0 = zpad_max - (d - 1 + k // 2)   # this branch's mirrored window
            acc = jnp.zeros((Tz, C, PL), jnp.float32)
            for kx in range(k):
                for ky in range(k):
                    xs = xsh[kx * k + ky]
                    for kz in range(k):
                        row = ((b * k + kx) * k + ky) * k + kz
                        zoff = z0 + kz * d
                        w = dw_ref[row].astype(jnp.float32)          # [C, 1]
                        acc = acc + xs[zoff:zoff + Tz] * w
            # Fold this branch's pointwise contribution immediately (single
            # live accumulator): [Tz,Cout,C] @ [Tz,C,PL] -> [Tz,Cout,PL] (MXU,
            # lane-dense N = PL).
            pw_t = jnp.broadcast_to(pw_ref[b].astype(jnp.float32), (Tz, Cout, C))
            out_acc = out_acc + lax.dot_general(
                pw_t, acc,
                dimension_numbers=(((2,), (1,)), ((0,), (0,))),
                preferred_element_type=jnp.float32)

        o_ref[...] = out_acc.astype(o_ref.dtype)

    out_k = pl.pallas_call(
        kernel,
        out_shape=jax.ShapeDtypeStruct((Z, Cout, PL), x.dtype),
        grid=(nZ,),
        in_specs=[
            pl.BlockSpec((Zp, C, PL), lambda t: (0, 0, 0)),   # whole padded input
            pl.BlockSpec((R, C, 1), lambda t: (0, 0, 0)),     # depthwise taps
            pl.BlockSpec((B, Cout, C), lambda t: (0, 0, 0)),  # pointwise weight
        ],
        out_specs=pl.BlockSpec((Tz, Cout, PL), lambda t: (t, 0, 0)),
        compiler_params=pltpu.CompilerParams(
            dimension_semantics=("parallel",),   # >=2 steps: feeds both v7x TCs
            vmem_limit_bytes=32 * 1024 * 1024,   # raises v5e default, safe on v7x
        ),
    )(xp, dw_rows, pw_b)

    # un-pad the fused plane and restore NCDHW (tiny output-side copy)
    out = out_k[:, :, :P].reshape(Z, Cout, Xp, Yp)[:, :, :X_out, :Y_out]
    out = jnp.transpose(out, (1, 2, 3, 0))[None]          # [1, Cout, X, Y, Z]
    return out


def _reference(x, dw_weights, pw_weight, *, kernel_size, xypadding, zdilations):
    """Pure-JAX (XLA) reference that mirrors the PyTorch forward exactly."""
    k = int(kernel_size)
    _, C, _, _, _ = x.shape
    branches = []
    for b, d in enumerate(zdilations):
        p = d - 1 + k // 2                               # ZPad3D reflect padding
        xz = jnp.pad(x, ((0, 0), (0, 0), (0, 0), (0, 0), (p, p)), mode="reflect")
        w = dw_weights[b][:, None]                       # [C, 1, k, k, k]
        y = lax.conv_general_dilated(
            xz, w, window_strides=(1, 1, 1),
            padding=((xypadding, xypadding), (xypadding, xypadding), (0, 0)),
            rhs_dilation=(1, 1, d),
            dimension_numbers=("NCDHW", "OIDHW", "NCDHW"),
            feature_group_count=C,
            precision=lax.Precision.HIGHEST)
        branches.append(y)
    cat = jnp.concatenate(branches, axis=1)              # [1, B*C, X, Y, Z]
    return jnp.einsum("oq,nqxyz->noxyz", pw_weight, cat,
                      precision=lax.Precision.HIGHEST)


if __name__ == "__main__":
    key = jax.random.PRNGKey(0)
    k_x, k_dw, k_pw = jax.random.split(key, 3)

    C_in, C_out = 4, 8
    ksz, xypad = 3, 1
    zdil = (1, 2, 3)
    Xd, Yd, Zd = 8, 8, 16

    x = jax.random.normal(k_x, (1, C_in, Xd, Yd, Zd), dtype=jnp.float32)
    dw = 0.2 * jax.random.normal(k_dw, (len(zdil), C_in, ksz, ksz, ksz),
                                 dtype=jnp.float32)
    pw = 0.3 * jax.random.normal(k_pw, (C_out, len(zdil) * C_in), dtype=jnp.float32)

    y = stacked_mirrored_zdilated_sepconv3d(
        x, dw, pw, kernel_size=ksz, xypadding=xypad, zdilations=zdil)
    y = jax.block_until_ready(y)

    y_ref = _reference(x, dw, pw, kernel_size=ksz, xypadding=xypad, zdilations=zdil)
    assert y.shape == (1, C_out, Xd, Yd, Zd) and y.dtype == x.dtype
    rel_err = float(jnp.max(jnp.abs(y - y_ref)) / (jnp.max(jnp.abs(y_ref)) + 1e-6))
    assert rel_err < 1e-2, f"kernel/reference mismatch: rel_err={rel_err}"
    print("KERNEL_OK")
</pallas_src>

<mosaic_0001>
module attributes {stable_mosaic.version = 11 : i64} {
  func.func @kernel(%arg0: i32, %arg1: memref<22x4x128xf32, #tpu.memory_space<vmem>>, %arg2: memref<81x4x1xf32, #tpu.memory_space<vmem>>, %arg3: memref<3x8x4xf32, #tpu.memory_space<vmem>>, %arg4: memref<8x8x128xf32, #tpu.memory_space<vmem>>) attributes {dimension_semantics = [#tpu.dimension_semantics<parallel>], iteration_bounds = array<i64: 2>, scalar_prefetch = 0 : i64, scratch_operands = 0 : i64, tpu.core_type = #tpu.core_type<tc>, window_params = [{pipeline_mode = #tpu.pipeline_mode<synchronous>, transform_indices = @transform_0, window_bounds = array<i64: 22, 4, 128>}, {pipeline_mode = #tpu.pipeline_mode<synchronous>, transform_indices = @transform_1, window_bounds = array<i64: 81, 4, 1>}, {pipeline_mode = #tpu.pipeline_mode<synchronous>, transform_indices = @transform_2, window_bounds = array<i64: 3, 8, 4>}, {transform_indices = @transform_3, window_bounds = array<i64: 8, 8, 128>}]} {
    %c8_i32 = arith.constant 8 : i32
    %0 = arith.muli %arg0, %c8_i32 : i32
    %1 = tpu.assume_multiple %0, 8 : i32
    %2 = arith.index_cast %1 : i32 to index
    %c0 = arith.constant 0 : index
    %c0_0 = arith.constant 0 : index
    %3 = vector.load %arg1[%2, %c0, %c0_0] : memref<22x4x128xf32, #tpu.memory_space<vmem>>, vector<14x4x128xf32>
    %4 = vector.extract_strided_slice %3 {offsets = [0, 0, 1], sizes = [14, 4, 127], strides = [1, 1, 1]} : vector<14x4x128xf32> to vector<14x4x127xf32>
    %5 = vector.extract_strided_slice %3 {offsets = [0, 0, 0], sizes = [14, 4, 1], strides = [1, 1, 1]} : vector<14x4x128xf32> to vector<14x4x1xf32>
    %6 = tpu.concatenate %4, %5 in 2 : vector<14x4x127xf32>, vector<14x4x1xf32> -> vector<14x4x128xf32>
    %7 = vector.extract_strided_slice %3 {offsets = [0, 0, 2], sizes = [14, 4, 126], strides = [1, 1, 1]} : vector<14x4x128xf32> to vector<14x4x126xf32>
    %8 = vector.extract_strided_slice %3 {offsets = [0, 0, 0], sizes = [14, 4, 2], strides = [1, 1, 1]} : vector<14x4x128xf32> to vector<14x4x2xf32>
    %9 = tpu.concatenate %7, %8 in 2 : vector<14x4x126xf32>, vector<14x4x2xf32> -> vector<14x4x128xf32>
    %10 = vector.extract_strided_slice %3 {offsets = [0, 0, 10], sizes = [14, 4, 118], strides = [1, 1, 1]} : vector<14x4x128xf32> to vector<14x4x118xf32>
    %11 = vector.extract_strided_slice %3 {offsets = [0, 0, 0], sizes = [14, 4, 10], strides = [1, 1, 1]} : vector<14x4x128xf32> to vector<14x4x10xf32>
    %12 = tpu.concatenate %10, %11 in 2 : vector<14x4x118xf32>, vector<14x4x10xf32> -> vector<14x4x128xf32>
    %13 = vector.extract_strided_slice %3 {offsets = [0, 0, 11], sizes = [14, 4, 117], strides = [1, 1, 1]} : vector<14x4x128xf32> to vector<14x4x117xf32>
    %14 = vector.extract_strided_slice %3 {offsets = [0, 0, 0], sizes = [14, 4, 11], strides = [1, 1, 1]} : vector<14x4x128xf32> to vector<14x4x11xf32>
    %15 = tpu.concatenate %13, %14 in 2 : vector<14x4x117xf32>, vector<14x4x11xf32> -> vector<14x4x128xf32>
    %16 = vector.extract_strided_slice %3 {offsets = [0, 0, 12], sizes = [14, 4, 116], strides = [1, 1, 1]} : vector<14x4x128xf32> to vector<14x4x116xf32>
    %17 = vector.extract_strided_slice %3 {offsets = [0, 0, 0], sizes = [14, 4, 12], strides = [1, 1, 1]} : vector<14x4x128xf32> to vector<14x4x12xf32>
    %18 = tpu.concatenate %16, %17 in 2 : vector<14x4x116xf32>, vector<14x4x12xf32> -> vector<14x4x128xf32>
    %19 = vector.extract_strided_slice %3 {offsets = [0, 0, 20], sizes = [14, 4, 108], strides = [1, 1, 1]} : vector<14x4x128xf32> to vector<14x4x108xf32>
    %20 = vector.extract_strided_slice %3 {offsets = [0, 0, 0], sizes = [14, 4, 20], strides = [1, 1, 1]} : vector<14x4x128xf32> to vector<14x4x20xf32>
    %21 = tpu.concatenate %19, %20 in 2 : vector<14x4x108xf32>, vector<14x4x20xf32> -> vector<14x4x128xf32>
    %22 = vector.extract_strided_slice %3 {offsets = [0, 0, 21], sizes = [14, 4, 107], strides = [1, 1, 1]} : vector<14x4x128xf32> to vector<14x4x107xf32>
    %23 = vector.extract_strided_slice %3 {offsets = [0, 0, 0], sizes = [14, 4, 21], strides = [1, 1, 1]} : vector<14x4x128xf32> to vector<14x4x21xf32>
    %24 = tpu.concatenate %22, %23 in 2 : vector<14x4x107xf32>, vector<14x4x21xf32> -> vector<14x4x128xf32>
    %25 = vector.extract_strided_slice %3 {offsets = [0, 0, 22], sizes = [14, 4, 106], strides = [1, 1, 1]} : vector<14x4x128xf32> to vector<14x4x106xf32>
    %26 = vector.extract_strided_slice %3 {offsets = [0, 0, 0], sizes = [14, 4, 22], strides = [1, 1, 1]} : vector<14x4x128xf32> to vector<14x4x22xf32>
    %27 = tpu.concatenate %25, %26 in 2 : vector<14x4x106xf32>, vector<14x4x22xf32> -> vector<14x4x128xf32>
    %cst = arith.constant 0.000000e+00 : f32
    %28 = vector.broadcast %cst : f32 to vector<8x8x128xf32>
    %cst_1 = arith.constant 0.000000e+00 : f32
    %29 = vector.broadcast %cst_1 : f32 to vector<8x4x128xf32>
    %c0_2 = arith.constant 0 : index
    %c0_3 = arith.constant 0 : index
    %c0_4 = arith.constant 0 : index
    %30 = vector.load %arg2[%c0_2, %c0_3, %c0_4] : memref<81x4x1xf32, #tpu.memory_space<vmem>>, vector<1x4x1xf32>
    %31 = vector.shape_cast %30 : vector<1x4x1xf32> to vector<4x1xf32>
    %32 = vector.extract_strided_slice %3 {offsets = [2, 0, 0], sizes = [8, 4, 128], strides = [1, 1, 1]} : vector<14x4x128xf32> to vector<8x4x128xf32>
    %33 = vector.shape_cast %31 : vector<4x1xf32> to vector<1x4x1xf32>
    %34 = vector.broadcast %33 : vector<1x4x1xf32> to vector<8x4x128xf32>
    %35 = arith.mulf %32, %34 : vector<8x4x128xf32>
    %36 = arith.addf %29, %35 : vector<8x4x128xf32>
    %c1 = arith.constant 1 : index
    %c0_5 = arith.constant 0 : index
    %c0_6 = arith.constant 0 : index
    %37 = vector.load %arg2[%c1, %c0_5, %c0_6] : memref<81x4x1xf32, #tpu.memory_space<vmem>>, vector<1x4x1xf32>
    %38 = vector.shape_cast %37 : vector<1x4x1xf32> to vector<4x1xf32>
    %39 = vector.extract_strided_slice %3 {offsets = [3, 0, 0], sizes = [8, 4, 128], strides = [1, 1, 1]} : vector<14x4x128xf32> to vector<8x4x128xf32>
    %40 = vector.shape_cast %38 : vector<4x1xf32> to vector<1x4x1xf32>
    %41 = vector.broadcast %40 : vector<1x4x1xf32> to vector<8x4x128xf32>
    %42 = arith.mulf %39, %41 : vector<8x4x128xf32>
    %43 = arith.addf %36, %42 : vector<8x4x128xf32>
    %c2 = arith.constant 2 : index
    %c0_7 = arith.constant 0 : index
    %c0_8 = arith.constant 0 : index
    %44 = vector.load %arg2[%c2, %c0_7, %c0_8] : memref<81x4x1xf32, #tpu.memory_space<vmem>>, vector<1x4x1xf32>
    %45 = vector.shape_cast %44 : vector<1x4x1xf32> to vector<4x1xf32>
    %46 = vector.extract_strided_slice %3 {offsets = [4, 0, 0], sizes = [8, 4, 128], strides = [1, 1, 1]} : vector<14x4x128xf32> to vector<8x4x128xf32>
    %47 = vector.shape_cast %45 : vector<4x1xf32> to vector<1x4x1xf32>
    %48 = vector.broadcast %47 : vector<1x4x1xf32> to vector<8x4x128xf32>
    %49 = arith.mulf %46, %48 : vector<8x4x128xf32>
    %50 = arith.addf %43, %49 : vector<8x4x128xf32>
    %c3 = arith.constant 3 : index
    %c0_9 = arith.constant 0 : index
    %c0_10 = arith.constant 0 : index
    %51 = vector.load %arg2[%c3, %c0_9, %c0_10] : memref<81x4x1xf32, #tpu.memory_space<vmem>>, vector<1x4x1xf32>
    %52 = vector.shape_cast %51 : vector<1x4x1xf32> to vector<4x1xf32>
    %53 = vector.extract_strided_slice %6 {offsets = [2, 0, 0], sizes = [8, 4, 128], strides = [1, 1, 1]} : vector<14x4x128xf32> to vector<8x4x128xf32>
    %54 = vector.shape_cast %52 : vector<4x1xf32> to vector<1x4x1xf32>
    %55 = vector.broadcast %54 : vector<1x4x1xf32> to vector<8x4x128xf32>
    %56 = arith.mulf %53, %55 : vector<8x4x128xf32>
    %57 = arith.addf %50, %56 : vector<8x4x128xf32>
    %c4 = arith.constant 4 : index
    %c0_11 = arith.constant 0 : index
    %c0_12 = arith.constant 0 : index
    %58 = vector.load %arg2[%c4, %c0_11, %c0_12] : memref<81x4x1xf32, #tpu.memory_space<vmem>>, vector<1x4x1xf32>
    %59 = vector.shape_cast %58 : vector<1x4x1xf32> to vector<4x1xf32>
    %60 = vector.extract_strided_slice %6 {offsets = [3, 0, 0], sizes = [8, 4, 128], strides = [1, 1, 1]} : vector<14x4x128xf32> to vector<8x4x128xf32>
    %61 = vector.shape_cast %59 : vector<4x1xf32> to vector<1x4x1xf32>
    %62 = vector.broadcast %61 : vector<1x4x1xf32> to vector<8x4x128xf32>
    %63 = arith.mulf %60, %62 : vector<8x4x128xf32>
    %64 = arith.addf %57, %63 : vector<8x4x128xf32>
    %c5 = arith.constant 5 : index
    %c0_13 = arith.constant 0 : index
    %c0_14 = arith.constant 0 : index
    %65 = vector.load %arg2[%c5, %c0_13, %c0_14] : memref<81x4x1xf32, #tpu.memory_space<vmem>>, vector<1x4x1xf32>
    %66 = vector.shape_cast %65 : vector<1x4x1xf32> to vector<4x1xf32>
    %67 = vector.extract_strided_slice %6 {offsets = [4, 0, 0], sizes = [8, 4, 128], strides = [1, 1, 1]} : vector<14x4x128xf32> to vector<8x4x128xf32>
    %68 = vector.shape_cast %66 : vector<4x1xf32> to vector<1x4x1xf32>
    %69 = vector.broadcast %68 : vector<1x4x1xf32> to vector<8x4x128xf32>
    %70 = arith.mulf %67, %69 : vector<8x4x128xf32>
    %71 = arith.addf %64, %70 : vector<8x4x128xf32>
    %c6 = arith.constant 6 : index
    %c0_15 = arith.constant 0 : index
    %c0_16 = arith.constant 0 : index
    %72 = vector.load %arg2[%c6, %c0_15, %c0_16] : memref<81x4x1xf32, #tpu.memory_space<vmem>>, vector<1x4x1xf32>
    %73 = vector.shape_cast %72 : vector<1x4x1xf32> to vector<4x1xf32>
    %74 = vector.extract_strided_slice %9 {offsets = [2, 0, 0], sizes = [8, 4, 128], strides = [1, 1, 1]} : vector<14x4x128xf32> to vector<8x4x128xf32>
    %75 = vector.shape_cast %73 : vector<4x1xf32> to vector<1x4x1xf32>
    %76 = vector.broadcast %75 : vector<1x4x1xf32> to vector<8x4x128xf32>
    %77 = arith.mulf %74, %76 : vector<8x4x128xf32>
    %78 = arith.addf %71, %77 : vector<8x4x128xf32>
    %c7 = arith.constant 7 : index
    %c0_17 = arith.constant 0 : index
    %c0_18 = arith.constant 0 : index
    %79 = vector.load %arg2[%c7, %c0_17, %c0_18] : memref<81x4x1xf32, #tpu.memory_space<vmem>>, vector<1x4x1xf32>
    %80 = vector.shape_cast %79 : vector<1x4x1xf32> to vector<4x1xf32>
    %81 = vector.extract_strided_slice %9 {offsets = [3, 0, 0], sizes = [8, 4, 128], strides = [1, 1, 1]} : vector<14x4x128xf32> to vector<8x4x128xf32>
    %82 = vector.shape_cast %80 : vector<4x1xf32> to vector<1x4x1xf32>
    %83 = vector.broadcast %82 : vector<1x4x1xf32> to vector<8x4x128xf32>
    %84 = arith.mulf %81, %83 : vector<8x4x128xf32>
    %85 = arith.addf %78, %84 : vector<8x4x128xf32>
    %c8 = arith.constant 8 : index
    %c0_19 = arith.constant 0 : index
    %c0_20 = arith.constant 0 : index
    %86 = vector.load %arg2[%c8, %c0_19, %c0_20] : memref<81x4x1xf32, #tpu.memory_space<vmem>>, vector<1x4x1xf32>
    %87 = vector.shape_cast %86 : vector<1x4x1xf32> to vector<4x1xf32>
    %88 = vector.extract_strided_slice %9 {offsets = [4, 0, 0], sizes = [8, 4, 128], strides = [1, 1, 1]} : vector<14x4x128xf32> to vector<8x4x128xf32>
    %89 = vector.shape_cast %87 : vector<4x1xf32> to vector<1x4x1xf32>
    %90 = vector.broadcast %89 : vector<1x4x1xf32> to vector<8x4x128xf32>
    %91 = arith.mulf %88, %90 : vector<8x4x128xf32>
    %92 = arith.addf %85, %91 : vector<8x4x128xf32>
    %c9 = arith.constant 9 : index
    %c0_21 = arith.constant 0 : index
    %c0_22 = arith.constant 0 : index
    %93 = vector.load %arg2[%c9, %c0_21, %c0_22] : memref<81x4x1xf32, #tpu.memory_space<vmem>>, vector<1x4x1xf32>
    %94 = vector.shape_cast %93 : vector<1x4x1xf32> to vector<4x1xf32>
    %95 = vector.extract_strided_slice %12 {offsets = [2, 0, 0], sizes = [8, 4, 128], strides = [1, 1, 1]} : vector<14x4x128xf32> to vector<8x4x128xf32>
    %96 = vector.shape_cast %94 : vector<4x1xf32> to vector<1x4x1xf32>
    %97 = vector.broadcast %96 : vector<1x4x1xf32> to vector<8x4x128xf32>
    %98 = arith.mulf %95, %97 : vector<8x4x128xf32>
    %99 = arith.addf %92, %98 : vector<8x4x128xf32>
    %c10 = arith.constant 10 : index
    %c0_23 = arith.constant 0 : index
    %c0_24 = arith.constant 0 : index
    %100 = vector.load %arg2[%c10, %c0_23, %c0_24] : memref<81x4x1xf32, #tpu.memory_space<vmem>>, vector<1x4x1xf32>
    %101 = vector.shape_cast %100 : vector<1x4x1xf32> to vector<4x1xf32>
    %102 = vector.extract_strided_slice %12 {offsets = [3, 0, 0], sizes = [8, 4, 128], strides = [1, 1, 1]} : vector<14x4x128xf32> to vector<8x4x128xf32>
    %103 = vector.shape_cast %101 : vector<4x1xf32> to vector<1x4x1xf32>
    %104 = vector.broadcast %103 : vector<1x4x1xf32> to vector<8x4x128xf32>
    %105 = arith.mulf %102, %104 : vector<8x4x128xf32>
    %106 = arith.addf %99, %105 : vector<8x4x128xf32>
    %c11 = arith.constant 11 : index
    %c0_25 = arith.constant 0 : index
    %c0_26 = arith.constant 0 : index
    %107 = vector.load %arg2[%c11, %c0_25, %c0_26] : memref<81x4x1xf32, #tpu.memory_space<vmem>>, vector<1x4x1xf32>
    %108 = vector.shape_cast %107 : vector<1x4x1xf32> to vector<4x1xf32>
    %109 = vector.extract_strided_slice %12 {offsets = [4, 0, 0], sizes = [8, 4, 128], strides = [1, 1, 1]} : vector<14x4x128xf32> to vector<8x4x128xf32>
    %110 = vector.shape_cast %108 : vector<4x1xf32> to vector<1x4x1xf32>
    %111 = vector.broadcast %110 : vector<1x4x1xf32> to vector<8x4x128xf32>
    %112 = arith.mulf %109, %111 : vector<8x4x128xf32>
    %113 = arith.addf %106, %112 : vector<8x4x128xf32>
    %c12 = arith.constant 12 : index
    %c0_27 = arith.constant 0 : index
    %c0_28 = arith.constant 0 : index
    %114 = vector.load %arg2[%c12, %c0_27, %c0_28] : memref<81x4x1xf32, #tpu.memory_space<vmem>>, vector<1x4x1xf32>
    %115 = vector.shape_cast %114 : vector<1x4x1xf32> to vector<4x1xf32>
    %116 = vector.extract_strided_slice %15 {offsets = [2, 0, 0], sizes = [8, 4, 128], strides = [1, 1, 1]} : vector<14x4x128xf32> to vector<8x4x128xf32>
    %117 = vector.shape_cast %115 : vector<4x1xf32> to vector<1x4x1xf32>
    %118 = vector.broadcast %117 : vector<1x4x1xf32> to vector<8x4x128xf32>
    %119 = arith.mulf %116, %118 : vector<8x4x128xf32>
    %120 = arith.addf %113, %119 : vector<8x4x128xf32>
    %c13 = arith.constant 13 : index
    %c0_29 = arith.constant 0 : index
    %c0_30 = arith.constant 0 : index
    %121 = vector.load %arg2[%c13, %c0_29, %c0_30] : memref<81x4x1xf32, #tpu.memory_space<vmem>>, vector<1x4x1xf32>
    %122 = vector.shape_cast %121 : vector<1x4x1xf32> to vector<4x1xf32>
    %123 = vector.extract_strided_slice %15 {offsets = [3, 0, 0], sizes = [8, 4, 128], strides = [1, 1, 1]} : vector<14x4x128xf32> to vector<8x4x128xf32>
    %124 = vector.shape_cast %122 : vector<4x1xf32> to vector<1x4x1xf32>
    %125 = vector.broadcast %124 : vector<1x4x1xf32> to vector<8x4x128xf32>
    %126 = arith.mulf %123, %125 : vector<8x4x128xf32>
    %127 = arith.addf %120, %126 : vector<8x4x128xf32>
    %c14 = arith.constant 14 : index
    %c0_31 = arith.constant 0 : index
    %c0_32 = arith.constant 0 : index
    %128 = vector.load %arg2[%c14, %c0_31, %c0_32] : memref<81x4x1xf32, #tpu.memory_space<vmem>>, vector<1x4x1xf32>
    %129 = vector.shape_cast %128 : vector<1x4x1xf32> to vector<4x1xf32>
    %130 = vector.extract_strided_slice %15 {offsets = [4, 0, 0], sizes = [8, 4, 128], strides = [1, 1, 1]} : vector<14x4x128xf32> to vector<8x4x128xf32>
    %131 = vector.shape_cast %129 : vector<4x1xf32> to vector<1x4x1xf32>
    %132 = vector.broadcast %131 : vector<1x4x1xf32> to vector<8x4x128xf32>
    %133 = arith.mulf %130, %132 : vector<8x4x128xf32>
    %134 = arith.addf %127, %133 : vector<8x4x128xf32>
    %c15 = arith.constant 15 : index
    %c0_33 = arith.constant 0 : index
    %c0_34 = arith.constant 0 : index
    %135 = vector.load %arg2[%c15, %c0_33, %c0_34] : memref<81x4x1xf32, #tpu.memory_space<vmem>>, vector<1x4x1xf32>
    %136 = vector.shape_cast %135 : vector<1x4x1xf32> to vector<4x1xf32>
    %137 = vector.extract_strided_slice %18 {offsets = [2, 0, 0], sizes = [8, 4, 128], strides = [1, 1, 1]} : vector<14x4x128xf32> to vector<8x4x128xf32>
    %138 = vector.shape_cast %136 : vector<4x1xf32> to vector<1x4x1xf32>
    %139 = vector.broadcast %138 : vector<1x4x1xf32> to vector<8x4x128xf32>
    %140 = arith.mulf %137, %139 : vector<8x4x128xf32>
    %141 = arith.addf %134, %140 : vector<8x4x128xf32>
    %c16 = arith.constant 16 : index
    %c0_35 = arith.constant 0 : index
    %c0_36 = arith.constant 0 : index
    %142 = vector.load %arg2[%c16, %c0_35, %c0_36] : memref<81x4x1xf32, #tpu.memory_space<vmem>>, vector<1x4x1xf32>
    %143 = vector.shape_cast %142 : vector<1x4x1xf32> to vector<4x1xf32>
    %144 = vector.extract_strided_slice %18 {offsets = [3, 0, 0], sizes = [8, 4, 128], strides = [1, 1, 1]} : vector<14x4x128xf32> to vector<8x4x128xf32>
    %145 = vector.shape_cast %143 : vector<4x1xf32> to vector<1x4x1xf32>
    %146 = vector.broadcast %145 : vector<1x4x1xf32> to vector<8x4x128xf32>
    %147 = arith.mulf %144, %146 : vector<8x4x128xf32>
    %148 = arith.addf %141, %147 : vector<8x4x128xf32>
    %c17 = arith.constant 17 : index
    %c0_37 = arith.constant 0 : index
    %c0_38 = arith.constant 0 : index
    %149 = vector.load %arg2[%c17, %c0_37, %c0_38] : memref<81x4x1xf32, #tpu.memory_space<vmem>>, vector<1x4x1xf32>
    %150 = vector.shape_cast %149 : vector<1x4x1xf32> to vector<4x1xf32>
    %151 = vector.extract_strided_slice %18 {offsets = [4, 0, 0], sizes = [8, 4, 128], strides = [1, 1, 1]} : vector<14x4x128xf32> to vector<8x4x128xf32>
    %152 = vector.shape_cast %150 : vector<4x1xf32> to vector<1x4x1xf32>
    %153 = vector.broadcast %152 : vector<1x4x1xf32> to vector<8x4x128xf32>
    %154 = arith.mulf %151, %153 : vector<8x4x128xf32>
    %155 = arith.addf %148, %154 : vector<8x4x128xf32>
    %c18 = arith.constant 18 : index
    %c0_39 = arith.constant 0 : index
    %c0_40 = arith.constant 0 : index
    %156 = vector.load %arg2[%c18, %c0_39, %c0_40] : memref<81x4x1xf32, #tpu.memory_space<vmem>>, vector<1x4x1xf32>
    %157 = vector.shape_cast %156 : vector<1x4x1xf32> to vector<4x1xf32>
    %158 = vector.extract_strided_slice %21 {offsets = [2, 0, 0], sizes = [8, 4, 128], strides = [1, 1, 1]} : vector<14x4x128xf32> to vector<8x4x128xf32>
    %159 = vector.shape_cast %157 : vector<4x1xf32> to vector<1x4x1xf32>
    %160 = vector.broadcast %159 : vector<1x4x1xf32> to vector<8x4x128xf32>
    %161 = arith.mulf %158, %160 : vector<8x4x128xf32>
    %162 = arith.addf %155, %161 : vector<8x4x128xf32>
    %c19 = arith.constant 19 : index
    %c0_41 = arith.constant 0 : index
    %c0_42 = arith.constant 0 : index
    %163 = vector.load %arg2[%c19, %c0_41, %c0_42] : memref<81x4x1xf32, #tpu.memory_space<vmem>>, vector<1x4x1xf32>
    %164 = vector.shape_cast %163 : vector<1x4x1xf32> to vector<4x1xf32>
    %165 = vector.extract_strided_slice %21 {offsets = [3, 0, 0], sizes = [8, 4, 128], strides = [1, 1, 1]} : vector<14x4x128xf32> to vector<8x4x128xf32>
    %166 = vector.shape_cast %164 : vector<4x1xf32> to vector<1x4x1xf32>
    %167 = vector.broadcast %166 : vector<1x4x1xf32> to vector<8x4x128xf32>
    %168 = arith.mulf %165, %167 : vector<8x4x128xf32>
    %169 = arith.addf %162, %168 : vector<8x4x128xf32>
    %c20 = arith.constant 20 : index
    %c0_43 = arith.constant 0 : index
    %c0_44 = arith.constant 0 : index
    %170 = vector.load %arg2[%c20, %c0_43, %c0_44] : memref<81x4x1xf32, #tpu.memory_space<vmem>>, vector<1x4x1xf32>
    %171 = vector.shape_cast %170 : vector<1x4x1xf32> to vector<4x1xf32>
    %172 = vector.extract_strided_slice %21 {offsets = [4, 0, 0], sizes = [8, 4, 128], strides = [1, 1, 1]} : vector<14x4x128xf32> to vector<8x4x128xf32>
    %173 = vector.shape_cast %171 : vector<4x1xf32> to vector<1x4x1xf32>
    %174 = vector.broadcast %173 : vector<1x4x1xf32> to vector<8x4x128xf32>
    %175 = arith.mulf %172, %174 : vector<8x4x128xf32>
    %176 = arith.addf %169, %175 : vector<8x4x128xf32>
    %c21 = arith.constant 21 : index
    %c0_45 = arith.constant 0 : index
    %c0_46 = arith.constant 0 : index
    %177 = vector.load %arg2[%c21, %c0_45, %c0_46] : memref<81x4x1xf32, #tpu.memory_space<vmem>>, vector<1x4x1xf32>
    %178 = vector.shape_cast %177 : vector<1x4x1xf32> to vector<4x1xf32>
    %179 = vector.extract_strided_slice %24 {offsets = [2, 0, 0], sizes = [8, 4, 128], strides = [1, 1, 1]} : vector<14x4x128xf32> to vector<8x4x128xf32>
    %180 = vector.shape_cast %178 : vector<4x1xf32> to vector<1x4x1xf32>
    %181 = vector.broadcast %180 : vector<1x4x1xf32> to vector<8x4x128xf32>
    %182 = arith.mulf %179, %181 : vector<8x4x128xf32>
    %183 = arith.addf %176, %182 : vector<8x4x128xf32>
    %c22 = arith.constant 22 : index
    %c0_47 = arith.constant 0 : index
    %c0_48 = arith.constant 0 : index
    %184 = vector.load %arg2[%c22, %c0_47, %c0_48] : memref<81x4x1xf32, #tpu.memory_space<vmem>>, vector<1x4x1xf32>
    %185 = vector.shape_cast %184 : vector<1x4x1xf32> to vector<4x1xf32>
    %186 = vector.extract_strided_slice %24 {offsets = [3, 0, 0], sizes = [8, 4, 128], strides = [1, 1, 1]} : vector<14x4x128xf32> to vector<8x4x128xf32>
    %187 = vector.shape_cast %185 : vector<4x1xf32> to vector<1x4x1xf32>
    %188 = vector.broadcast %187 : vector<1x4x1xf32> to vector<8x4x128xf32>
    %189 = arith.mulf %186, %188 : vector<8x4x128xf32>
    %190 = arith.addf %183, %189 : vector<8x4x128xf32>
    %c23 = arith.constant 23 : index
    %c0_49 = arith.constant 0 : index
    %c0_50 = arith.constant 0 : index
    %191 = vector.load %arg2[%c23, %c0_49, %c0_50] : memref<81x4x1xf32, #tpu.memory_space<vmem>>, vector<1x4x1xf32>
    %192 = vector.shape_cast %191 : vector<1x4x1xf32> to vector<4x1xf32>
    %193 = vector.extract_strided_slice %24 {offsets = [4, 0, 0], sizes = [8, 4, 128], strides = [1, 1, 1]} : vector<14x4x128xf32> to vector<8x4x128xf32>
    %194 = vector.shape_cast %192 : vector<4x1xf32> to vector<1x4x1xf32>
    %195 = vector.broadcast %194 : vector<1x4x1xf32> to vector<8x4x128xf32>
    %196 = arith.mulf %193, %195 : vector<8x4x128xf32>
    %197 = arith.addf %190, %196 : vector<8x4x128xf32>
    %c24 = arith.constant 24 : index
    %c0_51 = arith.constant 0 : index
    %c0_52 = arith.constant 0 : index
    %198 = vector.load %arg2[%c24, %c0_51, %c0_52] : memref<81x4x1xf32, #tpu.memory_space<vmem>>, vector<1x4x1xf32>
    %199 = vector.shape_cast %198 : vector<1x4x1xf32> to vector<4x1xf32>
    %200 = vector.extract_strided_slice %27 {offsets = [2, 0, 0], sizes = [8, 4, 128], strides = [1, 1, 1]} : vector<14x4x128xf32> to vector<8x4x128xf32>
    %201 = vector.shape_cast %199 : vector<4x1xf32> to vector<1x4x1xf32>
    %202 = vector.broadcast %201 : vector<1x4x1xf32> to vector<8x4x128xf32>
    %203 = arith.mulf %200, %202 : vector<8x4x128xf32>
    %204 = arith.addf %197, %203 : vector<8x4x128xf32>
    %c25 = arith.constant 25 : index
    %c0_53 = arith.constant 0 : index
    %c0_54 = arith.constant 0 : index
    %205 = vector.load %arg2[%c25, %c0_53, %c0_54] : memref<81x4x1xf32, #tpu.memory_space<vmem>>, vector<1x4x1xf32>
    %206 = vector.shape_cast %205 : vector<1x4x1xf32> to vector<4x1xf32>
    %207 = vector.extract_strided_slice %27 {offsets = [3, 0, 0], sizes = [8, 4, 128], strides = [1, 1, 1]} : vector<14x4x128xf32> to vector<8x4x128xf32>
    %208 = vector.shape_cast %206 : vector<4x1xf32> to vector<1x4x1xf32>
    %209 = vector.broadcast %208 : vector<1x4x1xf32> to vector<8x4x128xf32>
    %210 = arith.mulf %207, %209 : vector<8x4x128xf32>
    %211 = arith.addf %204, %210 : vector<8x4x128xf32>
    %c26 = arith.constant 26 : index
    %c0_55 = arith.constant 0 : index
    %c0_56 = arith.constant 0 : index
    %212 = vector.load %arg2[%c26, %c0_55, %c0_56] : memref<81x4x1xf32, #tpu.memory_space<vmem>>, vector<1x4x1xf32>
    %213 = vector.shape_cast %212 : vector<1x4x1xf32> to vector<4x1xf32>
    %214 = vector.extract_strided_slice %27 {offsets = [4, 0, 0], sizes = [8, 4, 128], strides = [1, 1, 1]} : vector<14x4x128xf32> to vector<8x4x128xf32>
    %215 = vector.shape_cast %213 : vector<4x1xf32> to vector<1x4x1xf32>
    %216 = vector.broadcast %215 : vector<1x4x1xf32> to vector<8x4x128xf32>
    %217 = arith.mulf %214, %216 : vector<8x4x128xf32>
    %218 = arith.addf %211, %217 : vector<8x4x128xf32>
    %c0_57 = arith.constant 0 : index
    %c0_58 = arith.constant 0 : index
    %c0_59 = arith.constant 0 : index
    %219 = vector.load %arg3[%c0_57, %c0_58, %c0_59] : memref<3x8x4xf32, #tpu.memory_space<vmem>>, vector<1x8x4xf32>
    %220 = vector.shape_cast %219 : vector<1x8x4xf32> to vector<8x4xf32>
    %221 = vector.shape_cast %220 : vector<8x4xf32> to vector<1x8x4xf32>
    %222 = vector.broadcast %221 : vector<1x8x4xf32> to vector<8x8x4xf32>
    %cst_60 = arith.constant dense<0.000000e+00> : vector<8x8x128xf32>
    %223 = tpu.matmul %222, %218, %cst_60 {dimension_numbers = #tpu.dot_dimension_numbers<[2], [1], [1], [2], [0, 0, 0, 1, 1, 2], [0], [0]>} : vector<8x8x4xf32>, vector<8x4x128xf32>, vector<8x8x128xf32> -> vector<8x8x128xf32>
    %224 = arith.addf %28, %223 : vector<8x8x128xf32>
    %cst_61 = arith.constant 0.000000e+00 : f32
    %225 = vector.broadcast %cst_61 : f32 to vector<8x4x128xf32>
    %c27 = arith.constant 27 : index
    %c0_62 = arith.constant 0 : index
    %c0_63 = arith.constant 0 : index
    %226 = vector.load %arg2[%c27, %c0_62, %c0_63] : memref<81x4x1xf32, #tpu.memory_space<vmem>>, vector<1x4x1xf32>
    %227 = vector.shape_cast %226 : vector<1x4x1xf32> to vector<4x1xf32>
    %228 = vector.extract_strided_slice %3 {offsets = [1, 0, 0], sizes = [8, 4, 128], strides = [1, 1, 1]} : vector<14x4x128xf32> to vector<8x4x128xf32>
    %229 = vector.shape_cast %227 : vector<4x1xf32> to vector<1x4x1xf32>
    %230 = vector.broadcast %229 : vector<1x4x1xf32> to vector<8x4x128xf32>
    %231 = arith.mulf %228, %230 : vector<8x4x128xf32>
    %232 = arith.addf %225, %231 : vector<8x4x128xf32>
    %c28 = arith.constant 28 : index
    %c0_64 = arith.constant 0 : index
    %c0_65 = arith.constant 0 : index
    %233 = vector.load %arg2[%c28, %c0_64, %c0_65] : memref<81x4x1xf32, #tpu.memory_space<vmem>>, vector<1x4x1xf32>
    %234 = vector.shape_cast %233 : vector<1x4x1xf32> to vector<4x1xf32>
    %235 = vector.extract_strided_slice %3 {offsets = [3, 0, 0], sizes = [8, 4, 128], strides = [1, 1, 1]} : vector<14x4x128xf32> to vector<8x4x128xf32>
    %236 = vector.shape_cast %234 : vector<4x1xf32> to vector<1x4x1xf32>
    %237 = vector.broadcast %236 : vector<1x4x1xf32> to vector<8x4x128xf32>
    %238 = arith.mulf %235, %237 : vector<8x4x128xf32>
    %239 = arith.addf %232, %238 : vector<8x4x128xf32>
    %c29 = arith.constant 29 : index
    %c0_66 = arith.constant 0 : index
    %c0_67 = arith.constant 0 : index
    %240 = vector.load %arg2[%c29, %c0_66, %c0_67] : memref<81x4x1xf32, #tpu.memory_space<vmem>>, vector<1x4x1xf32>
    %241 = vector.shape_cast %240 : vector<1x4x1xf32> to vector<4x1xf32>
    %242 = vector.extract_strided_slice %3 {offsets = [5, 0, 0], sizes = [8, 4, 128], strides = [1, 1, 1]} : vector<14x4x128xf32> to vector<8x4x128xf32>
    %243 = vector.shape_cast %241 : vector<4x1xf32> to vector<1x4x1xf32>
    %244 = vector.broadcast %243 : vector<1x4x1xf32> to vector<8x4x128xf32>
    %245 = arith.mulf %242, %244 : vector<8x4x128xf32>
    %246 = arith.addf %239, %245 : vector<8x4x128xf32>
    %c30 = arith.constant 30 : index
    %c0_68 = arith.constant 0 : index
    %c0_69 = arith.constant 0 : index
    %247 = vector.load %arg2[%c30, %c0_68, %c0_69] : memref<81x4x1xf32, #tpu.memory_space<vmem>>, vector<1x4x1xf32>
    %248 = vector.shape_cast %247 : vector<1x4x1xf32> to vector<4x1xf32>
    %249 = vector.extract_strided_slice %6 {offsets = [1, 0, 0], sizes = [8, 4, 128], strides = [1, 1, 1]} : vector<14x4x128xf32> to vector<8x4x128xf32>
    %250 = vector.shape_cast %248 : vector<4x1xf32> to vector<1x4x1xf32>
    %251 = vector.broadcast %250 : vector<1x4x1xf32> to vector<8x4x128xf32>
    %252 = arith.mulf %249, %251 : vector<8x4x128xf32>
    %253 = arith.addf %246, %252 : vector<8x4x128xf32>
    %c31 = arith.constant 31 : index
    %c0_70 = arith.constant 0 : index
    %c0_71 = arith.constant 0 : index
    %254 = vector.load %arg2[%c31, %c0_70, %c0_71] : memref<81x4x1xf32, #tpu.memory_space<vmem>>, vector<1x4x1xf32>
    %255 = vector.shape_cast %254 : vector<1x4x1xf32> to vector<4x1xf32>
    %256 = vector.extract_strided_slice %6 {offsets = [3, 0, 0], sizes = [8, 4, 128], strides = [1, 1, 1]} : vector<14x4x128xf32> to vector<8x4x128xf32>
    %257 = vector.shape_cast %255 : vector<4x1xf32> to vector<1x4x1xf32>
    %258 = vector.broadcast %257 : vector<1x4x1xf32> to vector<8x4x128xf32>
    %259 = arith.mulf %256, %258 : vector<8x4x128xf32>
    %260 = arith.addf %253, %259 : vector<8x4x128xf32>
    %c32 = arith.constant 32 : index
    %c0_72 = arith.constant 0 : index
    %c0_73 = arith.constant 0 : index
    %261 = vector.load %arg2[%c32, %c0_72, %c0_73] : memref<81x4x1xf32, #tpu.memory_space<vmem>>, vector<1x4x1xf32>
    %262 = vector.shape_cast %261 : vector<1x4x1xf32> to vector<4x1xf32>
    %263 = vector.extract_strided_slice %6 {offsets = [5, 0, 0], sizes = [8, 4, 128], strides = [1, 1, 1]} : vector<14x4x128xf32> to vector<8x4x128xf32>
    %264 = vector.shape_cast %262 : vector<4x1xf32> to vector<1x4x1xf32>
    %265 = vector.broadcast %264 : vector<1x4x1xf32> to vector<8x4x128xf32>
    %266 = arith.mulf %263, %265 : vector<8x4x128xf32>
    %267 = arith.addf %260, %266 : vector<8x4x128xf32>
    %c33 = arith.constant 33 : index
    %c0_74 = arith.constant 0 : index
    %c0_75 = arith.constant 0 : index
    %268 = vector.load %arg2[%c33, %c0_74, %c0_75] : memref<81x4x1xf32, #tpu.memory_space<vmem>>, vector<1x4x1xf32>
    %269 = vector.shape_cast %268 : vector<1x4x1xf32> to vector<4x1xf32>
    %270 = vector.extract_strided_slice %9 {offsets = [1, 0, 0], sizes = [8, 4, 128], strides = [1, 1, 1]} : vector<14x4x128xf32> to vector<8x4x128xf32>
    %271 = vector.shape_cast %269 : vector<4x1xf32> to vector<1x4x1xf32>
    %272 = vector.broadcast %271 : vector<1x4x1xf32> to vector<8x4x128xf32>
    %273 = arith.mulf %270, %272 : vector<8x4x128xf32>
    %274 = arith.addf %267, %273 : vector<8x4x128xf32>
    %c34 = arith.constant 34 : index
    %c0_76 = arith.constant 0 : index
    %c0_77 = arith.constant 0 : index
    %275 = vector.load %arg2[%c34, %c0_76, %c0_77] : memref<81x4x1xf32, #tpu.memory_space<vmem>>, vector<1x4x1xf32>
    %276 = vector.shape_cast %275 : vector<1x4x1xf32> to vector<4x1xf32>
    %277 = vector.extract_strided_slice %9 {offsets = [3, 0, 0], sizes = [8, 4, 128], strides = [1, 1, 1]} : vector<14x4x128xf32> to vector<8x4x128xf32>
    %278 = vector.shape_cast %276 : vector<4x1xf32> to vector<1x4x1xf32>
    %279 = vector.broadcast %278 : vector<1x4x1xf32> to vector<8x4x128xf32>
    %280 = arith.mulf %277, %279 : vector<8x4x128xf32>
    %281 = arith.addf %274, %280 : vector<8x4x128xf32>
    %c35 = arith.constant 35 : index
    %c0_78 = arith.constant 0 : index
    %c0_79 = arith.constant 0 : index
    %282 = vector.load %arg2[%c35, %c0_78, %c0_79] : memref<81x4x1xf32, #tpu.memory_space<vmem>>, vector<1x4x1xf32>
    %283 = vector.shape_cast %282 : vector<1x4x1xf32> to vector<4x1xf32>
    %284 = vector.extract_strided_slice %9 {offsets = [5, 0, 0], sizes = [8, 4, 128], strides = [1, 1, 1]} : vector<14x4x128xf32> to vector<8x4x128xf32>
    %285 = vector.shape_cast %283 : vector<4x1xf32> to vector<1x4x1xf32>
    %286 = vector.broadcast %285 : vector<1x4x1xf32> to vector<8x4x128xf32>
    %287 = arith.mulf %284, %286 : vector<8x4x128xf32>
    %288 = arith.addf %281, %287 : vector<8x4x128xf32>
    %c36 = arith.constant 36 : index
    %c0_80 = arith.constant 0 : index
    %c0_81 = arith.constant 0 : index
    %289 = vector.load %arg2[%c36, %c0_80, %c0_81] : memref<81x4x1xf32, #tpu.memory_space<vmem>>, vector<1x4x1xf32>
    %290 = vector.shape_cast %289 : vector<1x4x1xf32> to vector<4x1xf32>
    %291 = vector.extract_strided_slice %12 {offsets = [1, 0, 0], sizes = [8, 4, 128], strides = [1, 1, 1]} : vector<14x4x128xf32> to vector<8x4x128xf32>
    %292 = vector.shape_cast %290 : vector<4x1xf32> to vector<1x4x1xf32>
    %293 = vector.broadcast %292 : vector<1x4x1xf32> to vector<8x4x128xf32>
    %294 = arith.mulf %291, %293 : vector<8x4x128xf32>
    %295 = arith.addf %288, %294 : vector<8x4x128xf32>
    %c37 = arith.constant 37 : index
    %c0_82 = arith.constant 0 : index
    %c0_83 = arith.constant 0 : index
    %296 = vector.load %arg2[%c37, %c0_82, %c0_83] : memref<81x4x1xf32, #tpu.memory_space<vmem>>, vector<1x4x1xf32>
    %297 = vector.shape_cast %296 : vector<1x4x1xf32> to vector<4x1xf32>
    %298 = vector.extract_strided_slice %12 {offsets = [3, 0, 0], sizes = [8, 4, 128], strides = [1, 1, 1]} : vector<14x4x128xf32> to vector<8x4x128xf32>
    %299 = vector.shape_cast %297 : vector<4x1xf32> to vector<1x4x1xf32>
    %300 = vector.broadcast %299 : vector<1x4x1xf32> to vector<8x4x128xf32>
    %301 = arith.mulf %298, %300 : vector<8x4x128xf32>
    %302 = arith.addf %295, %301 : vector<8x4x128xf32>
    %c38 = arith.constant 38 : index
    %c0_84 = arith.constant 0 : index
    %c0_85 = arith.constant 0 : index
    %303 = vector.load %arg2[%c38, %c0_84, %c0_85] : memref<81x4x1xf32, #tpu.memory_space<vmem>>, vector<1x4x1xf32>
    %304 = vector.shape_cast %303 : vector<1x4x1xf32> to vector<4x1xf32>
    %305 = vector.extract_strided_slice %12 {offsets = [5, 0, 0], sizes = [8, 4, 128], strides = [1, 1, 1]} : vector<14x4x128xf32> to vector<8x4x128xf32>
    %306 = vector.shape_cast %304 : vector<4x1xf32> to vector<1x4x1xf32>
    %307 = vector.broadcast %306 : vector<1x4x1xf32> to vector<8x4x128xf32>
    %308 = arith.mulf %305, %307 : vector<8x4x128xf32>
    %309 = arith.addf %302, %308 : vector<8x4x128xf32>
    %c39 = arith.constant 39 : index
    %c0_86 = arith.constant 0 : index
    %c0_87 = arith.constant 0 : index
    %310 = vector.load %arg2[%c39, %c0_86, %c0_87] : memref<81x4x1xf32, #tpu.memory_space<vmem>>, vector<1x4x1xf32>
    %311 = vector.shape_cast %310 : vector<1x4x1xf32> to vector<4x1xf32>
    %312 = vector.extract_strided_slice %15 {offsets = [1, 0, 0], sizes = [8, 4, 128], strides = [1, 1, 1]} : vector<14x4x128xf32> to vector<8x4x128xf32>
    %313 = vector.shape_cast %311 : vector<4x1xf32> to vector<1x4x1xf32>
    %314 = vector.broadcast %313 : vector<1x4x1xf32> to vector<8x4x128xf32>
    %315 = arith.mulf %312, %314 : vector<8x4x128xf32>
    %316 = arith.addf %309, %315 : vector<8x4x128xf32>
    %c40 = arith.constant 40 : index
    %c0_88 = arith.constant 0 : index
    %c0_89 = arith.constant 0 : index
    %317 = vector.load %arg2[%c40, %c0_88, %c0_89] : memref<81x4x1xf32, #tpu.memory_space<vmem>>, vector<1x4x1xf32>
    %318 = vector.shape_cast %317 : vector<1x4x1xf32> to vector<4x1xf32>
    %319 = vector.extract_strided_slice %15 {offsets = [3, 0, 0], sizes = [8, 4, 128], strides = [1, 1, 1]} : vector<14x4x128xf32> to vector<8x4x128xf32>
    %320 = vector.shape_cast %318 : vector<4x1xf32> to vector<1x4x1xf32>
    %321 = vector.broadcast %320 : vector<1x4x1xf32> to vector<8x4x128xf32>
    %322 = arith.mulf %319, %321 : vector<8x4x128xf32>
    %323 = arith.addf %316, %322 : vector<8x4x128xf32>
    %c41 = arith.constant 41 : index
    %c0_90 = arith.constant 0 : index
    %c0_91 = arith.constant 0 : index
    %324 = vector.load %arg2[%c41, %c0_90, %c0_91] : memref<81x4x1xf32, #tpu.memory_space<vmem>>, vector<1x4x1xf32>
    %325 = vector.shape_cast %324 : vector<1x4x1xf32> to vector<4x1xf32>
    %326 = vector.extract_strided_slice %15 {offsets = [5, 0, 0], sizes = [8, 4, 128], strides = [1, 1, 1]} : vector<14x4x128xf32> to vector<8x4x128xf32>
    %327 = vector.shape_cast %325 : vector<4x1xf32> to vector<1x4x1xf32>
    %328 = vector.broadcast %327 : vector<1x4x1xf32> to vector<8x4x128xf32>
    %329 = arith.mulf %326, %328 : vector<8x4x128xf32>
    %330 = arith.addf %323, %329 : vector<8x4x128xf32>
    %c42 = arith.constant 42 : index
    %c0_92 = arith.constant 0 : index
    %c0_93 = arith.constant 0 : index
    %331 = vector.load %arg2[%c42, %c0_92, %c0_93] : memref<81x4x1xf32, #tpu.memory_space<vmem>>, vector<1x4x1xf32>
    %332 = vector.shape_cast %331 : vector<1x4x1xf32> to vector<4x1xf32>
    %333 = vector.extract_strided_slice %18 {offsets = [1, 0, 0], sizes = [8, 4, 128], strides = [1, 1, 1]} : vector<14x4x128xf32> to vector<8x4x128xf32>
    %334 = vector.shape_cast %332 : vector<4x1xf32> to vector<1x4x1xf32>
    %335 = vector.broadcast %334 : vector<1x4x1xf32> to vector<8x4x128xf32>
    %336 = arith.mulf %333, %335 : vector<8x4x128xf32>
    %337 = arith.addf %330, %336 : vector<8x4x128xf32>
    %c43 = arith.constant 43 : index
    %c0_94 = arith.constant 0 : index
    %c0_95 = arith.constant 0 : index
    %338 = vector.load %arg2[%c43, %c0_94, %c0_95] : memref<81x4x1xf32, #tpu.memory_space<vmem>>, vector<1x4x1xf32>
    %339 = vector.shape_cast %338 : vector<1x4x1xf32> to vector<4x1xf32>
    %340 = vector.extract_strided_slice %18 {offsets = [3, 0, 0], sizes = [8, 4, 128], strides = [1, 1, 1]} : vector<14x4x128xf32> to vector<8x4x128xf32>
    %341 = vector.shape_cast %339 : vector<4x1xf32> to vector<1x4x1xf32>
    %342 = vector.broadcast %341 : vector<1x4x1xf32> to vector<8x4x128xf32>
    %343 = arith.mulf %340, %342 : vector<8x4x128xf32>
    %344 = arith.addf %337, %343 : vector<8x4x128xf32>
    %c44 = arith.constant 44 : index
    %c0_96 = arith.constant 0 : index
    %c0_97 = arith.constant 0 : index
    %345 = vector.load %arg2[%c44, %c0_96, %c0_97] : memref<81x4x1xf32, #tpu.memory_space<vmem>>, vector<1x4x1xf32>
    %346 = vector.shape_cast %345 : vector<1x4x1xf32> to vector<4x1xf32>
    %347 = vector.extract_strided_slice %18 {offsets = [5, 0, 0], sizes = [8, 4, 128], strides = [1, 1, 1]} : vector<14x4x128xf32> to vector<8x4x128xf32>
    %348 = vector.shape_cast %346 : vector<4x1xf32> to vector<1x4x1xf32>
    %349 = vector.broadcast %348 : vector<1x4x1xf32> to vector<8x4x128xf32>
    %350 = arith.mulf %347, %349 : vector<8x4x128xf32>
    %351 = arith.addf %344, %350 : vector<8x4x128xf32>
    %c45 = arith.constant 45 : index
    %c0_98 = arith.constant 0 : index
    %c0_99 = arith.constant 0 : index
    %352 = vector.load %arg2[%c45, %c0_98, %c0_99] : memref<81x4x1xf32, #tpu.memory_space<vmem>>, vector<1x4x1xf32>
    %353 = vector.shape_cast %352 : vector<1x4x1xf32> to vector<4x1xf32>
    %354 = vector.extract_strided_slice %21 {offsets = [1, 0, 0], sizes = [8, 4, 128], strides = [1, 1, 1]} : vector<14x4x128xf32> to vector<8x4x128xf32>
    %355 = vector.shape_cast %353 : vector<4x1xf32> to vector<1x4x1xf32>
    %356 = vector.broadcast %355 : vector<1x4x1xf32> to vector<8x4x128xf32>
    %357 = arith.mulf %354, %356 : vector<8x4x128xf32>
    %358 = arith.addf %351, %357 : vector<8x4x128xf32>
    %c46 = arith.constant 46 : index
    %c0_100 = arith.constant 0 : index
    %c0_101 = arith.constant 0 : index
    %359 = vector.load %arg2[%c46, %c0_100, %c0_101] : memref<81x4x1xf32, #tpu.memory_space<vmem>>, vector<1x4x1xf32>
    %360 = vector.shape_cast %359 : vector<1x4x1xf32> to vector<4x1xf32>
    %361 = vector.extract_strided_slice %21 {offsets = [3, 0, 0], sizes = [8, 4, 128], strides = [1, 1, 1]} : vector<14x4x128xf32> to vector<8x4x128xf32>
    %362 = vector.shape_cast %360 : vector<4x1xf32> to vector<1x4x1xf32>
    %363 = vector.broadcast %362 : vector<1x4x1xf32> to vector<8x4x128xf32>
    %364 = arith.mulf %361, %363 : vector<8x4x128xf32>
    %365 = arith.addf %358, %364 : vector<8x4x128xf32>
    %c47 = arith.constant 47 : index
    %c0_102 = arith.constant 0 : index
    %c0_103 = arith.constant 0 : index
    %366 = vector.load %arg2[%c47, %c0_102, %c0_103] : memref<81x4x1xf32, #tpu.memory_space<vmem>>, vector<1x4x1xf32>
    %367 = vector.shape_cast %366 : vector<1x4x1xf32> to vector<4x1xf32>
    %368 = vector.extract_strided_slice %21 {offsets = [5, 0, 0], sizes = [8, 4, 128], strides = [1, 1, 1]} : vector<14x4x128xf32> to vector<8x4x128xf32>
    %369 = vector.shape_cast %367 : vector<4x1xf32> to vector<1x4x1xf32>
    %370 = vector.broadcast %369 : vector<1x4x1xf32> to vector<8x4x128xf32>
    %371 = arith.mulf %368, %370 : vector<8x4x128xf32>
    %372 = arith.addf %365, %371 : vector<8x4x128xf32>
    %c48 = arith.constant 48 : index
    %c0_104 = arith.constant 0 : index
    %c0_105 = arith.constant 0 : index
    %373 = vector.load %arg2[%c48, %c0_104, %c0_105] : memref<81x4x1xf32, #tpu.memory_space<vmem>>, vector<1x4x1xf32>
    %374 = vector.shape_cast %373 : vector<1x4x1xf32> to vector<4x1xf32>
    %375 = vector.extract_strided_slice %24 {offsets = [1, 0, 0], sizes = [8, 4, 128], strides = [1, 1, 1]} : vector<14x4x128xf32> to vector<8x4x128xf32>
    %376 = vector.shape_cast %374 : vector<4x1xf32> to vector<1x4x1xf32>
    %377 = vector.broadcast %376 : vector<1x4x1xf32> to vector<8x4x128xf32>
    %378 = arith.mulf %375, %377 : vector<8x4x128xf32>
    %379 = arith.addf %372, %378 : vector<8x4x128xf32>
    %c49 = arith.constant 49 : index
    %c0_106 = arith.constant 0 : index
    %c0_107 = arith.constant 0 : index
    %380 = vector.load %arg2[%c49, %c0_106, %c0_107] : memref<81x4x1xf32, #tpu.memory_space<vmem>>, vector<1x4x1xf32>
    %381 = vector.shape_cast %380 : vector<1x4x1xf32> to vector<4x1xf32>
    %382 = vector.extract_strided_slice %24 {offsets = [3, 0, 0], sizes = [8, 4, 128], strides = [1, 1, 1]} : vector<14x4x128xf32> to vector<8x4x128xf32>
    %383 = vector.shape_cast %381 : vector<4x1xf32> to vector<1x4x1xf32>
    %384 = vector.broadcast %383 : vector<1x4x1xf32> to vector<8x4x128xf32>
    %385 = arith.mulf %382, %384 : vector<8x4x128xf32>
    %386 = arith.addf %379, %385 : vector<8x4x128xf32>
    %c50 = arith.constant 50 : index
    %c0_108 = arith.constant 0 : index
    %c0_109 = arith.constant 0 : index
    %387 = vector.load %arg2[%c50, %c0_108, %c0_109] : memref<81x4x1xf32, #tpu.memory_space<vmem>>, vector<1x4x1xf32>
    %388 = vector.shape_cast %387 : vector<1x4x1xf32> to vector<4x1xf32>
    %389 = vector.extract_strided_slice %24 {offsets = [5, 0, 0], sizes = [8, 4, 128], strides = [1, 1, 1]} : vector<14x4x128xf32> to vector<8x4x128xf32>
    %390 = vector.shape_cast %388 : vector<4x1xf32> to vector<1x4x1xf32>
    %391 = vector.broadcast %390 : vector<1x4x1xf32> to vector<8x4x128xf32>
    %392 = arith.mulf %389, %391 : vector<8x4x128xf32>
    %393 = arith.addf %386, %392 : vector<8x4x128xf32>
    %c51 = arith.constant 51 : index
    %c0_110 = arith.constant 0 : index
    %c0_111 = arith.constant 0 : index
    %394 = vector.load %arg2[%c51, %c0_110, %c0_111] : memref<81x4x1xf32, #tpu.memory_space<vmem>>, vector<1x4x1xf32>
    %395 = vector.shape_cast %394 : vector<1x4x1xf32> to vector<4x1xf32>
    %396 = vector.extract_strided_slice %27 {offsets = [1, 0, 0], sizes = [8, 4, 128], strides = [1, 1, 1]} : vector<14x4x128xf32> to vector<8x4x128xf32>
    %397 = vector.shape_cast %395 : vector<4x1xf32> to vector<1x4x1xf32>
    %398 = vector.broadcast %397 : vector<1x4x1xf32> to vector<8x4x128xf32>
    %399 = arith.mulf %396, %398 : vector<8x4x128xf32>
    %400 = arith.addf %393, %399 : vector<8x4x128xf32>
    %c52 = arith.constant 52 : index
    %c0_112 = arith.constant 0 : index
    %c0_113 = arith.constant 0 : index
    %401 = vector.load %arg2[%c52, %c0_112, %c0_113] : memref<81x4x1xf32, #tpu.memory_space<vmem>>, vector<1x4x1xf32>
    %402 = vector.shape_cast %401 : vector<1x4x1xf32> to vector<4x1xf32>
    %403 = vector.extract_strided_slice %27 {offsets = [3, 0, 0], sizes = [8, 4, 128], strides = [1, 1, 1]} : vector<14x4x128xf32> to vector<8x4x128xf32>
    %404 = vector.shape_cast %402 : vector<4x1xf32> to vector<1x4x1xf32>
    %405 = vector.broadcast %404 : vector<1x4x1xf32> to vector<8x4x128xf32>
    %406 = arith.mulf %403, %405 : vector<8x4x128xf32>
    %407 = arith.addf %400, %406 : vector<8x4x128xf32>
    %c53 = arith.constant 53 : index
    %c0_114 = arith.constant 0 : index
    %c0_115 = arith.constant 0 : index
    %408 = vector.load %arg2[%c53, %c0_114, %c0_115] : memref<81x4x1xf32, #tpu.memory_space<vmem>>, vector<1x4x1xf32>
    %409 = vector.shape_cast %408 : vector<1x4x1xf32> to vector<4x1xf32>
    %410 = vector.extract_strided_slice %27 {offsets = [5, 0, 0], sizes = [8, 4, 128], strides = [1, 1, 1]} : vector<14x4x128xf32> to vector<8x4x128xf32>
    %411 = vector.shape_cast %409 : vector<4x1xf32> to vector<1x4x1xf32>
    %412 = vector.broadcast %411 : vector<1x4x1xf32> to vector<8x4x128xf32>
    %413 = arith.mulf %410, %412 : vector<8x4x128xf32>
    %414 = arith.addf %407, %413 : vector<8x4x128xf32>
    %c1_116 = arith.constant 1 : index
    %c0_117 = arith.constant 0 : index
    %c0_118 = arith.constant 0 : index
    %415 = vector.load %arg3[%c1_116, %c0_117, %c0_118] : memref<3x8x4xf32, #tpu.memory_space<vmem>>, vector<1x8x4xf32>
    %416 = vector.shape_cast %415 : vector<1x8x4xf32> to vector<8x4xf32>
    %417 = vector.shape_cast %416 : vector<8x4xf32> to vector<1x8x4xf32>
    %418 = vector.broadcast %417 : vector<1x8x4xf32> to vector<8x8x4xf32>
    %cst_119 = arith.constant dense<0.000000e+00> : vector<8x8x128xf32>
    %419 = tpu.matmul %418, %414, %cst_119 {dimension_numbers = #tpu.dot_dimension_numbers<[2], [1], [1], [2], [0, 0, 0, 1, 1, 2], [0], [0]>} : vector<8x8x4xf32>, vector<8x4x128xf32>, vector<8x8x128xf32> -> vector<8x8x128xf32>
    %420 = arith.addf %224, %419 : vector<8x8x128xf32>
    %cst_120 = arith.constant 0.000000e+00 : f32
    %421 = vector.broadcast %cst_120 : f32 to vector<8x4x128xf32>
    %c54 = arith.constant 54 : index
    %c0_121 = arith.constant 0 : index
    %c0_122 = arith.constant 0 : index
    %422 = vector.load %arg2[%c54, %c0_121, %c0_122] : memref<81x4x1xf32, #tpu.memory_space<vmem>>, vector<1x4x1xf32>
    %423 = vector.shape_cast %422 : vector<1x4x1xf32> to vector<4x1xf32>
    %424 = vector.extract_strided_slice %3 {offsets = [0, 0, 0], sizes = [8, 4, 128], strides = [1, 1, 1]} : vector<14x4x128xf32> to vector<8x4x128xf32>
    %425 = vector.shape_cast %423 : vector<4x1xf32> to vector<1x4x1xf32>
    %426 = vector.broadcast %425 : vector<1x4x1xf32> to vector<8x4x128xf32>
    %427 = arith.mulf %424, %426 : vector<8x4x128xf32>
    %428 = arith.addf %421, %427 : vector<8x4x128xf32>
    %c55 = arith.constant 55 : index
    %c0_123 = arith.constant 0 : index
    %c0_124 = arith.constant 0 : index
    %429 = vector.load %arg2[%c55, %c0_123, %c0_124] : memref<81x4x1xf32, #tpu.memory_space<vmem>>, vector<1x4x1xf32>
    %430 = vector.shape_cast %429 : vector<1x4x1xf32> to vector<4x1xf32>
    %431 = vector.extract_strided_slice %3 {offsets = [3, 0, 0], sizes = [8, 4, 128], strides = [1, 1, 1]} : vector<14x4x128xf32> to vector<8x4x128xf32>
    %432 = vector.shape_cast %430 : vector<4x1xf32> to vector<1x4x1xf32>
    %433 = vector.broadcast %432 : vector<1x4x1xf32> to vector<8x4x128xf32>
    %434 = arith.mulf %431, %433 : vector<8x4x128xf32>
    %435 = arith.addf %428, %434 : vector<8x4x128xf32>
    %c56 = arith.constant 56 : index
    %c0_125 = arith.constant 0 : index
    %c0_126 = arith.constant 0 : index
    %436 = vector.load %arg2[%c56, %c0_125, %c0_126] : memref<81x4x1xf32, #tpu.memory_space<vmem>>, vector<1x4x1xf32>
    %437 = vector.shape_cast %436 : vector<1x4x1xf32> to vector<4x1xf32>
    %438 = vector.extract_strided_slice %3 {offsets = [6, 0, 0], sizes = [8, 4, 128], strides = [1, 1, 1]} : vector<14x4x128xf32> to vector<8x4x128xf32>
    %439 = vector.shape_cast %437 : vector<4x1xf32> to vector<1x4x1xf32>
    %440 = vector.broadcast %439 : vector<1x4x1xf32> to vector<8x4x128xf32>
    %441 = arith.mulf %438, %440 : vector<8x4x128xf32>
    %442 = arith.addf %435, %441 : vector<8x4x128xf32>
    %c57 = arith.constant 57 : index
    %c0_127 = arith.constant 0 : index
    %c0_128 = arith.constant 0 : index
    %443 = vector.load %arg2[%c57, %c0_127, %c0_128] : memref<81x4x1xf32, #tpu.memory_space<vmem>>, vector<1x4x1xf32>
    %444 = vector.shape_cast %443 : vector<1x4x1xf32> to vector<4x1xf32>
    %445 = vector.extract_strided_slice %6 {offsets = [0, 0, 0], sizes = [8, 4, 128], strides = [1, 1, 1]} : vector<14x4x128xf32> to vector<8x4x128xf32>
    %446 = vector.shape_cast %444 : vector<4x1xf32> to vector<1x4x1xf32>
    %447 = vector.broadcast %446 : vector<1x4x1xf32> to vector<8x4x128xf32>
    %448 = arith.mulf %445, %447 : vector<8x4x128xf32>
    %449 = arith.addf %442, %448 : vector<8x4x128xf32>
    %c58 = arith.constant 58 : index
    %c0_129 = arith.constant 0 : index
    %c0_130 = arith.constant 0 : index
    %450 = vector.load %arg2[%c58, %c0_129, %c0_130] : memref<81x4x1xf32, #tpu.memory_space<vmem>>, vector<1x4x1xf32>
    %451 = vector.shape_cast %450 : vector<1x4x1xf32> to vector<4x1xf32>
    %452 = vector.extract_strided_slice %6 {offsets = [3, 0, 0], sizes = [8, 4, 128], strides = [1, 1, 1]} : vector<14x4x128xf32> to vector<8x4x128xf32>
    %453 = vector.shape_cast %451 : vector<4x1xf32> to vector<1x4x1xf32>
    %454 = vector.broadcast %453 : vector<1x4x1xf32> to vector<8x4x128xf32>
    %455 = arith.mulf %452, %454 : vector<8x4x128xf32>
    %456 = arith.addf %449, %455 : vector<8x4x128xf32>
    %c59 = arith.constant 59 : index
    %c0_131 = arith.constant 0 : index
    %c0_132 = arith.constant 0 : index
    %457 = vector.load %arg2[%c59, %c0_131, %c0_132] : memref<81x4x1xf32, #tpu.memory_space<vmem>>, vector<1x4x1xf32>
    %458 = vector.shape_cast %457 : vector<1x4x1xf32> to vector<4x1xf32>
    %459 = vector.extract_strided_slice %6 {offsets = [6, 0, 0], sizes = [8, 4, 128], strides = [1, 1, 1]} : vector<14x4x128xf32> to vector<8x4x128xf32>
    %460 = vector.shape_cast %458 : vector<4x1xf32> to vector<1x4x1xf32>
    %461 = vector.broadcast %460 : vector<1x4x1xf32> to vector<8x4x128xf32>
    %462 = arith.mulf %459, %461 : vector<8x4x128xf32>
    %463 = arith.addf %456, %462 : vector<8x4x128xf32>
    %c60 = arith.constant 60 : index
    %c0_133 = arith.constant 0 : index
    %c0_134 = arith.constant 0 : index
    %464 = vector.load %arg2[%c60, %c0_133, %c0_134] : memref<81x4x1xf32, #tpu.memory_space<vmem>>, vector<1x4x1xf32>
    %465 = vector.shape_cast %464 : vector<1x4x1xf32> to vector<4x1xf32>
    %466 = vector.extract_strided_slice %9 {offsets = [0, 0, 0], sizes = [8, 4, 128], strides = [1, 1, 1]} : vector<14x4x128xf32> to vector<8x4x128xf32>
    %467 = vector.shape_cast %465 : vector<4x1xf32> to vector<1x4x1xf32>
    %468 = vector.broadcast %467 : vector<1x4x1xf32> to vector<8x4x128xf32>
    %469 = arith.mulf %466, %468 : vector<8x4x128xf32>
    %470 = arith.addf %463, %469 : vector<8x4x128xf32>
    %c61 = arith.constant 61 : index
    %c0_135 = arith.constant 0 : index
    %c0_136 = arith.constant 0 : index
    %471 = vector.load %arg2[%c61, %c0_135, %c0_136] : memref<81x4x1xf32, #tpu.memory_space<vmem>>, vector<1x4x1xf32>
    %472 = vector.shape_cast %471 : vector<1x4x1xf32> to vector<4x1xf32>
    %473 = vector.extract_strided_slice %9 {offsets = [3, 0, 0], sizes = [8, 4, 128], strides = [1, 1, 1]} : vector<14x4x128xf32> to vector<8x4x128xf32>
    %474 = vector.shape_cast %472 : vector<4x1xf32> to vector<1x4x1xf32>
    %475 = vector.broadcast %474 : vector<1x4x1xf32> to vector<8x4x128xf32>
    %476 = arith.mulf %473, %475 : vector<8x4x128xf32>
    %477 = arith.addf %470, %476 : vector<8x4x128xf32>
    %c62 = arith.constant 62 : index
    %c0_137 = arith.constant 0 : index
    %c0_138 = arith.constant 0 : index
    %478 = vector.load %arg2[%c62, %c0_137, %c0_138] : memref<81x4x1xf32, #tpu.memory_space<vmem>>, vector<1x4x1xf32>
    %479 = vector.shape_cast %478 : vector<1x4x1xf32> to vector<4x1xf32>
    %480 = vector.extract_strided_slice %9 {offsets = [6, 0, 0], sizes = [8, 4, 128], strides = [1, 1, 1]} : vector<14x4x128xf32> to vector<8x4x128xf32>
    %481 = vector.shape_cast %479 : vector<4x1xf32> to vector<1x4x1xf32>
    %482 = vector.broadcast %481 : vector<1x4x1xf32> to vector<8x4x128xf32>
    %483 = arith.mulf %480, %482 : vector<8x4x128xf32>
    %484 = arith.addf %477, %483 : vector<8x4x128xf32>
    %c63 = arith.constant 63 : index
    %c0_139 = arith.constant 0 : index
    %c0_140 = arith.constant 0 : index
    %485 = vector.load %arg2[%c63, %c0_139, %c0_140] : memref<81x4x1xf32, #tpu.memory_space<vmem>>, vector<1x4x1xf32>
    %486 = vector.shape_cast %485 : vector<1x4x1xf32> to vector<4x1xf32>
    %487 = vector.extract_strided_slice %12 {offsets = [0, 0, 0], sizes = [8, 4, 128], strides = [1, 1, 1]} : vector<14x4x128xf32> to vector<8x4x128xf32>
    %488 = vector.shape_cast %486 : vector<4x1xf32> to vector<1x4x1xf32>
    %489 = vector.broadcast %488 : vector<1x4x1xf32> to vector<8x4x128xf32>
    %490 = arith.mulf %487, %489 : vector<8x4x128xf32>
    %491 = arith.addf %484, %490 : vector<8x4x128xf32>
    %c64 = arith.constant 64 : index
    %c0_141 = arith.constant 0 : index
    %c0_142 = arith.constant 0 : index
    %492 = vector.load %arg2[%c64, %c0_141, %c0_142] : memref<81x4x1xf32, #tpu.memory_space<vmem>>, vector<1x4x1xf32>
    %493 = vector.shape_cast %492 : vector<1x4x1xf32> to vector<4x1xf32>
    %494 = vector.extract_strided_slice %12 {offsets = [3, 0, 0], sizes = [8, 4, 128], strides = [1, 1, 1]} : vector<14x4x128xf32> to vector<8x4x128xf32>
    %495 = vector.shape_cast %493 : vector<4x1xf32> to vector<1x4x1xf32>
    %496 = vector.broadcast %495 : vector<1x4x1xf32> to vector<8x4x128xf32>
    %497 = arith.mulf %494, %496 : vector<8x4x128xf32>
    %498 = arith.addf %491, %497 : vector<8x4x128xf32>
    %c65 = arith.constant 65 : index
    %c0_143 = arith.constant 0 : index
    %c0_144 = arith.constant 0 : index
    %499 = vector.load %arg2[%c65, %c0_143, %c0_144] : memref<81x4x1xf32, #tpu.memory_space<vmem>>, vector<1x4x1xf32>
    %500 = vector.shape_cast %499 : vector<1x4x1xf32> to vector<4x1xf32>
    %501 = vector.extract_strided_slice %12 {offsets = [6, 0, 0], sizes = [8, 4, 128], strides = [1, 1, 1]} : vector<14x4x128xf32> to vector<8x4x128xf32>
    %502 = vector.shape_cast %500 : vector<4x1xf32> to vector<1x4x1xf32>
    %503 = vector.broadcast %502 : vector<1x4x1xf32> to vector<8x4x128xf32>
    %504 = arith.mulf %501, %503 : vector<8x4x128xf32>
    %505 = arith.addf %498, %504 : vector<8x4x128xf32>
    %c66 = arith.constant 66 : index
    %c0_145 = arith.constant 0 : index
    %c0_146 = arith.constant 0 : index
    %506 = vector.load %arg2[%c66, %c0_145, %c0_146] : memref<81x4x1xf32, #tpu.memory_space<vmem>>, vector<1x4x1xf32>
    %507 = vector.shape_cast %506 : vector<1x4x1xf32> to vector<4x1xf32>
    %508 = vector.extract_strided_slice %15 {offsets = [0, 0, 0], sizes = [8, 4, 128], strides = [1, 1, 1]} : vector<14x4x128xf32> to vector<8x4x128xf32>
    %509 = vector.shape_cast %507 : vector<4x1xf32> to vector<1x4x1xf32>
    %510 = vector.broadcast %509 : vector<1x4x1xf32> to vector<8x4x128xf32>
    %511 = arith.mulf %508, %510 : vector<8x4x128xf32>
    %512 = arith.addf %505, %511 : vector<8x4x128xf32>
    %c67 = arith.constant 67 : index
    %c0_147 = arith.constant 0 : index
    %c0_148 = arith.constant 0 : index
    %513 = vector.load %arg2[%c67, %c0_147, %c0_148] : memref<81x4x1xf32, #tpu.memory_space<vmem>>, vector<1x4x1xf32>
    %514 = vector.shape_cast %513 : vector<1x4x1xf32> to vector<4x1xf32>
    %515 = vector.extract_strided_slice %15 {offsets = [3, 0, 0], sizes = [8, 4, 128], strides = [1, 1, 1]} : vector<14x4x128xf32> to vector<8x4x128xf32>
    %516 = vector.shape_cast %514 : vector<4x1xf32> to vector<1x4x1xf32>
    %517 = vector.broadcast %516 : vector<1x4x1xf32> to vector<8x4x128xf32>
    %518 = arith.mulf %515, %517 : vector<8x4x128xf32>
    %519 = arith.addf %512, %518 : vector<8x4x128xf32>
    %c68 = arith.constant 68 : index
    %c0_149 = arith.constant 0 : index
    %c0_150 = arith.constant 0 : index
    %520 = vector.load %arg2[%c68, %c0_149, %c0_150] : memref<81x4x1xf32, #tpu.memory_space<vmem>>, vector<1x4x1xf32>
    %521 = vector.shape_cast %520 : vector<1x4x1xf32> to vector<4x1xf32>
    %522 = vector.extract_strided_slice %15 {offsets = [6, 0, 0], sizes = [8, 4, 128], strides = [1, 1, 1]} : vector<14x4x128xf32> to vector<8x4x128xf32>
    %523 = vector.shape_cast %521 : vector<4x1xf32> to vector<1x4x1xf32>
    %524 = vector.broadcast %523 : vector<1x4x1xf32> to vector<8x4x128xf32>
    %525 = arith.mulf %522, %524 : vector<8x4x128xf32>
    %526 = arith.addf %519, %525 : vector<8x4x128xf32>
    %c69 = arith.constant 69 : index
    %c0_151 = arith.constant 0 : index
    %c0_152 = arith.constant 0 : index
    %527 = vector.load %arg2[%c69, %c0_151, %c0_152] : memref<81x4x1xf32, #tpu.memory_space<vmem>>, vector<1x4x1xf32>
    %528 = vector.shape_cast %527 : vector<1x4x1xf32> to vector<4x1xf32>
    %529 = vector.extract_strided_slice %18 {offsets = [0, 0, 0], sizes = [8, 4, 128], strides = [1, 1, 1]} : vector<14x4x128xf32> to vector<8x4x128xf32>
    %530 = vector.shape_cast %528 : vector<4x1xf32> to vector<1x4x1xf32>
    %531 = vector.broadcast %530 : vector<1x4x1xf32> to vector<8x4x128xf32>
    %532 = arith.mulf %529, %531 : vector<8x4x128xf32>
    %533 = arith.addf %526, %532 : vector<8x4x128xf32>
    %c70 = arith.constant 70 : index
    %c0_153 = arith.constant 0 : index
    %c0_154 = arith.constant 0 : index
    %534 = vector.load %arg2[%c70, %c0_153, %c0_154] : memref<81x4x1xf32, #tpu.memory_space<vmem>>, vector<1x4x1xf32>
    %535 = vector.shape_cast %534 : vector<1x4x1xf32> to vector<4x1xf32>
    %536 = vector.extract_strided_slice %18 {offsets = [3, 0, 0], sizes = [8, 4, 128], strides = [1, 1, 1]} : vector<14x4x128xf32> to vector<8x4x128xf32>
    %537 = vector.shape_cast %535 : vector<4x1xf32> to vector<1x4x1xf32>
    %538 = vector.broadcast %537 : vector<1x4x1xf32> to vector<8x4x128xf32>
    %539 = arith.mulf %536, %538 : vector<8x4x128xf32>
    %540 = arith.addf %533, %539 : vector<8x4x128xf32>
    %c71 = arith.constant 71 : index
    %c0_155 = arith.constant 0 : index
    %c0_156 = arith.constant 0 : index
    %541 = vector.load %arg2[%c71, %c0_155, %c0_156] : memref<81x4x1xf32, #tpu.memory_space<vmem>>, vector<1x4x1xf32>
    %542 = vector.shape_cast %541 : vector<1x4x1xf32> to vector<4x1xf32>
    %543 = vector.extract_strided_slice %18 {offsets = [6, 0, 0], sizes = [8, 4, 128], strides = [1, 1, 1]} : vector<14x4x128xf32> to vector<8x4x128xf32>
    %544 = vector.shape_cast %542 : vector<4x1xf32> to vector<1x4x1xf32>
    %545 = vector.broadcast %544 : vector<1x4x1xf32> to vector<8x4x128xf32>
    %546 = arith.mulf %543, %545 : vector<8x4x128xf32>
    %547 = arith.addf %540, %546 : vector<8x4x128xf32>
    %c72 = arith.constant 72 : index
    %c0_157 = arith.constant 0 : index
    %c0_158 = arith.constant 0 : index
    %548 = vector.load %arg2[%c72, %c0_157, %c0_158] : memref<81x4x1xf32, #tpu.memory_space<vmem>>, vector<1x4x1xf32>
    %549 = vector.shape_cast %548 : vector<1x4x1xf32> to vector<4x1xf32>
    %550 = vector.extract_strided_slice %21 {offsets = [0, 0, 0], sizes = [8, 4, 128], strides = [1, 1, 1]} : vector<14x4x128xf32> to vector<8x4x128xf32>
    %551 = vector.shape_cast %549 : vector<4x1xf32> to vector<1x4x1xf32>
    %552 = vector.broadcast %551 : vector<1x4x1xf32> to vector<8x4x128xf32>
    %553 = arith.mulf %550, %552 : vector<8x4x128xf32>
    %554 = arith.addf %547, %553 : vector<8x4x128xf32>
    %c73 = arith.constant 73 : index
    %c0_159 = arith.constant 0 : index
    %c0_160 = arith.constant 0 : index
    %555 = vector.load %arg2[%c73, %c0_159, %c0_160] : memref<81x4x1xf32, #tpu.memory_space<vmem>>, vector<1x4x1xf32>
    %556 = vector.shape_cast %555 : vector<1x4x1xf32> to vector<4x1xf32>
    %557 = vector.extract_strided_slice %21 {offsets = [3, 0, 0], sizes = [8, 4, 128], strides = [1, 1, 1]} : vector<14x4x128xf32> to vector<8x4x128xf32>
    %558 = vector.shape_cast %556 : vector<4x1xf32> to vector<1x4x1xf32>
    %559 = vector.broadcast %558 : vector<1x4x1xf32> to vector<8x4x128xf32>
    %560 = arith.mulf %557, %559 : vector<8x4x128xf32>
    %561 = arith.addf %554, %560 : vector<8x4x128xf32>
    %c74 = arith.constant 74 : index
    %c0_161 = arith.constant 0 : index
    %c0_162 = arith.constant 0 : index
    %562 = vector.load %arg2[%c74, %c0_161, %c0_162] : memref<81x4x1xf32, #tpu.memory_space<vmem>>, vector<1x4x1xf32>
    %563 = vector.shape_cast %562 : vector<1x4x1xf32> to vector<4x1xf32>
    %564 = vector.extract_strided_slice %21 {offsets = [6, 0, 0], sizes = [8, 4, 128], strides = [1, 1, 1]} : vector<14x4x128xf32> to vector<8x4x128xf32>
    %565 = vector.shape_cast %563 : vector<4x1xf32> to vector<1x4x1xf32>
    %566 = vector.broadcast %565 : vector<1x4x1xf32> to vector<8x4x128xf32>
    %567 = arith.mulf %564, %566 : vector<8x4x128xf32>
    %568 = arith.addf %561, %567 : vector<8x4x128xf32>
    %c75 = arith.constant 75 : index
    %c0_163 = arith.constant 0 : index
    %c0_164 = arith.constant 0 : index
    %569 = vector.load %arg2[%c75, %c0_163, %c0_164] : memref<81x4x1xf32, #tpu.memory_space<vmem>>, vector<1x4x1xf32>
    %570 = vector.shape_cast %569 : vector<1x4x1xf32> to vector<4x1xf32>
    %571 = vector.extract_strided_slice %24 {offsets = [0, 0, 0], sizes = [8, 4, 128], strides = [1, 1, 1]} : vector<14x4x128xf32> to vector<8x4x128xf32>
    %572 = vector.shape_cast %570 : vector<4x1xf32> to vector<1x4x1xf32>
    %573 = vector.broadcast %572 : vector<1x4x1xf32> to vector<8x4x128xf32>
    %574 = arith.mulf %571, %573 : vector<8x4x128xf32>
    %575 = arith.addf %568, %574 : vector<8x4x128xf32>
    %c76 = arith.constant 76 : index
    %c0_165 = arith.constant 0 : index
    %c0_166 = arith.constant 0 : index
    %576 = vector.load %arg2[%c76, %c0_165, %c0_166] : memref<81x4x1xf32, #tpu.memory_space<vmem>>, vector<1x4x1xf32>
    %577 = vector.shape_cast %576 : vector<1x4x1xf32> to vector<4x1xf32>
    %578 = vector.extract_strided_slice %24 {offsets = [3, 0, 0], sizes = [8, 4, 128], strides = [1, 1, 1]} : vector<14x4x128xf32> to vector<8x4x128xf32>
    %579 = vector.shape_cast %577 : vector<4x1xf32> to vector<1x4x1xf32>
    %580 = vector.broadcast %579 : vector<1x4x1xf32> to vector<8x4x128xf32>
    %581 = arith.mulf %578, %580 : vector<8x4x128xf32>
    %582 = arith.addf %575, %581 : vector<8x4x128xf32>
    %c77 = arith.constant 77 : index
    %c0_167 = arith.constant 0 : index
    %c0_168 = arith.constant 0 : index
    %583 = vector.load %arg2[%c77, %c0_167, %c0_168] : memref<81x4x1xf32, #tpu.memory_space<vmem>>, vector<1x4x1xf32>
    %584 = vector.shape_cast %583 : vector<1x4x1xf32> to vector<4x1xf32>
    %585 = vector.extract_strided_slice %24 {offsets = [6, 0, 0], sizes = [8, 4, 128], strides = [1, 1, 1]} : vector<14x4x128xf32> to vector<8x4x128xf32>
    %586 = vector.shape_cast %584 : vector<4x1xf32> to vector<1x4x1xf32>
    %587 = vector.broadcast %586 : vector<1x4x1xf32> to vector<8x4x128xf32>
    %588 = arith.mulf %585, %587 : vector<8x4x128xf32>
    %589 = arith.addf %582, %588 : vector<8x4x128xf32>
    %c78 = arith.constant 78 : index
    %c0_169 = arith.constant 0 : index
    %c0_170 = arith.constant 0 : index
    %590 = vector.load %arg2[%c78, %c0_169, %c0_170] : memref<81x4x1xf32, #tpu.memory_space<vmem>>, vector<1x4x1xf32>
    %591 = vector.shape_cast %590 : vector<1x4x1xf32> to vector<4x1xf32>
    %592 = vector.extract_strided_slice %27 {offsets = [0, 0, 0], sizes = [8, 4, 128], strides = [1, 1, 1]} : vector<14x4x128xf32> to vector<8x4x128xf32>
    %593 = vector.shape_cast %591 : vector<4x1xf32> to vector<1x4x1xf32>
    %594 = vector.broadcast %593 : vector<1x4x1xf32> to vector<8x4x128xf32>
    %595 = arith.mulf %592, %594 : vector<8x4x128xf32>
    %596 = arith.addf %589, %595 : vector<8x4x128xf32>
    %c79 = arith.constant 79 : index
    %c0_171 = arith.constant 0 : index
    %c0_172 = arith.constant 0 : index
    %597 = vector.load %arg2[%c79, %c0_171, %c0_172] : memref<81x4x1xf32, #tpu.memory_space<vmem>>, vector<1x4x1xf32>
    %598 = vector.shape_cast %597 : vector<1x4x1xf32> to vector<4x1xf32>
    %599 = vector.extract_strided_slice %27 {offsets = [3, 0, 0], sizes = [8, 4, 128], strides = [1, 1, 1]} : vector<14x4x128xf32> to vector<8x4x128xf32>
    %600 = vector.shape_cast %598 : vector<4x1xf32> to vector<1x4x1xf32>
    %601 = vector.broadcast %600 : vector<1x4x1xf32> to vector<8x4x128xf32>
    %602 = arith.mulf %599, %601 : vector<8x4x128xf32>
    %603 = arith.addf %596, %602 : vector<8x4x128xf32>
    %c80 = arith.constant 80 : index
    %c0_173 = arith.constant 0 : index
    %c0_174 = arith.constant 0 : index
    %604 = vector.load %arg2[%c80, %c0_173, %c0_174] : memref<81x4x1xf32, #tpu.memory_space<vmem>>, vector<1x4x1xf32>
    %605 = vector.shape_cast %604 : vector<1x4x1xf32> to vector<4x1xf32>
    %606 = vector.extract_strided_slice %27 {offsets = [6, 0, 0], sizes = [8, 4, 128], strides = [1, 1, 1]} : vector<14x4x128xf32> to vector<8x4x128xf32>
    %607 = vector.shape_cast %605 : vector<4x1xf32> to vector<1x4x1xf32>
    %608 = vector.broadcast %607 : vector<1x4x1xf32> to vector<8x4x128xf32>
    %609 = arith.mulf %606, %608 : vector<8x4x128xf32>
    %610 = arith.addf %603, %609 : vector<8x4x128xf32>
    %c2_175 = arith.constant 2 : index
    %c0_176 = arith.constant 0 : index
    %c0_177 = arith.constant 0 : index
    %611 = vector.load %arg3[%c2_175, %c0_176, %c0_177] : memref<3x8x4xf32, #tpu.memory_space<vmem>>, vector<1x8x4xf32>
    %612 = vector.shape_cast %611 : vector<1x8x4xf32> to vector<8x4xf32>
    %613 = vector.shape_cast %612 : vector<8x4xf32> to vector<1x8x4xf32>
    %614 = vector.broadcast %613 : vector<1x8x4xf32> to vector<8x8x4xf32>
    %cst_178 = arith.constant dense<0.000000e+00> : vector<8x8x128xf32>
    %615 = tpu.matmul %614, %610, %cst_178 {dimension_numbers = #tpu.dot_dimension_numbers<[2], [1], [1], [2], [0, 0, 0, 1, 1, 2], [0], [0]>} : vector<8x8x4xf32>, vector<8x4x128xf32>, vector<8x8x128xf32> -> vector<8x8x128xf32>
    %616 = arith.addf %420, %615 : vector<8x8x128xf32>
    %c0_179 = arith.constant 0 : index
    %c0_180 = arith.constant 0 : index
    %c0_181 = arith.constant 0 : index
    %617 = vector.load %arg4[%c0_179, %c0_180, %c0_181] : memref<8x8x128xf32, #tpu.memory_space<vmem>>, vector<8x8x128xf32>
    tpu.vector_store %arg4[%c0_179, %c0_180, %c0_181], %616 {strides = array<i32>} : memref<8x8x128xf32, #tpu.memory_space<vmem>>, vector<8x8x128xf32>,
    return
  }
  func.func @transform_0(%arg0: i32) -> (i32, i32, i32) {
    %c0_i32 = arith.constant 0 : i32
    %c0_i32_0 = arith.constant 0 : i32
    %c0_i32_1 = arith.constant 0 : i32
    %c0_i32_2 = arith.constant 0 : i32
    return %c0_i32, %c0_i32_0, %c0_i32_1 : i32, i32, i32
  }
  func.func @transform_1(%arg0: i32) -> (i32, i32, i32) {
    %c0_i32 = arith.constant 0 : i32
    %c0_i32_0 = arith.constant 0 : i32
    %c0_i32_1 = arith.constant 0 : i32
    %c0_i32_2 = arith.constant 0 : i32
    return %c0_i32, %c0_i32_0, %c0_i32_1 : i32, i32, i32
  }
  func.func @transform_2(%arg0: i32) -> (i32, i32, i32) {
    %c0_i32 = arith.constant 0 : i32
    %c0_i32_0 = arith.constant 0 : i32
    %c0_i32_1 = arith.constant 0 : i32
    %c0_i32_2 = arith.constant 0 : i32
    return %c0_i32, %c0_i32_0, %c0_i32_1 : i32, i32, i32
  }
  func.func @transform_3(%arg0: i32) -> (i32, i32, i32) {
    %c0_i32 = arith.constant 0 : i32
    %c0_i32_0 = arith.constant 0 : i32
    %c0_i32_1 = arith.constant 0 : i32
    return %arg0, %c0_i32, %c0_i32_0 : i32, i32, i32
  }
}

</mosaic_0001>

<llo_original>
// kernel: tpu_custom_call.1
$region0: #{tpu_custom_call.1}
  #allocation0 [shape = 'u32[]', space=smem, size = 0x4, offset = 0x4, fixed_abs, tag = 'smem constant byte address 0x4 - core index']
  #allocation1 [shape = 'u32[72,128]{1,0:T(1,128)}', space=vmem, size = 0x9000, scoped, tag = 'internal scratch']
  %s0 = inlined_call_operand.vmem [shape: f32[22,4,128], index: 0, kind: input, shape index: {}]
  %s1 = inlined_call_operand.vmem [shape: f32[81,4,1], index: 1, kind: input, shape index: {}]
  %s2 = inlined_call_operand.vmem [shape: f32[3,8,4], index: 2, kind: input, shape index: {}]
  %s3 = inlined_call_operand.hbm [shape: f32[16,8,128], index: 3, kind: output, shape index: {}]
  %s4 = sld [smem:[#allocation0]]
  $region45: #{tpu_custom_call.1} parent=0
    _
  %s6 = ssub.s32 1, %s4
  %s7 = scalar_select 0, %s6, %s4
  $region1: #{tpu_custom_call.1} parent=0
    #allocation2 [shape = 'u8[65536]{0}', space=vmem, size = 0x10000, scoped, tag = 'output window, operand 0']
    #allocation3 [shape = 's32[2]{0}', space=sflag, size = 0x8, scoped, tag = 'scoped memory for tpu_custom_call.1']
    %8 = vsyncpa [#allocation3], 0
    %s9 = scalar_lea.sflag [#allocation3], 1
    %10 = vsyncpa %s9, 0
    loop: start=0, step=1, limit=4
    $region2: #{tpu_custom_call.1} parent=1 // loop_pre_header
      _
    $region3: #{tpu_custom_call.1} parent=1 // loop_header
      %s12 = sphi 0, %s16
      %p13 = scmp.ge.s32.totalorder %s12, 4
      %s20 = sphi 0, %s20
      %s22 = sphi 0, %s20
      %s23 = sphi 0, %s22
      %s37 = sphi 0, %s23
      %s41 = sphi 0, %s41
      %s43 = sphi 0, %s41
      %s44 = sphi 0, %s43
      %s58 = sphi 0, %s44
      %s62 = sphi 0, %s62
      %s64 = sphi 0, %s62
      %s65 = sphi 0, %s64
      %s79 = sphi 0, %s65
      %s85 = sphi 0, %s87
      %s88 = sphi 0, %s85
      %s89 = sphi 0, %s88
      %s105 = sphi 0, %s89
    $region4: #{tpu_custom_call.1} parent=1 // loop_header_branch
      %15 = sbr.rel (%p13) target = $region8
    $region5: #{tpu_custom_call.1} parent=1 // loop_body
      %s17 = ssub.s32 %s12, 1
      %s18 = ssub.s32 %s12, 2
      %s19 = sadd.s32 %s12, 1
      %s21 = sadd.s32 %s20, 1
      %p24 = scmp.eq.s32.totalorder %s12, 1
      %p25 = scmp.ne.s32.totalorder %s20, %s22
      %p26 = scmp.eq.s32.totalorder %s12, 0
      %p27 = por %p25, %p26
      %p28 = scmp.ne.s32.totalorder %s20, %s22
      %p29 = scmp.eq.s32.totalorder %s17, 1
      %p30 = por %p28, %p29
      %p31 = scmp.ne.s32.totalorder %s22, %s23
      %p32 = scmp.eq.s32.totalorder %s17, 0
      %p33 = por %p31, %p32
      %p34 = scmp.ne.s32.totalorder %s22, %s23
      %p35 = scmp.eq.s32.totalorder %s18, 1
      %p36 = por %p34, %p35
      %p38 = scmp.ne.s32.totalorder %s23, %s37
      %p39 = scmp.eq.s32.totalorder %s18, 0
      %p40 = por %p38, %p39
      %s42 = sadd.s32 %s41, 1
      %p45 = scmp.eq.s32.totalorder %s12, 1
      %p46 = scmp.ne.s32.totalorder %s41, %s43
      %p47 = scmp.eq.s32.totalorder %s12, 0
      %p48 = por %p46, %p47
      %p49 = scmp.ne.s32.totalorder %s41, %s43
      %p50 = scmp.eq.s32.totalorder %s17, 1
      %p51 = por %p49, %p50
      %p52 = scmp.ne.s32.totalorder %s43, %s44
      %p53 = scmp.eq.s32.totalorder %s17, 0
      %p54 = por %p52, %p53
      %p55 = scmp.ne.s32.totalorder %s43, %s44
      %p56 = scmp.eq.s32.totalorder %s18, 1
      %p57 = por %p55, %p56
      %p59 = scmp.ne.s32.totalorder %s44, %s58
      %p60 = scmp.eq.s32.totalorder %s18, 0
      %p61 = por %p59, %p60
      %s63 = sadd.s32 %s62, 1
      %p66 = scmp.eq.s32.totalorder %s12, 1
      %p67 = scmp.ne.s32.totalorder %s62, %s64
      %p68 = scmp.eq.s32.totalorder %s12, 0
      %p69 = por %p67, %p68
      %p70 = scmp.ne.s32.totalorder %s62, %s64
      %p71 = scmp.eq.s32.totalorder %s17, 1
      %p72 = por %p70, %p71
      %p73 = scmp.ne.s32.totalorder %s64, %s65
      %p74 = scmp.eq.s32.totalorder %s17, 0
      %p75 = por %p73, %p74
      %p76 = scmp.ne.s32.totalorder %s64, %s65
      %p77 = scmp.eq.s32.totalorder %s18, 1
      %p78 = por %p76, %p77
      %p80 = scmp.ne.s32.totalorder %s65, %s79
      %p81 = scmp.eq.s32.totalorder %s18, 0
      %p82 = por %p80, %p81
      %s83 = ssub.s32 %s12, %s19
      %p84 = scmp.eq.s32.totalorder %s83, 0
      %s86 = sadd.s32 %s85, 1
      %s87 = scalar_select %p84, %s85, %s86
      %p90 = pneg %p84
      %p91 = scmp.eq.s32.totalorder %s12, 1
      %p92 = por %p90, %p91
      %p93 = scmp.ne.s32.totalorder %s85, %s88
      %p94 = scmp.eq.s32.totalorder %s12, 0
      %p95 = por %p93, %p94
      %p96 = scmp.ne.s32.totalorder %s85, %s88
      %p97 = scmp.eq.s32.totalorder %s17, 1
      %p98 = por %p96, %p97
      %p99 = scmp.ne.s32.totalorder %s88, %s89
      %p100 = scmp.eq.s32.totalorder %s17, 0
      %p101 = por %p99, %p100
      %p102 = scmp.ne.s32.totalorder %s88, %s89
      %p103 = scmp.eq.s32.totalorder %s18, 1
      %p104 = por %p102, %p103
      %p106 = scmp.ne.s32.totalorder %s89, %s105
      %p107 = scmp.eq.s32.totalorder %s18, 0
      %p108 = por %p106, %p107
      %p109 = scmp.le.s32.totalorder 1, %s12
      %p110 = scmp.lt.s32.totalorder %s12, 3
      %p111 = pnand %p109, %p110
      %p112 = pneg %p111
      // Predicated region
      $region9: #{tpu_custom_call.1} parent=5 // pred_check
        _
      $region10: #{tpu_custom_call.1} parent=5 // pred_check_branch
        %114 = sbr.rel (%p111) target = $region12
      $region11: #{tpu_custom_call.1} parent=5 // pred_region
        %s115 = ssub.s32 %s12, 1
        // Predicated region
        $region13: #{tpu_custom_call.1} parent=11 // pred_check
          %p116 = pneg %p33
        $region14: #{tpu_custom_call.1} parent=11 // pred_check_branch
          %118 = sbr.rel (%p116) target = $region16
        $region15: #{tpu_custom_call.1} parent=11 // pred_region
          _
        $region16: #{tpu_custom_call.1} parent=11 // pred_fallthru
          _
        // Predicated region
        $region17: #{tpu_custom_call.1} parent=11 // pred_check
          %p119 = pneg %p54
        $region18: #{tpu_custom_call.1} parent=11 // pred_check_branch
          %121 = sbr.rel (%p119) target = $region20
        $region19: #{tpu_custom_call.1} parent=11 // pred_region
          _
        $region20: #{tpu_custom_call.1} parent=11 // pred_fallthru
          _
        // Predicated region
        $region21: #{tpu_custom_call.1} parent=11 // pred_check
          %p122 = pneg %p75
        $region22: #{tpu_custom_call.1} parent=11 // pred_check_branch
          %124 = sbr.rel (%p122) target = $region24
        $region23: #{tpu_custom_call.1} parent=11 // pred_region
          _
        $region24: #{tpu_custom_call.1} parent=11 // pred_fallthru
          _
      $region12: #{tpu_custom_call.1} parent=5 // pred_fallthru
        _
      %p125 = scmp.lt.s32.totalorder %s12, 2
      // Predicated region
      $region25: #{tpu_custom_call.1} parent=5 // pred_check
        %p126 = pneg %p125
      $region26: #{tpu_custom_call.1} parent=5 // pred_check_branch
        %128 = sbr.rel (%p126) target = $region28
      $region27: #{tpu_custom_call.1} parent=5 // pred_region
        _
      $region28: #{tpu_custom_call.1} parent=5 // pred_fallthru
        _
      %p129 = scmp.le.s32.totalorder 1, %s12
      %p130 = scmp.lt.s32.totalorder %s12, 3
      %p131 = pnand %p129, %p130
      %p132 = pneg %p131
      // Predicated region
      $region29: #{tpu_custom_call.1} parent=5 // pred_check
        _
      $region30: #{tpu_custom_call.1} parent=5 // pred_check_branch
        %134 = sbr.rel (%p131) target = $region32
      $region31: #{tpu_custom_call.1} parent=5 // pred_region
        %s135 = ssub.s32 %s12, 1
        %p136 = pneg %p33
        %p137 = pneg %p30
        %p138 = pneg %p54
        %p139 = pneg %p51
        %p140 = pneg %p75
        %p141 = pneg %p72
        %p142 = pneg %p101
        %p143 = pneg %p98
        %s144 = sand.u32 %s88, 1
        %s145 = scalar_lea.sflag [#allocation3], %s144
        %s146 = sand.u32 %s88, 1
        %s147 = smul.addr %s146, 64
        %s148 = scalar_lea.vmem [#allocation2], %s147
        %s149 = smul.u32 8, %s17
        %s150 = smul.u32 %s17, 8
        %s151 = smul.u32 %s150, 4
        %s152 = scalar_lea.vmem %s0, %s151
        %v153 = vld [vmem:[%s152] sm:$0xf]
        %v154 = vld [vmem:[%s152 + $0x4] sm:$0xf]
        %v155 = vld [vmem:[%s152 + $0x8] sm:$0xf]
        %v156 = vld [vmem:[%s152 + $0xc] sm:$0xf]
        %v157 = vld [vmem:[%s152 + $0x10] sm:$0xf]
        %v158 = vld [vmem:[%s152 + $0x14] sm:$0xf]
        %v159 = vld [vmem:[%s152 + $0x18] sm:$0xf]
        %v160 = vld [vmem:[%s152 + $0x1c] sm:$0xf]
        %v161 = vld [vmem:[%s152 + $0x20] sm:$0xf]
        %v162 = vld [vmem:[%s152 + $0x24] sm:$0xf]
        %v163 = vld [vmem:[%s152 + $0x28] sm:$0xf]
        %v164 = vld [vmem:[%s152 + $0x2c] sm:$0xf]
        %v165 = vld [vmem:[%s152 + $0x30] sm:$0xf]
        %v166 = vld [vmem:[%s152 + $0x34] sm:$0xf]
        %181 = vrot.lane.b32.xlu0 %v153, 127
        %v182 = vpop.permute.xlu0 %181
        %183 = vrot.lane.b32.xlu0 %v154, 127
        %v184 = vpop.permute.xlu0 %183
        %185 = vrot.lane.b32.xlu0 %v155, 127
        %v186 = vpop.permute.xlu0 %185
        %187 = vrot.lane.b32.xlu0 %v156, 127
        %v188 = vpop.permute.xlu0 %187
        %189 = vrot.lane.b32.xlu0 %v157, 127
        %v190 = vpop.permute.xlu0 %189
        %191 = vrot.lane.b32.xlu0 %v158, 127
        %v192 = vpop.permute.xlu0 %191
        %193 = vrot.lane.b32.xlu0 %v159, 127
        %v194 = vpop.permute.xlu0 %193
        %195 = vrot.lane.b32.xlu0 %v160, 127
        %v196 = vpop.permute.xlu0 %195
        %197 = vrot.lane.b32.xlu0 %v161, 127
        %v198 = vpop.permute.xlu0 %197
        %199 = vrot.lane.b32.xlu0 %v162, 127
        %v200 = vpop.permute.xlu0 %199
        %201 = vrot.lane.b32.xlu0 %v163, 127
        %v202 = vpop.permute.xlu0 %201
        %203 = vrot.lane.b32.xlu0 %v164, 127
        %v204 = vpop.permute.xlu0 %203
        %205 = vrot.lane.b32.xlu0 %v165, 127
        %v206 = vpop.permute.xlu0 %205
        %207 = vrot.lane.b32.xlu0 %v166, 127
        %v208 = vpop.permute.xlu0 %207
        %223 = vrot.lane.b32.xlu0 %v153, 126
        %v224 = vpop.permute.xlu0 %223
        %225 = vrot.lane.b32.xlu0 %v154, 126
        %v226 = vpop.permute.xlu0 %225
        %227 = vrot.lane.b32.xlu0 %v155, 126
        %v228 = vpop.permute.xlu0 %227
        %229 = vrot.lane.b32.xlu0 %v156, 126
        %v230 = vpop.permute.xlu0 %229
        %231 = vrot.lane.b32.xlu0 %v157, 126
        %v232 = vpop.permute.xlu0 %231
        %233 = vrot.lane.b32.xlu0 %v158, 126
        %v234 = vpop.permute.xlu0 %233
        %235 = vrot.lane.b32.xlu0 %v159, 126
        %v236 = vpop.permute.xlu0 %235
        %237 = vrot.lane.b32.xlu0 %v160, 126
        %v238 = vpop.permute.xlu0 %237
        %239 = vrot.lane.b32.xlu0 %v161, 126
        %v240 = vpop.permute.xlu0 %239
        %241 = vrot.lane.b32.xlu0 %v162, 126
        %v242 = vpop.permute.xlu0 %241
        %243 = vrot.lane.b32.xlu0 %v163, 126
        %v244 = vpop.permute.xlu0 %243
        %245 = vrot.lane.b32.xlu0 %v164, 126
        %v246 = vpop.permute.xlu0 %245
        %247 = vrot.lane.b32.xlu0 %v165, 126
        %v248 = vpop.permute.xlu0 %247
        %249 = vrot.lane.b32.xlu0 %v166, 126
        %v250 = vpop.permute.xlu0 %249
        %265 = vrot.lane.b32.xlu0 %v153, 118
        %v266 = vpop.permute.xlu0 %265
        %267 = vrot.lane.b32.xlu0 %v154, 118
        %v268 = vpop.permute.xlu0 %267
        %269 = vrot.lane.b32.xlu0 %v155, 118
        %v270 = vpop.permute.xlu0 %269
        %271 = vrot.lane.b32.xlu0 %v156, 118
        %v272 = vpop.permute.xlu0 %271
        %273 = vrot.lane.b32.xlu0 %v157, 118
        %v274 = vpop.permute.xlu0 %273
        %275 = vrot.lane.b32.xlu0 %v158, 118
        %v276 = vpop.permute.xlu0 %275
        %277 = vrot.lane.b32.xlu0 %v159, 118
        %v278 = vpop.permute.xlu0 %277
        %279 = vrot.lane.b32.xlu0 %v160, 118
        %v280 = vpop.permute.xlu0 %279
        %281 = vrot.lane.b32.xlu0 %v161, 118
        %v282 = vpop.permute.xlu0 %281
        %283 = vrot.lane.b32.xlu0 %v162, 118
        %v284 = vpop.permute.xlu0 %283
        %285 = vrot.lane.b32.xlu0 %v163, 118
        %v286 = vpop.permute.xlu0 %285
        %287 = vrot.lane.b32.xlu0 %v164, 118
        %v288 = vpop.permute.xlu0 %287
        %289 = vrot.lane.b32.xlu0 %v165, 118
        %v290 = vpop.permute.xlu0 %289
        %291 = vrot.lane.b32.xlu0 %v166, 118
        %v292 = vpop.permute.xlu0 %291
        %307 = vrot.lane.b32.xlu0 %v153, 117
        %v308 = vpop.permute.xlu0 %307
        %309 = vrot.lane.b32.xlu0 %v154, 117
        %v310 = vpop.permute.xlu0 %309
        %311 = vrot.lane.b32.xlu0 %v155, 117
        %v312 = vpop.permute.xlu0 %311
        %313 = vrot.lane.b32.xlu0 %v156, 117
        %v314 = vpop.permute.xlu0 %313
        %315 = vrot.lane.b32.xlu0 %v157, 117
        %v316 = vpop.permute.xlu0 %315
        %317 = vrot.lane.b32.xlu0 %v158, 117
        %v318 = vpop.permute.xlu0 %317
        %319 = vrot.lane.b32.xlu0 %v159, 117
        %v320 = vpop.permute.xlu0 %319
        %321 = vrot.lane.b32.xlu0 %v160, 117
        %v322 = vpop.permute.xlu0 %321
        %323 = vrot.lane.b32.xlu0 %v161, 117
        %v324 = vpop.permute.xlu0 %323
        %325 = vrot.lane.b32.xlu0 %v162, 117
        %v326 = vpop.permute.xlu0 %325
        %327 = vrot.lane.b32.xlu0 %v163, 117
        %v328 = vpop.permute.xlu0 %327
        %329 = vrot.lane.b32.xlu0 %v164, 117
        %v330 = vpop.permute.xlu0 %329
        %331 = vrot.lane.b32.xlu0 %v165, 117
        %v332 = vpop.permute.xlu0 %331
        %333 = vrot.lane.b32.xlu0 %v166, 117
        %v334 = vpop.permute.xlu0 %333
        %349 = vrot.lane.b32.xlu0 %v153, 116
        %v350 = vpop.permute.xlu0 %349
        %351 = vrot.lane.b32.xlu0 %v154, 116
        %v352 = vpop.permute.xlu0 %351
        %353 = vrot.lane.b32.xlu0 %v155, 116
        %v354 = vpop.permute.xlu0 %353
        %355 = vrot.lane.b32.xlu0 %v156, 116
        %v356 = vpop.permute.xlu0 %355
        %357 = vrot.lane.b32.xlu0 %v157, 116
        %v358 = vpop.permute.xlu0 %357
        %359 = vrot.lane.b32.xlu0 %v158, 116
        %v360 = vpop.permute.xlu0 %359
        %361 = vrot.lane.b32.xlu0 %v159, 116
        %v362 = vpop.permute.xlu0 %361
        %363 = vrot.lane.b32.xlu0 %v160, 116
        %v364 = vpop.permute.xlu0 %363
        %365 = vrot.lane.b32.xlu0 %v161, 116
        %v366 = vpop.permute.xlu0 %365
        %367 = vrot.lane.b32.xlu0 %v162, 116
        %v368 = vpop.permute.xlu0 %367
        %369 = vrot.lane.b32.xlu0 %v163, 116
        %v370 = vpop.permute.xlu0 %369
        %371 = vrot.lane.b32.xlu0 %v164, 116
        %v372 = vpop.permute.xlu0 %371
        %373 = vrot.lane.b32.xlu0 %v165, 116
        %v374 = vpop.permute.xlu0 %373
        %375 = vrot.lane.b32.xlu0 %v166, 116
        %v376 = vpop.permute.xlu0 %375
        %391 = vrot.lane.b32.xlu0 %v153, 108
        %v392 = vpop.permute.xlu0 %391
        %393 = vrot.lane.b32.xlu0 %v154, 108
        %v394 = vpop.permute.xlu0 %393
        %395 = vrot.lane.b32.xlu0 %v155, 108
        %v396 = vpop.permute.xlu0 %395
        %397 = vrot.lane.b32.xlu0 %v156, 108
        %v398 = vpop.permute.xlu0 %397
        %399 = vrot.lane.b32.xlu0 %v157, 108
        %v400 = vpop.permute.xlu0 %399
        %401 = vrot.lane.b32.xlu0 %v158, 108
        %v402 = vpop.permute.xlu0 %401
        %403 = vrot.lane.b32.xlu0 %v159, 108
        %v404 = vpop.permute.xlu0 %403
        %405 = vrot.lane.b32.xlu0 %v160, 108
        %v406 = vpop.permute.xlu0 %405
        %407 = vrot.lane.b32.xlu0 %v161, 108
        %v408 = vpop.permute.xlu0 %407
        %409 = vrot.lane.b32.xlu0 %v162, 108
        %v410 = vpop.permute.xlu0 %409
        %411 = vrot.lane.b32.xlu0 %v163, 108
        %v412 = vpop.permute.xlu0 %411
        %413 = vrot.lane.b32.xlu0 %v164, 108
        %v414 = vpop.permute.xlu0 %413
        %415 = vrot.lane.b32.xlu0 %v165, 108
        %v416 = vpop.permute.xlu0 %415
        %417 = vrot.lane.b32.xlu0 %v166, 108
        %v418 = vpop.permute.xlu0 %417
        %433 = vrot.lane.b32.xlu0 %v153, 107
        %v434 = vpop.permute.xlu0 %433
        %435 = vrot.lane.b32.xlu0 %v154, 107
        %v436 = vpop.permute.xlu0 %435
        %437 = vrot.lane.b32.xlu0 %v155, 107
        %v438 = vpop.permute.xlu0 %437
        %439 = vrot.lane.b32.xlu0 %v156, 107
        %v440 = vpop.permute.xlu0 %439
        %441 = vrot.lane.b32.xlu0 %v157, 107
        %v442 = vpop.permute.xlu0 %441
        %443 = vrot.lane.b32.xlu0 %v158, 107
        %v444 = vpop.permute.xlu0 %443
        %445 = vrot.lane.b32.xlu0 %v159, 107
        %v446 = vpop.permute.xlu0 %445
        %447 = vrot.lane.b32.xlu0 %v160, 107
        %v448 = vpop.permute.xlu0 %447
        %449 = vrot.lane.b32.xlu0 %v161, 107
        %v450 = vpop.permute.xlu0 %449
        %451 = vrot.lane.b32.xlu0 %v162, 107
        %v452 = vpop.permute.xlu0 %451
        %453 = vrot.lane.b32.xlu0 %v163, 107
        %v454 = vpop.permute.xlu0 %453
        %455 = vrot.lane.b32.xlu0 %v164, 107
        %v456 = vpop.permute.xlu0 %455
        %457 = vrot.lane.b32.xlu0 %v165, 107
        %v458 = vpop.permute.xlu0 %457
        %459 = vrot.lane.b32.xlu0 %v166, 107
        %v460 = vpop.permute.xlu0 %459
        %475 = vrot.lane.b32.xlu0 %v153, 106
        %v476 = vpop.permute.xlu0 %475
        %477 = vrot.lane.b32.xlu0 %v154, 106
        %v478 = vpop.permute.xlu0 %477
        %479 = vrot.lane.b32.xlu0 %v155, 106
        %v480 = vpop.permute.xlu0 %479
        %481 = vrot.lane.b32.xlu0 %v156, 106
        %v482 = vpop.permute.xlu0 %481
        %483 = vrot.lane.b32.xlu0 %v157, 106
        %v484 = vpop.permute.xlu0 %483
        %485 = vrot.lane.b32.xlu0 %v158, 106
        %v486 = vpop.permute.xlu0 %485
        %487 = vrot.lane.b32.xlu0 %v159, 106
        %v488 = vpop.permute.xlu0 %487
        %489 = vrot.lane.b32.xlu0 %v160, 106
        %v490 = vpop.permute.xlu0 %489
        %491 = vrot.lane.b32.xlu0 %v161, 106
        %v492 = vpop.permute.xlu0 %491
        %493 = vrot.lane.b32.xlu0 %v162, 106
        %v494 = vpop.permute.xlu0 %493
        %495 = vrot.lane.b32.xlu0 %v163, 106
        %v496 = vpop.permute.xlu0 %495
        %497 = vrot.lane.b32.xlu0 %v164, 106
        %v498 = vpop.permute.xlu0 %497
        %499 = vrot.lane.b32.xlu0 %v165, 106
        %v500 = vpop.permute.xlu0 %499
        %501 = vrot.lane.b32.xlu0 %v166, 106
        %v502 = vpop.permute.xlu0 %501
        %v517 = vld [vmem:[%s1] sm:$0xf]
        %519 = vset.pattern.permute.xlu0 0
        %520 = vperm.xlu0 %519, %v517
        %v521 = vpop.permute.xlu0 %520
        %v523 = vmul.f32 %v155, %v521
        %v524 = vmul.f32 %v156, %v521
        %v525 = vmul.f32 %v157, %v521
        %v526 = vmul.f32 %v158, %v521
        %v527 = vmul.f32 %v159, %v521
        %v528 = vmul.f32 %v160, %v521
        %v529 = vmul.f32 %v161, %v521
        %v530 = vmul.f32 %v162, %v521
        %v531 = vadd.f32 %v523, 0.0
        %v532 = vadd.f32 %v524, 0.0
        %v533 = vadd.f32 %v525, 0.0
        %v534 = vadd.f32 %v526, 0.0
        %v535 = vadd.f32 %v527, 0.0
        %v536 = vadd.f32 %v528, 0.0
        %v537 = vadd.f32 %v529, 0.0
        %v538 = vadd.f32 %v530, 0.0
        %s539 = scalar_lea.vmem %s1, 4
        %v540 = vld [vmem:[%s539] sm:$0xf]
        %542 = vset.pattern.permute.xlu0 0
        %543 = vperm.xlu0 %542, %v540
        %v544 = vpop.permute.xlu0 %543
        %v546 = vmul.f32 %v156, %v544
        %v547 = vmul.f32 %v157, %v544
        %v548 = vmul.f32 %v158, %v544
        %v549 = vmul.f32 %v159, %v544
        %v550 = vmul.f32 %v160, %v544
        %v551 = vmul.f32 %v161, %v544
        %v552 = vmul.f32 %v162, %v544
        %v553 = vmul.f32 %v163, %v544
        %v554 = vadd.f32 %v531, %v546
        %v555 = vadd.f32 %v532, %v547
        %v556 = vadd.f32 %v533, %v548
        %v557 = vadd.f32 %v534, %v549
        %v558 = vadd.f32 %v535, %v550
        %v559 = vadd.f32 %v536, %v551
        %v560 = vadd.f32 %v537, %v552
        %v561 = vadd.f32 %v538, %v553
        %s562 = scalar_lea.vmem %s1, 8
        %v563 = vld [vmem:[%s562] sm:$0xf]
        %565 = vset.pattern.permute.xlu0 0
        %566 = vperm.xlu0 %565, %v563
        %v567 = vpop.permute.xlu0 %566
        %v569 = vmul.f32 %v157, %v567
        %v570 = vmul.f32 %v158, %v567
        %v571 = vmul.f32 %v159, %v567
        %v572 = vmul.f32 %v160, %v567
        %v573 = vmul.f32 %v161, %v567
        %v574 = vmul.f32 %v162, %v567
        %v575 = vmul.f32 %v163, %v567
        %v576 = vmul.f32 %v164, %v567
        %v577 = vadd.f32 %v554, %v569
        %v578 = vadd.f32 %v555, %v570
        %v579 = vadd.f32 %v556, %v571
        %v580 = vadd.f32 %v557, %v572
        %v581 = vadd.f32 %v558, %v573
        %v582 = vadd.f32 %v559, %v574
        %v583 = vadd.f32 %v560, %v575
        %v584 = vadd.f32 %v561, %v576
        %s585 = scalar_lea.vmem %s1, 12
        %v586 = vld [vmem:[%s585] sm:$0xf]
        %588 = vset.pattern.permute.xlu0 0
        %589 = vperm.xlu0 %588, %v586
        %v590 = vpop.permute.xlu0 %589
        %v592 = vmul.f32 %v186, %v590
        %v593 = vmul.f32 %v188, %v590
        %v594 = vmul.f32 %v190, %v590
        %v595 = vmul.f32 %v192, %v590
        %v596 = vmul.f32 %v194, %v590
        %v597 = vmul.f32 %v196, %v590
        %v598 = vmul.f32 %v198, %v590
        %v599 = vmul.f32 %v200, %v590
        %v600 = vadd.f32 %v577, %v592
        %v601 = vadd.f32 %v578, %v593
        %v602 = vadd.f32 %v579, %v594
        %v603 = vadd.f32 %v580, %v595
        %v604 = vadd.f32 %v581, %v596
        %v605 = vadd.f32 %v582, %v597
        %v606 = vadd.f32 %v583, %v598
        %v607 = vadd.f32 %v584, %v599
        %s608 = scalar_lea.vmem %s1, 16
        %v609 = vld [vmem:[%s608] sm:$0xf]
        %611 = vset.pattern.permute.xlu0 0
        %612 = vperm.xlu0 %611, %v609
        %v613 = vpop.permute.xlu0 %612
        %v615 = vmul.f32 %v188, %v613
        %v616 = vmul.f32 %v190, %v613
        %v617 = vmul.f32 %v192, %v613
        %v618 = vmul.f32 %v194, %v613
        %v619 = vmul.f32 %v196, %v613
        %v620 = vmul.f32 %v198, %v613
        %v621 = vmul.f32 %v200, %v613
        %v622 = vmul.f32 %v202, %v613
        %v623 = vadd.f32 %v600, %v615
        %v624 = vadd.f32 %v601, %v616
        %v625 = vadd.f32 %v602, %v617
        %v626 = vadd.f32 %v603, %v618
        %v627 = vadd.f32 %v604, %v619
        %v628 = vadd.f32 %v605, %v620
        %v629 = vadd.f32 %v606, %v621
        %v630 = vadd.f32 %v607, %v622
        %s631 = scalar_lea.vmem %s1, 20
        %v632 = vld [vmem:[%s631] sm:$0xf]
        %634 = vset.pattern.permute.xlu0 0
        %635 = vperm.xlu0 %634, %v632
        %v636 = vpop.permute.xlu0 %635
        %v638 = vmul.f32 %v190, %v636
        %v639 = vmul.f32 %v192, %v636
        %v640 = vmul.f32 %v194, %v636
        %v641 = vmul.f32 %v196, %v636
        %v642 = vmul.f32 %v198, %v636
        %v643 = vmul.f32 %v200, %v636
        %v644 = vmul.f32 %v202, %v636
        %v645 = vmul.f32 %v204, %v636
        %v646 = vadd.f32 %v623, %v638
        %v647 = vadd.f32 %v624, %v639
        %v648 = vadd.f32 %v625, %v640
        %v649 = vadd.f32 %v626, %v641
        %v650 = vadd.f32 %v627, %v642
        %v651 = vadd.f32 %v628, %v643
        %v652 = vadd.f32 %v629, %v644
        %v653 = vadd.f32 %v630, %v645
        %s654 = scalar_lea.vmem %s1, 24
        %v655 = vld [vmem:[%s654] sm:$0xf]
        %657 = vset.pattern.permute.xlu0 0
        %658 = vperm.xlu0 %657, %v655
        %v659 = vpop.permute.xlu0 %658
        %v661 = vmul.f32 %v228, %v659
        %v662 = vmul.f32 %v230, %v659
        %v663 = vmul.f32 %v232, %v659
        %v664 = vmul.f32 %v234, %v659
        %v665 = vmul.f32 %v236, %v659
        %v666 = vmul.f32 %v238, %v659
        %v667 = vmul.f32 %v240, %v659
        %v668 = vmul.f32 %v242, %v659
        %v669 = vadd.f32 %v646, %v661
        %v670 = vadd.f32 %v647, %v662
        %v671 = vadd.f32 %v648, %v663
        %v672 = vadd.f32 %v649, %v664
        %v673 = vadd.f32 %v650, %v665
        %v674 = vadd.f32 %v651, %v666
        %v675 = vadd.f32 %v652, %v667
        %v676 = vadd.f32 %v653, %v668
        %s677 = scalar_lea.vmem %s1, 28
        %v678 = vld [vmem:[%s677] sm:$0xf]
        %680 = vset.pattern.permute.xlu0 0
        %681 = vperm.xlu0 %680, %v678
        %v682 = vpop.permute.xlu0 %681
        %v684 = vmul.f32 %v230, %v682
        %v685 = vmul.f32 %v232, %v682
        %v686 = vmul.f32 %v234, %v682
        %v687 = vmul.f32 %v236, %v682
        %v688 = vmul.f32 %v238, %v682
        %v689 = vmul.f32 %v240, %v682
        %v690 = vmul.f32 %v242, %v682
        %v691 = vmul.f32 %v244, %v682
        %v692 = vadd.f32 %v669, %v684
        %v693 = vadd.f32 %v670, %v685
        %v694 = vadd.f32 %v671, %v686
        %v695 = vadd.f32 %v672, %v687
        %v696 = vadd.f32 %v673, %v688
        %v697 = vadd.f32 %v674, %v689
        %v698 = vadd.f32 %v675, %v690
        %v699 = vadd.f32 %v676, %v691
        %s700 = scalar_lea.vmem %s1, 32
        %v701 = vld [vmem:[%s700] sm:$0xf]
        %703 = vset.pattern.permute.xlu0 0
        %704 = vperm.xlu0 %703, %v701
        %v705 = vpop.permute.xlu0 %704
        %v707 = vmul.f32 %v232, %v705
        %v708 = vmul.f32 %v234, %v705
        %v709 = vmul.f32 %v236, %v705
        %v710 = vmul.f32 %v238, %v705
        %v711 = vmul.f32 %v240, %v705
        %v712 = vmul.f32 %v242, %v705
        %v713 = vmul.f32 %v244, %v705
        %v714 = vmul.f32 %v246, %v705
        %v715 = vadd.f32 %v692, %v707
        %v716 = vadd.f32 %v693, %v708
        %v717 = vadd.f32 %v694, %v709
        %v718 = vadd.f32 %v695, %v710
        %v719 = vadd.f32 %v696, %v711
        %v720 = vadd.f32 %v697, %v712
        %v721 = vadd.f32 %v698, %v713
        %v722 = vadd.f32 %v699, %v714
        %s723 = scalar_lea.vmem %s1, 36
        %v724 = vld [vmem:[%s723] sm:$0xf]
        %726 = vset.pattern.permute.xlu0 0
        %727 = vperm.xlu0 %726, %v724
        %v728 = vpop.permute.xlu0 %727
        %v730 = vmul.f32 %v270, %v728
        %v731 = vmul.f32 %v272, %v728
        %v732 = vmul.f32 %v274, %v728
        %v733 = vmul.f32 %v276, %v728
        %v734 = vmul.f32 %v278, %v728
        %v735 = vmul.f32 %v280, %v728
        %v736 = vmul.f32 %v282, %v728
        %v737 = vmul.f32 %v284, %v728
        %v738 = vadd.f32 %v715, %v730
        %v739 = vadd.f32 %v716, %v731
        %v740 = vadd.f32 %v717, %v732
        %v741 = vadd.f32 %v718, %v733
        %v742 = vadd.f32 %v719, %v734
        %v743 = vadd.f32 %v720, %v735
        %v744 = vadd.f32 %v721, %v736
        %v745 = vadd.f32 %v722, %v737
        %s746 = scalar_lea.vmem %s1, 40
        %v747 = vld [vmem:[%s746] sm:$0xf]
        %749 = vset.pattern.permute.xlu0 0
        %750 = vperm.xlu0 %749, %v747
        %v751 = vpop.permute.xlu0 %750
        %v753 = vmul.f32 %v272, %v751
        %v754 = vmul.f32 %v274, %v751
        %v755 = vmul.f32 %v276, %v751
        %v756 = vmul.f32 %v278, %v751
        %v757 = vmul.f32 %v280, %v751
        %v758 = vmul.f32 %v282, %v751
        %v759 = vmul.f32 %v284, %v751
        %v760 = vmul.f32 %v286, %v751
        %v761 = vadd.f32 %v738, %v753
        %v762 = vadd.f32 %v739, %v754
        %v763 = vadd.f32 %v740, %v755
        %v764 = vadd.f32 %v741, %v756
        %v765 = vadd.f32 %v742, %v757
        %v766 = vadd.f32 %v743, %v758
        %v767 = vadd.f32 %v744, %v759
        %v768 = vadd.f32 %v745, %v760
        %s769 = scalar_lea.vmem %s1, 44
        %v770 = vld [vmem:[%s769] sm:$0xf]
        %772 = vset.pattern.permute.xlu0 0
        %773 = vperm.xlu0 %772, %v770
        %v774 = vpop.permute.xlu0 %773
        %v776 = vmul.f32 %v274, %v774
        %v777 = vmul.f32 %v276, %v774
        %v778 = vmul.f32 %v278, %v774
        %v779 = vmul.f32 %v280, %v774
        %v780 = vmul.f32 %v282, %v774
        %v781 = vmul.f32 %v284, %v774
        %v782 = vmul.f32 %v286, %v774
        %v783 = vmul.f32 %v288, %v774
        %v784 = vadd.f32 %v761, %v776
        %v785 = vadd.f32 %v762, %v777
        %v786 = vadd.f32 %v763, %v778
        %v787 = vadd.f32 %v764, %v779
        %v788 = vadd.f32 %v765, %v780
        %v789 = vadd.f32 %v766, %v781
        %v790 = vadd.f32 %v767, %v782
        %v791 = vadd.f32 %v768, %v783
        %s792 = scalar_lea.vmem %s1, 48
        %v793 = vld [vmem:[%s792] sm:$0xf]
        %795 = vset.pattern.permute.xlu0 0
        %796 = vperm.xlu0 %795, %v793
        %v797 = vpop.permute.xlu0 %796
        %v799 = vmul.f32 %v312, %v797
        %v800 = vmul.f32 %v314, %v797
        %v801 = vmul.f32 %v316, %v797
        %v802 = vmul.f32 %v318, %v797
        %v803 = vmul.f32 %v320, %v797
        %v804 = vmul.f32 %v322, %v797
        %v805 = vmul.f32 %v324, %v797
        %v806 = vmul.f32 %v326, %v797
        %v807 = vadd.f32 %v784, %v799
        %v808 = vadd.f32 %v785, %v800
        %v809 = vadd.f32 %v786, %v801
        %v810 = vadd.f32 %v787, %v802
        %v811 = vadd.f32 %v788, %v803
        %v812 = vadd.f32 %v789, %v804
        %v813 = vadd.f32 %v790, %v805
        %v814 = vadd.f32 %v791, %v806
        %s815 = scalar_lea.vmem %s1, 52
        %v816 = vld [vmem:[%s815] sm:$0xf]
        %818 = vset.pattern.permute.xlu0 0
        %819 = vperm.xlu0 %818, %v816
        %v820 = vpop.permute.xlu0 %819
        %v822 = vmul.f32 %v314, %v820
        %v823 = vmul.f32 %v316, %v820
        %v824 = vmul.f32 %v318, %v820
        %v825 = vmul.f32 %v320, %v820
        %v826 = vmul.f32 %v322, %v820
        %v827 = vmul.f32 %v324, %v820
        %v828 = vmul.f32 %v326, %v820
        %v829 = vmul.f32 %v328, %v820
        %v830 = vadd.f32 %v807, %v822
        %v831 = vadd.f32 %v808, %v823
        %v832 = vadd.f32 %v809, %v824
        %v833 = vadd.f32 %v810, %v825
        %v834 = vadd.f32 %v811, %v826
        %v835 = vadd.f32 %v812, %v827
        %v836 = vadd.f32 %v813, %v828
        %v837 = vadd.f32 %v814, %v829
        %s838 = scalar_lea.vmem %s1, 56
        %v839 = vld [vmem:[%s838] sm:$0xf]
        %841 = vset.pattern.permute.xlu0 0
        %842 = vperm.xlu0 %841, %v839
        %v843 = vpop.permute.xlu0 %842
        %v845 = vmul.f32 %v316, %v843
        %v846 = vmul.f32 %v318, %v843
        %v847 = vmul.f32 %v320, %v843
        %v848 = vmul.f32 %v322, %v843
        %v849 = vmul.f32 %v324, %v843
        %v850 = vmul.f32 %v326, %v843
        %v851 = vmul.f32 %v328, %v843
        %v852 = vmul.f32 %v330, %v843
        %v853 = vadd.f32 %v830, %v845
        %v854 = vadd.f32 %v831, %v846
        %v855 = vadd.f32 %v832, %v847
        %v856 = vadd.f32 %v833, %v848
        %v857 = vadd.f32 %v834, %v849
        %v858 = vadd.f32 %v835, %v850
        %v859 = vadd.f32 %v836, %v851
        %v860 = vadd.f32 %v837, %v852
        %s861 = scalar_lea.vmem %s1, 60
        %v862 = vld [vmem:[%s861] sm:$0xf]
        %864 = vset.pattern.permute.xlu0 0
        %865 = vperm.xlu0 %864, %v862
        %v866 = vpop.permute.xlu0 %865
        %v868 = vmul.f32 %v354, %v866
        %v869 = vmul.f32 %v356, %v866
        %v870 = vmul.f32 %v358, %v866
        %v871 = vmul.f32 %v360, %v866
        %v872 = vmul.f32 %v362, %v866
        %v873 = vmul.f32 %v364, %v866
        %v874 = vmul.f32 %v366, %v866
        %v875 = vmul.f32 %v368, %v866
        %v876 = vadd.f32 %v853, %v868
        %v877 = vadd.f32 %v854, %v869
        %v878 = vadd.f32 %v855, %v870
        %v879 = vadd.f32 %v856, %v871
        %v880 = vadd.f32 %v857, %v872
        %v881 = vadd.f32 %v858, %v873
        %v882 = vadd.f32 %v859, %v874
        %v883 = vadd.f32 %v860, %v875
        %s884 = scalar_lea.vmem %s1, 64
        %v885 = vld [vmem:[%s884] sm:$0xf]
        %887 = vset.pattern.permute.xlu0 0
        %888 = vperm.xlu0 %887, %v885
        %v889 = vpop.permute.xlu0 %888
        %v891 = vmul.f32 %v356, %v889
        %v892 = vmul.f32 %v358, %v889
        %v893 = vmul.f32 %v360, %v889
        %v894 = vmul.f32 %v362, %v889
        %v895 = vmul.f32 %v364, %v889
        %v896 = vmul.f32 %v366, %v889
        %v897 = vmul.f32 %v368, %v889
        %v898 = vmul.f32 %v370, %v889
        %v899 = vadd.f32 %v876, %v891
        %v900 = vadd.f32 %v877, %v892
        %v901 = vadd.f32 %v878, %v893
        %v902 = vadd.f32 %v879, %v894
        %v903 = vadd.f32 %v880, %v895
        %v904 = vadd.f32 %v881, %v896
        %v905 = vadd.f32 %v882, %v897
        %v906 = vadd.f32 %v883, %v898
        %s907 = scalar_lea.vmem %s1, 68
        %v908 = vld [vmem:[%s907] sm:$0xf]
        %910 = vset.pattern.permute.xlu0 0
        %911 = vperm.xlu0 %910, %v908
        %v912 = vpop.permute.xlu0 %911
        %v914 = vmul.f32 %v358, %v912
        %v915 = vmul.f32 %v360, %v912
        %v916 = vmul.f32 %v362, %v912
        %v917 = vmul.f32 %v364, %v912
        %v918 = vmul.f32 %v366, %v912
        %v919 = vmul.f32 %v368, %v912
        %v920 = vmul.f32 %v370, %v912
        %v921 = vmul.f32 %v372, %v912
        %v922 = vadd.f32 %v899, %v914
        %v923 = vadd.f32 %v900, %v915
        %v924 = vadd.f32 %v901, %v916
        %v925 = vadd.f32 %v902, %v917
        %v926 = vadd.f32 %v903, %v918
        %v927 = vadd.f32 %v904, %v919
        %v928 = vadd.f32 %v905, %v920
        %v929 = vadd.f32 %v906, %v921
        %s930 = scalar_lea.vmem %s1, 72
        %v931 = vld [vmem:[%s930] sm:$0xf]
        %933 = vset.pattern.permute.xlu0 0
        %934 = vperm.xlu0 %933, %v931
        %v935 = vpop.permute.xlu0 %934
        %v937 = vmul.f32 %v396, %v935
        %v938 = vmul.f32 %v398, %v935
        %v939 = vmul.f32 %v400, %v935
        %v940 = vmul.f32 %v402, %v935
        %v941 = vmul.f32 %v404, %v935
        %v942 = vmul.f32 %v406, %v935
        %v943 = vmul.f32 %v408, %v935
        %v944 = vmul.f32 %v410, %v935
        %v945 = vadd.f32 %v922, %v937
        %v946 = vadd.f32 %v923, %v938
        %v947 = vadd.f32 %v924, %v939
        %v948 = vadd.f32 %v925, %v940
        %v949 = vadd.f32 %v926, %v941
        %v950 = vadd.f32 %v927, %v942
        %v951 = vadd.f32 %v928, %v943
        %v952 = vadd.f32 %v929, %v944
        %s953 = scalar_lea.vmem %s1, 76
        %v954 = vld [vmem:[%s953] sm:$0xf]
        %956 = vset.pattern.permute.xlu0 0
        %957 = vperm.xlu0 %956, %v954
        %v958 = vpop.permute.xlu0 %957
        %v960 = vmul.f32 %v398, %v958
        %v961 = vmul.f32 %v400, %v958
        %v962 = vmul.f32 %v402, %v958
        %v963 = vmul.f32 %v404, %v958
        %v964 = vmul.f32 %v406, %v958
        %v965 = vmul.f32 %v408, %v958
        %v966 = vmul.f32 %v410, %v958
        %v967 = vmul.f32 %v412, %v958
        %v968 = vadd.f32 %v945, %v960
        %v969 = vadd.f32 %v946, %v961
        %v970 = vadd.f32 %v947, %v962
        %v971 = vadd.f32 %v948, %v963
        %v972 = vadd.f32 %v949, %v964
        %v973 = vadd.f32 %v950, %v965
        %v974 = vadd.f32 %v951, %v966
        %v975 = vadd.f32 %v952, %v967
        %s976 = scalar_lea.vmem %s1, 80
        %v977 = vld [vmem:[%s976] sm:$0xf]
        %979 = vset.pattern.permute.xlu0 0
        %980 = vperm.xlu0 %979, %v977
        %v981 = vpop.permute.xlu0 %980
        %v983 = vmul.f32 %v400, %v981
        %v984 = vmul.f32 %v402, %v981
        %v985 = vmul.f32 %v404, %v981
        %v986 = vmul.f32 %v406, %v981
        %v987 = vmul.f32 %v408, %v981
        %v988 = vmul.f32 %v410, %v981
        %v989 = vmul.f32 %v412, %v981
        %v990 = vmul.f32 %v414, %v981
        %v991 = vadd.f32 %v968, %v983
        %v992 = vadd.f32 %v969, %v984
        %v993 = vadd.f32 %v970, %v985
        %v994 = vadd.f32 %v971, %v986
        %v995 = vadd.f32 %v972, %v987
        %v996 = vadd.f32 %v973, %v988
        %v997 = vadd.f32 %v974, %v989
        %v998 = vadd.f32 %v975, %v990
        %s999 = scalar_lea.vmem %s1, 84
        %v1000 = vld [vmem:[%s999] sm:$0xf]
        %1002 = vset.pattern.permute.xlu0 0
        %1003 = vperm.xlu0 %1002, %v1000
        %v1004 = vpop.permute.xlu0 %1003
        %v1006 = vmul.f32 %v438, %v1004
        %v1007 = vmul.f32 %v440, %v1004
        %v1008 = vmul.f32 %v442, %v1004
        %v1009 = vmul.f32 %v444, %v1004
        %v1010 = vmul.f32 %v446, %v1004
        %v1011 = vmul.f32 %v448, %v1004
        %v1012 = vmul.f32 %v450, %v1004
        %v1013 = vmul.f32 %v452, %v1004
        %v1014 = vadd.f32 %v991, %v1006
        %v1015 = vadd.f32 %v992, %v1007
        %v1016 = vadd.f32 %v993, %v1008
        %v1017 = vadd.f32 %v994, %v1009
        %v1018 = vadd.f32 %v995, %v1010
        %v1019 = vadd.f32 %v996, %v1011
        %v1020 = vadd.f32 %v997, %v1012
        %v1021 = vadd.f32 %v998, %v1013
        %s1022 = scalar_lea.vmem %s1, 88
        %v1023 = vld [vmem:[%s1022] sm:$0xf]
        %1025 = vset.pattern.permute.xlu0 0
        %1026 = vperm.xlu0 %1025, %v1023
        %v1027 = vpop.permute.xlu0 %1026
        %v1029 = vmul.f32 %v440, %v1027
        %v1030 = vmul.f32 %v442, %v1027
        %v1031 = vmul.f32 %v444, %v1027
        %v1032 = vmul.f32 %v446, %v1027
        %v1033 = vmul.f32 %v448, %v1027
        %v1034 = vmul.f32 %v450, %v1027
        %v1035 = vmul.f32 %v452, %v1027
        %v1036 = vmul.f32 %v454, %v1027
        %v1037 = vadd.f32 %v1014, %v1029
        %v1038 = vadd.f32 %v1015, %v1030
        %v1039 = vadd.f32 %v1016, %v1031
        %v1040 = vadd.f32 %v1017, %v1032
        %v1041 = vadd.f32 %v1018, %v1033
        %v1042 = vadd.f32 %v1019, %v1034
        %v1043 = vadd.f32 %v1020, %v1035
        %v1044 = vadd.f32 %v1021, %v1036
        %s1045 = scalar_lea.vmem %s1, 92
        %v1046 = vld [vmem:[%s1045] sm:$0xf]
        %1048 = vset.pattern.permute.xlu0 0
        %1049 = vperm.xlu0 %1048, %v1046
        %v1050 = vpop.permute.xlu0 %1049
        %v1052 = vmul.f32 %v442, %v1050
        %v1053 = vmul.f32 %v444, %v1050
        %v1054 = vmul.f32 %v446, %v1050
        %v1055 = vmul.f32 %v448, %v1050
        %v1056 = vmul.f32 %v450, %v1050
        %v1057 = vmul.f32 %v452, %v1050
        %v1058 = vmul.f32 %v454, %v1050
        %v1059 = vmul.f32 %v456, %v1050
        %v1060 = vadd.f32 %v1037, %v1052
        %v1061 = vadd.f32 %v1038, %v1053
        %v1062 = vadd.f32 %v1039, %v1054
        %v1063 = vadd.f32 %v1040, %v1055
        %v1064 = vadd.f32 %v1041, %v1056
        %v1065 = vadd.f32 %v1042, %v1057
        %v1066 = vadd.f32 %v1043, %v1058
        %v1067 = vadd.f32 %v1044, %v1059
        %s1068 = scalar_lea.vmem %s1, 96
        %v1069 = vld [vmem:[%s1068] sm:$0xf]
        %1071 = vset.pattern.permute.xlu0 0
        %1072 = vperm.xlu0 %1071, %v1069
        %v1073 = vpop.permute.xlu0 %1072
        %v1075 = vmul.f32 %v480, %v1073
        %v1076 = vmul.f32 %v482, %v1073
        %v1077 = vmul.f32 %v484, %v1073
        %v1078 = vmul.f32 %v486, %v1073
        %v1079 = vmul.f32 %v488, %v1073
        %v1080 = vmul.f32 %v490, %v1073
        %v1081 = vmul.f32 %v492, %v1073
        %v1082 = vmul.f32 %v494, %v1073
        %v1083 = vadd.f32 %v1060, %v1075
        %v1084 = vadd.f32 %v1061, %v1076
        %v1085 = vadd.f32 %v1062, %v1077
        %v1086 = vadd.f32 %v1063, %v1078
        %v1087 = vadd.f32 %v1064, %v1079
        %v1088 = vadd.f32 %v1065, %v1080
        %v1089 = vadd.f32 %v1066, %v1081
        %v1090 = vadd.f32 %v1067, %v1082
        %s1091 = scalar_lea.vmem %s1, 100
        %v1092 = vld [vmem:[%s1091] sm:$0xf]
        %1094 = vset.pattern.permute.xlu0 0
        %1095 = vperm.xlu0 %1094, %v1092
        %v1096 = vpop.permute.xlu0 %1095
        %v1098 = vmul.f32 %v482, %v1096
        %v1099 = vmul.f32 %v484, %v1096
        %v1100 = vmul.f32 %v486, %v1096
        %v1101 = vmul.f32 %v488, %v1096
        %v1102 = vmul.f32 %v490, %v1096
        %v1103 = vmul.f32 %v492, %v1096
        %v1104 = vmul.f32 %v494, %v1096
        %v1105 = vmul.f32 %v496, %v1096
        %v1106 = vadd.f32 %v1083, %v1098
        %v1107 = vadd.f32 %v1084, %v1099
        %v1108 = vadd.f32 %v1085, %v1100
        %v1109 = vadd.f32 %v1086, %v1101
        %v1110 = vadd.f32 %v1087, %v1102
        %v1111 = vadd.f32 %v1088, %v1103
        %v1112 = vadd.f32 %v1089, %v1104
        %v1113 = vadd.f32 %v1090, %v1105
        %s1114 = scalar_lea.vmem %s1, 104
        %v1115 = vld [vmem:[%s1114] sm:$0xf]
        %1117 = vset.pattern.permute.xlu0 0
        %1118 = vperm.xlu0 %1117, %v1115
        %v1119 = vpop.permute.xlu0 %1118
        %v1121 = vmul.f32 %v484, %v1119
        %v1122 = vmul.f32 %v486, %v1119
        %v1123 = vmul.f32 %v488, %v1119
        %v1124 = vmul.f32 %v490, %v1119
        %v1125 = vmul.f32 %v492, %v1119
        %v1126 = vmul.f32 %v494, %v1119
        %v1127 = vmul.f32 %v496, %v1119
        %v1128 = vmul.f32 %v498, %v1119
        %v1129 = vadd.f32 %v1106, %v1121
        %v1130 = vadd.f32 %v1107, %v1122
        %v1131 = vadd.f32 %v1108, %v1123
        %v1132 = vadd.f32 %v1109, %v1124
        %v1133 = vadd.f32 %v1110, %v1125
        %v1134 = vadd.f32 %v1111, %v1126
        %v1135 = vadd.f32 %v1112, %v1127
        %v1136 = vadd.f32 %v1113, %v1128
        %v1137 = vld [vmem:[%s2] sm:$0xff]
        %s1138 = scalar_lea.vmem %s1, 108
        %v1139 = vld [vmem:[%s1138] sm:$0xf]
        %1141 = vset.pattern.permute.xlu0 0
        %1142 = vperm.xlu0 %1141, %v1139
        %v1143 = vpop.permute.xlu0 %1142
        %v1145 = vmul.f32 %v154, %v1143
        %v1146 = vmul.f32 %v155, %v1143
        %v1147 = vmul.f32 %v156, %v1143
        %v1148 = vmul.f32 %v157, %v1143
        %v1149 = vmul.f32 %v158, %v1143
        %v1150 = vmul.f32 %v159, %v1143
        %v1151 = vmul.f32 %v160, %v1143
        %v1152 = vmul.f32 %v161, %v1143
        %v1153 = vadd.f32 %v1145, 0.0
        %v1154 = vadd.f32 %v1146, 0.0
        %v1155 = vadd.f32 %v1147, 0.0
        %v1156 = vadd.f32 %v1148, 0.0
        %v1157 = vadd.f32 %v1149, 0.0
        %v1158 = vadd.f32 %v1150, 0.0
        %v1159 = vadd.f32 %v1151, 0.0
        %v1160 = vadd.f32 %v1152, 0.0
        %s1161 = scalar_lea.vmem %s1, 112
        %v1162 = vld [vmem:[%s1161] sm:$0xf]
        %1164 = vset.pattern.permute.xlu0 0
        %1165 = vperm.xlu0 %1164, %v1162
        %v1166 = vpop.permute.xlu0 %1165
        %v1168 = vmul.f32 %v156, %v1166
        %v1169 = vmul.f32 %v157, %v1166
        %v1170 = vmul.f32 %v158, %v1166
        %v1171 = vmul.f32 %v159, %v1166
        %v1172 = vmul.f32 %v160, %v1166
        %v1173 = vmul.f32 %v161, %v1166
        %v1174 = vmul.f32 %v162, %v1166
        %v1175 = vmul.f32 %v163, %v1166
        %v1176 = vadd.f32 %v1153, %v1168
        %v1177 = vadd.f32 %v1154, %v1169
        %v1178 = vadd.f32 %v1155, %v1170
        %v1179 = vadd.f32 %v1156, %v1171
        %v1180 = vadd.f32 %v1157, %v1172
        %v1181 = vadd.f32 %v1158, %v1173
        %v1182 = vadd.f32 %v1159, %v1174
        %v1183 = vadd.f32 %v1160, %v1175
        %s1184 = scalar_lea.vmem %s1, 116
        %v1185 = vld [vmem:[%s1184] sm:$0xf]
        %1187 = vset.pattern.permute.xlu0 0
        %1188 = vperm.xlu0 %1187, %v1185
        %v1189 = vpop.permute.xlu0 %1188
        %v1191 = vmul.f32 %v158, %v1189
        %v1192 = vmul.f32 %v159, %v1189
        %v1193 = vmul.f32 %v160, %v1189
        %v1194 = vmul.f32 %v161, %v1189
        %v1195 = vmul.f32 %v162, %v1189
        %v1196 = vmul.f32 %v163, %v1189
        %v1197 = vmul.f32 %v164, %v1189
        %v1198 = vmul.f32 %v165, %v1189
        %v1199 = vadd.f32 %v1176, %v1191
        %v1200 = vadd.f32 %v1177, %v1192
        %v1201 = vadd.f32 %v1178, %v1193
        %v1202 = vadd.f32 %v1179, %v1194
        %v1203 = vadd.f32 %v1180, %v1195
        %v1204 = vadd.f32 %v1181, %v1196
        %v1205 = vadd.f32 %v1182, %v1197
        %v1206 = vadd.f32 %v1183, %v1198
        %s1207 = scalar_lea.vmem %s1, 120
        %v1208 = vld [vmem:[%s1207] sm:$0xf]
        %1210 = vset.pattern.permute.xlu0 0
        %1211 = vperm.xlu0 %1210, %v1208
        %v1212 = vpop.permute.xlu0 %1211
        %v1214 = vmul.f32 %v184, %v1212
        %v1215 = vmul.f32 %v186, %v1212
        %v1216 = vmul.f32 %v188, %v1212
        %v1217 = vmul.f32 %v190, %v1212
        %v1218 = vmul.f32 %v192, %v1212
        %v1219 = vmul.f32 %v194, %v1212
        %v1220 = vmul.f32 %v196, %v1212
        %v1221 = vmul.f32 %v198, %v1212
        %v1222 = vadd.f32 %v1199, %v1214
        %v1223 = vadd.f32 %v1200, %v1215
        %v1224 = vadd.f32 %v1201, %v1216
        %v1225 = vadd.f32 %v1202, %v1217
        %v1226 = vadd.f32 %v1203, %v1218
        %v1227 = vadd.f32 %v1204, %v1219
        %v1228 = vadd.f32 %v1205, %v1220
        %v1229 = vadd.f32 %v1206, %v1221
        %s1230 = scalar_lea.vmem %s1, 124
        %v1231 = vld [vmem:[%s1230] sm:$0xf]
        %1233 = vset.pattern.permute.xlu0 0
        %1234 = vperm.xlu0 %1233, %v1231
        %v1235 = vpop.permute.xlu0 %1234
        %v1237 = vmul.f32 %v188, %v1235
        %v1238 = vmul.f32 %v190, %v1235
        %v1239 = vmul.f32 %v192, %v1235
        %v1240 = vmul.f32 %v194, %v1235
        %v1241 = vmul.f32 %v196, %v1235
        %v1242 = vmul.f32 %v198, %v1235
        %v1243 = vmul.f32 %v200, %v1235
        %v1244 = vmul.f32 %v202, %v1235
        %v1245 = vadd.f32 %v1222, %v1237
        %v1246 = vadd.f32 %v1223, %v1238
        %v1247 = vadd.f32 %v1224, %v1239
        %v1248 = vadd.f32 %v1225, %v1240
        %v1249 = vadd.f32 %v1226, %v1241
        %v1250 = vadd.f32 %v1227, %v1242
        %v1251 = vadd.f32 %v1228, %v1243
        %v1252 = vadd.f32 %v1229, %v1244
        %s1253 = scalar_lea.vmem %s1, 128
        %v1254 = vld [vmem:[%s1253] sm:$0xf]
        %1256 = vset.pattern.permute.xlu0 0
        %1257 = vperm.xlu0 %1256, %v1254
        %v1258 = vpop.permute.xlu0 %1257
        %v1260 = vmul.f32 %v192, %v1258
        %v1261 = vmul.f32 %v194, %v1258
        %v1262 = vmul.f32 %v196, %v1258
        %v1263 = vmul.f32 %v198, %v1258
        %v1264 = vmul.f32 %v200, %v1258
        %v1265 = vmul.f32 %v202, %v1258
        %v1266 = vmul.f32 %v204, %v1258
        %v1267 = vmul.f32 %v206, %v1258
        %v1268 = vadd.f32 %v1245, %v1260
        %v1269 = vadd.f32 %v1246, %v1261
        %v1270 = vadd.f32 %v1247, %v1262
        %v1271 = vadd.f32 %v1248, %v1263
        %v1272 = vadd.f32 %v1249, %v1264
        %v1273 = vadd.f32 %v1250, %v1265
        %v1274 = vadd.f32 %v1251, %v1266
        %v1275 = vadd.f32 %v1252, %v1267
        %s1276 = scalar_lea.vmem %s1, 132
        %v1277 = vld [vmem:[%s1276] sm:$0xf]
        %1279 = vset.pattern.permute.xlu0 0
        %1280 = vperm.xlu0 %1279, %v1277
        %v1281 = vpop.permute.xlu0 %1280
        %v1283 = vmul.f32 %v226, %v1281
        %v1284 = vmul.f32 %v228, %v1281
        %v1285 = vmul.f32 %v230, %v1281
        %v1286 = vmul.f32 %v232, %v1281
        %v1287 = vmul.f32 %v234, %v1281
        %v1288 = vmul.f32 %v236, %v1281
        %v1289 = vmul.f32 %v238, %v1281
        %v1290 = vmul.f32 %v240, %v1281
        %v1291 = vadd.f32 %v1268, %v1283
        %v1292 = vadd.f32 %v1269, %v1284
        %v1293 = vadd.f32 %v1270, %v1285
        %v1294 = vadd.f32 %v1271, %v1286
        %v1295 = vadd.f32 %v1272, %v1287
        %v1296 = vadd.f32 %v1273, %v1288
        %v1297 = vadd.f32 %v1274, %v1289
        %v1298 = vadd.f32 %v1275, %v1290
        %s1299 = scalar_lea.vmem %s1, 136
        %v1300 = vld [vmem:[%s1299] sm:$0xf]
        %1302 = vset.pattern.permute.xlu0 0
        %1303 = vperm.xlu0 %1302, %v1300
        %v1304 = vpop.permute.xlu0 %1303
        %v1306 = vmul.f32 %v230, %v1304
        %v1307 = vmul.f32 %v232, %v1304
        %v1308 = vmul.f32 %v234, %v1304
        %v1309 = vmul.f32 %v236, %v1304
        %v1310 = vmul.f32 %v238, %v1304
        %v1311 = vmul.f32 %v240, %v1304
        %v1312 = vmul.f32 %v242, %v1304
        %v1313 = vmul.f32 %v244, %v1304
        %v1314 = vadd.f32 %v1291, %v1306
        %v1315 = vadd.f32 %v1292, %v1307
        %v1316 = vadd.f32 %v1293, %v1308
        %v1317 = vadd.f32 %v1294, %v1309
        %v1318 = vadd.f32 %v1295, %v1310
        %v1319 = vadd.f32 %v1296, %v1311
        %v1320 = vadd.f32 %v1297, %v1312
        %v1321 = vadd.f32 %v1298, %v1313
        %s1322 = scalar_lea.vmem %s1, 140
        %v1323 = vld [vmem:[%s1322] sm:$0xf]
        %1325 = vset.pattern.permute.xlu0 0
        %1326 = vperm.xlu0 %1325, %v1323
        %v1327 = vpop.permute.xlu0 %1326
        %v1329 = vmul.f32 %v234, %v1327
        %v1330 = vmul.f32 %v236, %v1327
        %v1331 = vmul.f32 %v238, %v1327
        %v1332 = vmul.f32 %v240, %v1327
        %v1333 = vmul.f32 %v242, %v1327
        %v1334 = vmul.f32 %v244, %v1327
        %v1335 = vmul.f32 %v246, %v1327
        %v1336 = vmul.f32 %v248, %v1327
        %v1337 = vadd.f32 %v1314, %v1329
        %v1338 = vadd.f32 %v1315, %v1330
        %v1339 = vadd.f32 %v1316, %v1331
        %v1340 = vadd.f32 %v1317, %v1332
        %v1341 = vadd.f32 %v1318, %v1333
        %v1342 = vadd.f32 %v1319, %v1334
        %v1343 = vadd.f32 %v1320, %v1335
        %v1344 = vadd.f32 %v1321, %v1336
        %s1345 = scalar_lea.vmem %s1, 144
        %v1346 = vld [vmem:[%s1345] sm:$0xf]
        %1348 = vset.pattern.permute.xlu0 0
        %1349 = vperm.xlu0 %1348, %v1346
        %v1350 = vpop.permute.xlu0 %1349
        %v1352 = vmul.f32 %v268, %v1350
        %v1353 = vmul.f32 %v270, %v1350
        %v1354 = vmul.f32 %v272, %v1350
        %v1355 = vmul.f32 %v274, %v1350
        %v1356 = vmul.f32 %v276, %v1350
        %v1357 = vmul.f32 %v278, %v1350
        %v1358 = vmul.f32 %v280, %v1350
        %v1359 = vmul.f32 %v282, %v1350
        %v1360 = vadd.f32 %v1337, %v1352
        %v1361 = vadd.f32 %v1338, %v1353
        %v1362 = vadd.f32 %v1339, %v1354
        %v1363 = vadd.f32 %v1340, %v1355
        %v1364 = vadd.f32 %v1341, %v1356
        %v1365 = vadd.f32 %v1342, %v1357
        %v1366 = vadd.f32 %v1343, %v1358
        %v1367 = vadd.f32 %v1344, %v1359
        %s1368 = scalar_lea.vmem %s1, 148
        %v1369 = vld [vmem:[%s1368] sm:$0xf]
        %1371 = vset.pattern.permute.xlu0 0
        %1372 = vperm.xlu0 %1371, %v1369
        %v1373 = vpop.permute.xlu0 %1372
        %v1375 = vmul.f32 %v272, %v1373
        %v1376 = vmul.f32 %v274, %v1373
        %v1377 = vmul.f32 %v276, %v1373
        %v1378 = vmul.f32 %v278, %v1373
        %v1379 = vmul.f32 %v280, %v1373
        %v1380 = vmul.f32 %v282, %v1373
        %v1381 = vmul.f32 %v284, %v1373
        %v1382 = vmul.f32 %v286, %v1373
        %v1383 = vadd.f32 %v1360, %v1375
        %v1384 = vadd.f32 %v1361, %v1376
        %v1385 = vadd.f32 %v1362, %v1377
        %v1386 = vadd.f32 %v1363, %v1378
        %v1387 = vadd.f32 %v1364, %v1379
        %v1388 = vadd.f32 %v1365, %v1380
        %v1389 = vadd.f32 %v1366, %v1381
        %v1390 = vadd.f32 %v1367, %v1382
        %s1391 = scalar_lea.vmem %s1, 152
        %v1392 = vld [vmem:[%s1391] sm:$0xf]
        %1394 = vset.pattern.permute.xlu0 0
        %1395 = vperm.xlu0 %1394, %v1392
        %v1396 = vpop.permute.xlu0 %1395
        %v1398 = vmul.f32 %v276, %v1396
        %v1399 = vmul.f32 %v278, %v1396
        %v1400 = vmul.f32 %v280, %v1396
        %v1401 = vmul.f32 %v282, %v1396
        %v1402 = vmul.f32 %v284, %v1396
        %v1403 = vmul.f32 %v286, %v1396
        %v1404 = vmul.f32 %v288, %v1396
        %v1405 = vmul.f32 %v290, %v1396
        %v1406 = vadd.f32 %v1383, %v1398
        %v1407 = vadd.f32 %v1384, %v1399
        %v1408 = vadd.f32 %v1385, %v1400
        %v1409 = vadd.f32 %v1386, %v1401
        %v1410 = vadd.f32 %v1387, %v1402
        %v1411 = vadd.f32 %v1388, %v1403
        %v1412 = vadd.f32 %v1389, %v1404
        %v1413 = vadd.f32 %v1390, %v1405
        %s1414 = scalar_lea.vmem %s1, 156
        %v1415 = vld [vmem:[%s1414] sm:$0xf]
        %1417 = vset.pattern.permute.xlu0 0
        %1418 = vperm.xlu0 %1417, %v1415
        %v1419 = vpop.permute.xlu0 %1418
        %v1421 = vmul.f32 %v310, %v1419
        %v1422 = vmul.f32 %v312, %v1419
        %v1423 = vmul.f32 %v314, %v1419
        %v1424 = vmul.f32 %v316, %v1419
        %v1425 = vmul.f32 %v318, %v1419
        %v1426 = vmul.f32 %v320, %v1419
        %v1427 = vmul.f32 %v322, %v1419
        %v1428 = vmul.f32 %v324, %v1419
        %v1429 = vadd.f32 %v1406, %v1421
        %v1430 = vadd.f32 %v1407, %v1422
        %v1431 = vadd.f32 %v1408, %v1423
        %v1432 = vadd.f32 %v1409, %v1424
        %v1433 = vadd.f32 %v1410, %v1425
        %v1434 = vadd.f32 %v1411, %v1426
        %v1435 = vadd.f32 %v1412, %v1427
        %v1436 = vadd.f32 %v1413, %v1428
        %s1437 = scalar_lea.vmem %s1, 160
        %v1438 = vld [vmem:[%s1437] sm:$0xf]
        %1440 = vset.pattern.permute.xlu0 0
        %1441 = vperm.xlu0 %1440, %v1438
        %v1442 = vpop.permute.xlu0 %1441
        %v1444 = vmul.f32 %v314, %v1442
        %v1445 = vmul.f32 %v316, %v1442
        %v1446 = vmul.f32 %v318, %v1442
        %v1447 = vmul.f32 %v320, %v1442
        %v1448 = vmul.f32 %v322, %v1442
        %v1449 = vmul.f32 %v324, %v1442
        %v1450 = vmul.f32 %v326, %v1442
        %v1451 = vmul.f32 %v328, %v1442
        %v1452 = vadd.f32 %v1429, %v1444
        %v1453 = vadd.f32 %v1430, %v1445
        %v1454 = vadd.f32 %v1431, %v1446
        %v1455 = vadd.f32 %v1432, %v1447
        %v1456 = vadd.f32 %v1433, %v1448
        %v1457 = vadd.f32 %v1434, %v1449
        %v1458 = vadd.f32 %v1435, %v1450
        %v1459 = vadd.f32 %v1436, %v1451
        %s1460 = scalar_lea.vmem %s1, 164
        %v1461 = vld [vmem:[%s1460] sm:$0xf]
        %1463 = vset.pattern.permute.xlu0 0
        %1464 = vperm.xlu0 %1463, %v1461
        %v1465 = vpop.permute.xlu0 %1464
        %v1467 = vmul.f32 %v318, %v1465
        %v1468 = vmul.f32 %v320, %v1465
        %v1469 = vmul.f32 %v322, %v1465
        %v1470 = vmul.f32 %v324, %v1465
        %v1471 = vmul.f32 %v326, %v1465
        %v1472 = vmul.f32 %v328, %v1465
        %v1473 = vmul.f32 %v330, %v1465
        %v1474 = vmul.f32 %v332, %v1465
        %v1475 = vadd.f32 %v1452, %v1467
        %v1476 = vadd.f32 %v1453, %v1468
        %v1477 = vadd.f32 %v1454, %v1469
        %v1478 = vadd.f32 %v1455, %v1470
        %v1479 = vadd.f32 %v1456, %v1471
        %v1480 = vadd.f32 %v1457, %v1472
        %v1481 = vadd.f32 %v1458, %v1473
        %v1482 = vadd.f32 %v1459, %v1474
        %s1483 = scalar_lea.vmem %s1, 168
        %v1484 = vld [vmem:[%s1483] sm:$0xf]
        %1486 = vset.pattern.permute.xlu0 0
        %1487 = vperm.xlu0 %1486, %v1484
        %v1488 = vpop.permute.xlu0 %1487
        %v1490 = vmul.f32 %v352, %v1488
        %v1491 = vmul.f32 %v354, %v1488
        %v1492 = vmul.f32 %v356, %v1488
        %v1493 = vmul.f32 %v358, %v1488
        %v1494 = vmul.f32 %v360, %v1488
        %v1495 = vmul.f32 %v362, %v1488
        %v1496 = vmul.f32 %v364, %v1488
        %v1497 = vmul.f32 %v366, %v1488
        %v1498 = vadd.f32 %v1475, %v1490
        %v1499 = vadd.f32 %v1476, %v1491
        %v1500 = vadd.f32 %v1477, %v1492
        %v1501 = vadd.f32 %v1478, %v1493
        %v1502 = vadd.f32 %v1479, %v1494
        %v1503 = vadd.f32 %v1480, %v1495
        %v1504 = vadd.f32 %v1481, %v1496
        %v1505 = vadd.f32 %v1482, %v1497
        %s1506 = scalar_lea.vmem %s1, 172
        %v1507 = vld [vmem:[%s1506] sm:$0xf]
        %1509 = vset.pattern.permute.xlu0 0
        %1510 = vperm.xlu0 %1509, %v1507
        %v1511 = vpop.permute.xlu0 %1510
        %v1513 = vmul.f32 %v356, %v1511
        %v1514 = vmul.f32 %v358, %v1511
        %v1515 = vmul.f32 %v360, %v1511
        %v1516 = vmul.f32 %v362, %v1511
        %v1517 = vmul.f32 %v364, %v1511
        %v1518 = vmul.f32 %v366, %v1511
        %v1519 = vmul.f32 %v368, %v1511
        %v1520 = vmul.f32 %v370, %v1511
        %v1521 = vadd.f32 %v1498, %v1513
        %v1522 = vadd.f32 %v1499, %v1514
        %v1523 = vadd.f32 %v1500, %v1515
        %v1524 = vadd.f32 %v1501, %v1516
        %v1525 = vadd.f32 %v1502, %v1517
        %v1526 = vadd.f32 %v1503, %v1518
        %v1527 = vadd.f32 %v1504, %v1519
        %v1528 = vadd.f32 %v1505, %v1520
        %s1529 = scalar_lea.vmem %s1, 176
        %v1530 = vld [vmem:[%s1529] sm:$0xf]
        %1532 = vset.pattern.permute.xlu0 0
        %1533 = vperm.xlu0 %1532, %v1530
        %v1534 = vpop.permute.xlu0 %1533
        %v1536 = vmul.f32 %v360, %v1534
        %v1537 = vmul.f32 %v362, %v1534
        %v1538 = vmul.f32 %v364, %v1534
        %v1539 = vmul.f32 %v366, %v1534
        %v1540 = vmul.f32 %v368, %v1534
        %v1541 = vmul.f32 %v370, %v1534
        %v1542 = vmul.f32 %v372, %v1534
        %v1543 = vmul.f32 %v374, %v1534
        %v1544 = vadd.f32 %v1521, %v1536
        %v1545 = vadd.f32 %v1522, %v1537
        %v1546 = vadd.f32 %v1523, %v1538
        %v1547 = vadd.f32 %v1524, %v1539
        %v1548 = vadd.f32 %v1525, %v1540
        %v1549 = vadd.f32 %v1526, %v1541
        %v1550 = vadd.f32 %v1527, %v1542
        %v1551 = vadd.f32 %v1528, %v1543
        %s1552 = scalar_lea.vmem %s1, 180
        %v1553 = vld [vmem:[%s1552] sm:$0xf]
        %1555 = vset.pattern.permute.xlu0 0
        %1556 = vperm.xlu0 %1555, %v1553
        %v1557 = vpop.permute.xlu0 %1556
        %v1559 = vmul.f32 %v394, %v1557
        %v1560 = vmul.f32 %v396, %v1557
        %v1561 = vmul.f32 %v398, %v1557
        %v1562 = vmul.f32 %v400, %v1557
        %v1563 = vmul.f32 %v402, %v1557
        %v1564 = vmul.f32 %v404, %v1557
        %v1565 = vmul.f32 %v406, %v1557
        %v1566 = vmul.f32 %v408, %v1557
        %v1567 = vadd.f32 %v1544, %v1559
        %v1568 = vadd.f32 %v1545, %v1560
        %v1569 = vadd.f32 %v1546, %v1561
        %v1570 = vadd.f32 %v1547, %v1562
        %v1571 = vadd.f32 %v1548, %v1563
        %v1572 = vadd.f32 %v1549, %v1564
        %v1573 = vadd.f32 %v1550, %v1565
        %v1574 = vadd.f32 %v1551, %v1566
        %s1575 = scalar_lea.vmem %s1, 184
        %v1576 = vld [vmem:[%s1575] sm:$0xf]
        %1578 = vset.pattern.permute.xlu0 0
        %1579 = vperm.xlu0 %1578, %v1576
        %v1580 = vpop.permute.xlu0 %1579
        %v1582 = vmul.f32 %v398, %v1580
        %v1583 = vmul.f32 %v400, %v1580
        %v1584 = vmul.f32 %v402, %v1580
        %v1585 = vmul.f32 %v404, %v1580
        %v1586 = vmul.f32 %v406, %v1580
        %v1587 = vmul.f32 %v408, %v1580
        %v1588 = vmul.f32 %v410, %v1580
        %v1589 = vmul.f32 %v412, %v1580
        %v1590 = vadd.f32 %v1567, %v1582
        %v1591 = vadd.f32 %v1568, %v1583
        %v1592 = vadd.f32 %v1569, %v1584
        %v1593 = vadd.f32 %v1570, %v1585
        %v1594 = vadd.f32 %v1571, %v1586
        %v1595 = vadd.f32 %v1572, %v1587
        %v1596 = vadd.f32 %v1573, %v1588
        %v1597 = vadd.f32 %v1574, %v1589
        %s1598 = scalar_lea.vmem %s1, 188
        %v1599 = vld [vmem:[%s1598] sm:$0xf]
        %1601 = vset.pattern.permute.xlu0 0
        %1602 = vperm.xlu0 %1601, %v1599
        %v1603 = vpop.permute.xlu0 %1602
        %v1605 = vmul.f32 %v402, %v1603
        %v1606 = vmul.f32 %v404, %v1603
        %v1607 = vmul.f32 %v406, %v1603
        %v1608 = vmul.f32 %v408, %v1603
        %v1609 = vmul.f32 %v410, %v1603
        %v1610 = vmul.f32 %v412, %v1603
        %v1611 = vmul.f32 %v414, %v1603
        %v1612 = vmul.f32 %v416, %v1603
        %v1613 = vadd.f32 %v1590, %v1605
        %v1614 = vadd.f32 %v1591, %v1606
        %v1615 = vadd.f32 %v1592, %v1607
        %v1616 = vadd.f32 %v1593, %v1608
        %v1617 = vadd.f32 %v1594, %v1609
        %v1618 = vadd.f32 %v1595, %v1610
        %v1619 = vadd.f32 %v1596, %v1611
        %v1620 = vadd.f32 %v1597, %v1612
        %s1621 = scalar_lea.vmem %s1, 192
        %v1622 = vld [vmem:[%s1621] sm:$0xf]
        %1624 = vset.pattern.permute.xlu0 0
        %1625 = vperm.xlu0 %1624, %v1622
        %v1626 = vpop.permute.xlu0 %1625
        %v1628 = vmul.f32 %v436, %v1626
        %v1629 = vmul.f32 %v438, %v1626
        %v1630 = vmul.f32 %v440, %v1626
        %v1631 = vmul.f32 %v442, %v1626
        %v1632 = vmul.f32 %v444, %v1626
        %v1633 = vmul.f32 %v446, %v1626
        %v1634 = vmul.f32 %v448, %v1626
        %v1635 = vmul.f32 %v450, %v1626
        %v1636 = vadd.f32 %v1613, %v1628
        %v1637 = vadd.f32 %v1614, %v1629
        %v1638 = vadd.f32 %v1615, %v1630
        %v1639 = vadd.f32 %v1616, %v1631
        %v1640 = vadd.f32 %v1617, %v1632
        %v1641 = vadd.f32 %v1618, %v1633
        %v1642 = vadd.f32 %v1619, %v1634
        %v1643 = vadd.f32 %v1620, %v1635
        %s1644 = scalar_lea.vmem %s1, 196
        %v1645 = vld [vmem:[%s1644] sm:$0xf]
        %1647 = vset.pattern.permute.xlu0 0
        %1648 = vperm.xlu0 %1647, %v1645
        %v1649 = vpop.permute.xlu0 %1648
        %v1651 = vmul.f32 %v440, %v1649
        %v1652 = vmul.f32 %v442, %v1649
        %v1653 = vmul.f32 %v444, %v1649
        %v1654 = vmul.f32 %v446, %v1649
        %v1655 = vmul.f32 %v448, %v1649
        %v1656 = vmul.f32 %v450, %v1649
        %v1657 = vmul.f32 %v452, %v1649
        %v1658 = vmul.f32 %v454, %v1649
        %v1659 = vadd.f32 %v1636, %v1651
        %v1660 = vadd.f32 %v1637, %v1652
        %v1661 = vadd.f32 %v1638, %v1653
        %v1662 = vadd.f32 %v1639, %v1654
        %v1663 = vadd.f32 %v1640, %v1655
        %v1664 = vadd.f32 %v1641, %v1656
        %v1665 = vadd.f32 %v1642, %v1657
        %v1666 = vadd.f32 %v1643, %v1658
        %s1667 = scalar_lea.vmem %s1, 200
        %v1668 = vld [vmem:[%s1667] sm:$0xf]
        %1670 = vset.pattern.permute.xlu0 0
        %1671 = vperm.xlu0 %1670, %v1668
        %v1672 = vpop.permute.xlu0 %1671
        %v1674 = vmul.f32 %v444, %v1672
        %v1675 = vmul.f32 %v446, %v1672
        %v1676 = vmul.f32 %v448, %v1672
        %v1677 = vmul.f32 %v450, %v1672
        %v1678 = vmul.f32 %v452, %v1672
        %v1679 = vmul.f32 %v454, %v1672
        %v1680 = vmul.f32 %v456, %v1672
        %v1681 = vmul.f32 %v458, %v1672
        %v1682 = vadd.f32 %v1659, %v1674
        %v1683 = vadd.f32 %v1660, %v1675
        %v1684 = vadd.f32 %v1661, %v1676
        %v1685 = vadd.f32 %v1662, %v1677
        %v1686 = vadd.f32 %v1663, %v1678
        %v1687 = vadd.f32 %v1664, %v1679
        %v1688 = vadd.f32 %v1665, %v1680
        %v1689 = vadd.f32 %v1666, %v1681
        %s1690 = scalar_lea.vmem %s1, 204
        %v1691 = vld [vmem:[%s1690] sm:$0xf]
        %1693 = vset.pattern.permute.xlu0 0
        %1694 = vperm.xlu0 %1693, %v1691
        %v1695 = vpop.permute.xlu0 %1694
        %v1697 = vmul.f32 %v478, %v1695
        %v1698 = vmul.f32 %v480, %v1695
        %v1699 = vmul.f32 %v482, %v1695
        %v1700 = vmul.f32 %v484, %v1695
        %v1701 = vmul.f32 %v486, %v1695
        %v1702 = vmul.f32 %v488, %v1695
        %v1703 = vmul.f32 %v490, %v1695
        %v1704 = vmul.f32 %v492, %v1695
        %v1705 = vadd.f32 %v1682, %v1697
        %v1706 = vadd.f32 %v1683, %v1698
        %v1707 = vadd.f32 %v1684, %v1699
        %v1708 = vadd.f32 %v1685, %v1700
        %v1709 = vadd.f32 %v1686, %v1701
        %v1710 = vadd.f32 %v1687, %v1702
        %v1711 = vadd.f32 %v1688, %v1703
        %v1712 = vadd.f32 %v1689, %v1704
        %s1713 = scalar_lea.vmem %s1, 208
        %v1714 = vld [vmem:[%s1713] sm:$0xf]
        %1716 = vset.pattern.permute.xlu0 0
        %1717 = vperm.xlu0 %1716, %v1714
        %v1718 = vpop.permute.xlu0 %1717
        %v1720 = vmul.f32 %v482, %v1718
        %v1721 = vmul.f32 %v484, %v1718
        %v1722 = vmul.f32 %v486, %v1718
        %v1723 = vmul.f32 %v488, %v1718
        %v1724 = vmul.f32 %v490, %v1718
        %v1725 = vmul.f32 %v492, %v1718
        %v1726 = vmul.f32 %v494, %v1718
        %v1727 = vmul.f32 %v496, %v1718
        %v1728 = vadd.f32 %v1705, %v1720
        %v1729 = vadd.f32 %v1706, %v1721
        %v1730 = vadd.f32 %v1707, %v1722
        %v1731 = vadd.f32 %v1708, %v1723
        %v1732 = vadd.f32 %v1709, %v1724
        %v1733 = vadd.f32 %v1710, %v1725
        %v1734 = vadd.f32 %v1711, %v1726
        %v1735 = vadd.f32 %v1712, %v1727
        %s1736 = scalar_lea.vmem %s1, 212
        %v1737 = vld [vmem:[%s1736] sm:$0xf]
        %1739 = vset.pattern.permute.xlu0 0
        %1740 = vperm.xlu0 %1739, %v1737
        %v1741 = vpop.permute.xlu0 %1740
        %v1743 = vmul.f32 %v486, %v1741
        %v1744 = vmul.f32 %v488, %v1741
        %v1745 = vmul.f32 %v490, %v1741
        %v1746 = vmul.f32 %v492, %v1741
        %v1747 = vmul.f32 %v494, %v1741
        %v1748 = vmul.f32 %v496, %v1741
        %v1749 = vmul.f32 %v498, %v1741
        %v1750 = vmul.f32 %v500, %v1741
        %v1751 = vadd.f32 %v1728, %v1743
        %v1752 = vadd.f32 %v1729, %v1744
        %v1753 = vadd.f32 %v1730, %v1745
        %v1754 = vadd.f32 %v1731, %v1746
        %v1755 = vadd.f32 %v1732, %v1747
        %v1756 = vadd.f32 %v1733, %v1748
        %v1757 = vadd.f32 %v1734, %v1749
        %v1758 = vadd.f32 %v1735, %v1750
        %s1759 = scalar_lea.vmem %s2, 8
        %v1760 = vld [vmem:[%s1759] sm:$0xff]
        %vm1761 = vcmask 31744
        %v1763 = vsel %vm1761, %v1760, 0
        %vm1765 = vcmask 1043456
        %v1767 = vsel %vm1765, %v1751, 0
        %1769 = vmatpush.msra.mxu0 0.0
        %1770 = vmatpush.msra.mxu0 0.0
        %1771 = vmatpush.msra.mxu0 0.0
        %1772 = vmatpush.msra.mxu0 0.0
        %1773 = vmatpush.msra.mxu0 0.0
        %1774 = vmatpush.msra.mxu0 0.0
        %1775 = vmatpush.msra.mxu0 0.0
        %1776 = vmatpush.msra.mxu0 0.0
        %1777 = vmatpush.msra.mxu0 0.0
        %1778 = vmatpush.msra.mxu0 0.0
        %1779 = vmatpush.msra.mxu0 0.0
        %1780 = vmatpush.msra.mxu0 0.0
        %1781 = vmatpush.msra.mxu0 0.0
        %1782 = vmatpush.msra.mxu0 0.0
        %1783 = vmatpush.msra.mxu0 0.0
        %1784 = vmatpush.msra.mxu0 %v1767
        %1785 = vmatmul.f32.gmra.mxu0 %v1763
        %v1786 = vpop.f32.mrf.mxu0
        %v1787 = vadd.f32 0.0, %v1786
        %1788 = vdwg.mxu0
        %v1790 = vsel %vm1765, %v1752, 0
        %1792 = vmatpush.msra.mxu0 0.0
        %1793 = vmatpush.msra.mxu0 0.0
        %1794 = vmatpush.msra.mxu0 0.0
        %1795 = vmatpush.msra.mxu0 0.0
        %1796 = vmatpush.msra.mxu0 0.0
        %1797 = vmatpush.msra.mxu0 0.0
        %1798 = vmatpush.msra.mxu0 0.0
        %1799 = vmatpush.msra.mxu0 0.0
        %1800 = vmatpush.msra.mxu0 0.0
        %1801 = vmatpush.msra.mxu0 0.0
        %1802 = vmatpush.msra.mxu0 0.0
        %1803 = vmatpush.msra.mxu0 0.0
        %1804 = vmatpush.msra.mxu0 0.0
        %1805 = vmatpush.msra.mxu0 0.0
        %1806 = vmatpush.msra.mxu0 0.0
        %1807 = vmatpush.msra.mxu0 %v1790
        %1808 = vmatmul.f32.gmra.mxu0 %v1763
        %v1809 = vpop.f32.mrf.mxu0
        %v1810 = vadd.f32 0.0, %v1809
        %1811 = vdwg.mxu0
        %v1813 = vsel %vm1765, %v1753, 0
        %1815 = vmatpush.msra.mxu0 0.0
        %1816 = vmatpush.msra.mxu0 0.0
        %1817 = vmatpush.msra.mxu0 0.0
        %1818 = vmatpush.msra.mxu0 0.0
        %1819 = vmatpush.msra.mxu0 0.0
        %1820 = vmatpush.msra.mxu0 0.0
        %1821 = vmatpush.msra.mxu0 0.0
        %1822 = vmatpush.msra.mxu0 0.0
        %1823 = vmatpush.msra.mxu0 0.0
        %1824 = vmatpush.msra.mxu0 0.0
        %1825 = vmatpush.msra.mxu0 0.0
        %1826 = vmatpush.msra.mxu0 0.0
        %1827 = vmatpush.msra.mxu0 0.0
        %1828 = vmatpush.msra.mxu0 0.0
        %1829 = vmatpush.msra.mxu0 0.0
        %1830 = vmatpush.msra.mxu0 %v1813
        %1831 = vmatmul.f32.gmra.mxu0 %v1763
        %v1832 = vpop.f32.mrf.mxu0
        %v1833 = vadd.f32 0.0, %v1832
        %1834 = vdwg.mxu0
        %v1836 = vsel %vm1765, %v1754, 0
        %1838 = vmatpush.msra.mxu0 0.0
        %1839 = vmatpush.msra.mxu0 0.0
        %1840 = vmatpush.msra.mxu0 0.0
        %1841 = vmatpush.msra.mxu0 0.0
        %1842 = vmatpush.msra.mxu0 0.0
        %1843 = vmatpush.msra.mxu0 0.0
        %1844 = vmatpush.msra.mxu0 0.0
        %1845 = vmatpush.msra.mxu0 0.0
        %1846 = vmatpush.msra.mxu0 0.0
        %1847 = vmatpush.msra.mxu0 0.0
        %1848 = vmatpush.msra.mxu0 0.0
        %1849 = vmatpush.msra.mxu0 0.0
        %1850 = vmatpush.msra.mxu0 0.0
        %1851 = vmatpush.msra.mxu0 0.0
        %1852 = vmatpush.msra.mxu0 0.0
        %1853 = vmatpush.msra.mxu0 %v1836
        %1854 = vmatmul.f32.gmra.mxu0 %v1763
        %v1855 = vpop.f32.mrf.mxu0
        %v1856 = vadd.f32 0.0, %v1855
        %1857 = vdwg.mxu0
        %v1859 = vsel %vm1765, %v1755, 0
        %1861 = vmatpush.msra.mxu0 0.0
        %1862 = vmatpush.msra.mxu0 0.0
        %1863 = vmatpush.msra.mxu0 0.0
        %1864 = vmatpush.msra.mxu0 0.0
        %1865 = vmatpush.msra.mxu0 0.0
        %1866 = vmatpush.msra.mxu0 0.0
        %1867 = vmatpush.msra.mxu0 0.0
        %1868 = vmatpush.msra.mxu0 0.0
        %1869 = vmatpush.msra.mxu0 0.0
        %1870 = vmatpush.msra.mxu0 0.0
        %1871 = vmatpush.msra.mxu0 0.0
        %1872 = vmatpush.msra.mxu0 0.0
        %1873 = vmatpush.msra.mxu0 0.0
        %1874 = vmatpush.msra.mxu0 0.0
        %1875 = vmatpush.msra.mxu0 0.0
        %1876 = vmatpush.msra.mxu0 %v1859
        %1877 = vmatmul.f32.gmra.mxu0 %v1763
        %v1878 = vpop.f32.mrf.mxu0
        %v1879 = vadd.f32 0.0, %v1878
        %1880 = vdwg.mxu0
        %v1882 = vsel %vm1765, %v1756, 0
        %1884 = vmatpush.msra.mxu0 0.0
        %1885 = vmatpush.msra.mxu0 0.0
        %1886 = vmatpush.msra.mxu0 0.0
        %1887 = vmatpush.msra.mxu0 0.0
        %1888 = vmatpush.msra.mxu0 0.0
        %1889 = vmatpush.msra.mxu0 0.0
        %1890 = vmatpush.msra.mxu0 0.0
        %1891 = vmatpush.msra.mxu0 0.0
        %1892 = vmatpush.msra.mxu0 0.0
        %1893 = vmatpush.msra.mxu0 0.0
        %1894 = vmatpush.msra.mxu0 0.0
        %1895 = vmatpush.msra.mxu0 0.0
        %1896 = vmatpush.msra.mxu0 0.0
        %1897 = vmatpush.msra.mxu0 0.0
        %1898 = vmatpush.msra.mxu0 0.0
        %1899 = vmatpush.msra.mxu0 %v1882
        %1900 = vmatmul.f32.gmra.mxu0 %v1763
        %v1901 = vpop.f32.mrf.mxu0
        %v1902 = vadd.f32 0.0, %v1901
        %1903 = vdwg.mxu0
        %v1905 = vsel %vm1765, %v1757, 0
        %1907 = vmatpush.msra.mxu0 0.0
        %1908 = vmatpush.msra.mxu0 0.0
        %1909 = vmatpush.msra.mxu0 0.0
        %1910 = vmatpush.msra.mxu0 0.0
        %1911 = vmatpush.msra.mxu0 0.0
        %1912 = vmatpush.msra.mxu0 0.0
        %1913 = vmatpush.msra.mxu0 0.0
        %1914 = vmatpush.msra.mxu0 0.0
        %1915 = vmatpush.msra.mxu0 0.0
        %1916 = vmatpush.msra.mxu0 0.0
        %1917 = vmatpush.msra.mxu0 0.0
        %1918 = vmatpush.msra.mxu0 0.0
        %1919 = vmatpush.msra.mxu0 0.0
        %1920 = vmatpush.msra.mxu0 0.0
        %1921 = vmatpush.msra.mxu0 0.0
        %1922 = vmatpush.msra.mxu0 %v1905
        %1923 = vmatmul.f32.gmra.mxu0 %v1763
        %v1924 = vpop.f32.mrf.mxu0
        %v1925 = vadd.f32 0.0, %v1924
        %1926 = vdwg.mxu0
        %v1928 = vsel %vm1765, %v1758, 0
        %1930 = vmatpush.msra.mxu0 0.0
        %1931 = vmatpush.msra.mxu0 0.0
        %1932 = vmatpush.msra.mxu0 0.0
        %1933 = vmatpush.msra.mxu0 0.0
        %1934 = vmatpush.msra.mxu0 0.0
        %1935 = vmatpush.msra.mxu0 0.0
        %1936 = vmatpush.msra.mxu0 0.0
        %1937 = vmatpush.msra.mxu0 0.0
        %1938 = vmatpush.msra.mxu0 0.0
        %1939 = vmatpush.msra.mxu0 0.0
        %1940 = vmatpush.msra.mxu0 0.0
        %1941 = vmatpush.msra.mxu0 0.0
        %1942 = vmatpush.msra.mxu0 0.0
        %1943 = vmatpush.msra.mxu0 0.0
        %1944 = vmatpush.msra.mxu0 0.0
        %1945 = vmatpush.msra.mxu0 %v1928
        %1946 = vmatmul.f32.gmra.mxu0 %v1763
        %v1947 = vpop.f32.mrf.mxu0
        %v1948 = vadd.f32 0.0, %v1947
        %1949 = vdwg.mxu0
        %v1951 = vsel %vm1761, %v1137, 0
        %v1954 = vsel %vm1765, %v1129, 0
        %1956 = vmatpush.msra.mxu0 0.0
        %1957 = vmatpush.msra.mxu0 0.0
        %1958 = vmatpush.msra.mxu0 0.0
        %1959 = vmatpush.msra.mxu0 0.0
        %1960 = vmatpush.msra.mxu0 0.0
        %1961 = vmatpush.msra.mxu0 0.0
        %1962 = vmatpush.msra.mxu0 0.0
        %1963 = vmatpush.msra.mxu0 0.0
        %1964 = vmatpush.msra.mxu0 0.0
        %1965 = vmatpush.msra.mxu0 0.0
        %1966 = vmatpush.msra.mxu0 0.0
        %1967 = vmatpush.msra.mxu0 0.0
        %1968 = vmatpush.msra.mxu0 0.0
        %1969 = vmatpush.msra.mxu0 0.0
        %1970 = vmatpush.msra.mxu0 0.0
        %1971 = vmatpush.msra.mxu0 %v1954
        %1972 = vmatmul.f32.gmra.mxu0 %v1951
        %v1973 = vpop.f32.mrf.mxu0
        %v1974 = vadd.f32 %v1787, %v1973
        %1975 = vdwg.mxu0
        %v1977 = vsel %vm1765, %v1130, 0
        %1979 = vmatpush.msra.mxu0 0.0
        %1980 = vmatpush.msra.mxu0 0.0
        %1981 = vmatpush.msra.mxu0 0.0
        %1982 = vmatpush.msra.mxu0 0.0
        %1983 = vmatpush.msra.mxu0 0.0
        %1984 = vmatpush.msra.mxu0 0.0
        %1985 = vmatpush.msra.mxu0 0.0
        %1986 = vmatpush.msra.mxu0 0.0
        %1987 = vmatpush.msra.mxu0 0.0
        %1988 = vmatpush.msra.mxu0 0.0
        %1989 = vmatpush.msra.mxu0 0.0
        %1990 = vmatpush.msra.mxu0 0.0
        %1991 = vmatpush.msra.mxu0 0.0
        %1992 = vmatpush.msra.mxu0 0.0
        %1993 = vmatpush.msra.mxu0 0.0
        %1994 = vmatpush.msra.mxu0 %v1977
        %1995 = vmatmul.f32.gmra.mxu0 %v1951
        %v1996 = vpop.f32.mrf.mxu0
        %v1997 = vadd.f32 %v1810, %v1996
        %1998 = vdwg.mxu0
        %v2000 = vsel %vm1765, %v1131, 0
        %2002 = vmatpush.msra.mxu0 0.0
        %2003 = vmatpush.msra.mxu0 0.0
        %2004 = vmatpush.msra.mxu0 0.0
        %2005 = vmatpush.msra.mxu0 0.0
        %2006 = vmatpush.msra.mxu0 0.0
        %2007 = vmatpush.msra.mxu0 0.0
        %2008 = vmatpush.msra.mxu0 0.0
        %2009 = vmatpush.msra.mxu0 0.0
        %2010 = vmatpush.msra.mxu0 0.0
        %2011 = vmatpush.msra.mxu0 0.0
        %2012 = vmatpush.msra.mxu0 0.0
        %2013 = vmatpush.msra.mxu0 0.0
        %2014 = vmatpush.msra.mxu0 0.0
        %2015 = vmatpush.msra.mxu0 0.0
        %2016 = vmatpush.msra.mxu0 0.0
        %2017 = vmatpush.msra.mxu0 %v2000
        %2018 = vmatmul.f32.gmra.mxu0 %v1951
        %v2019 = vpop.f32.mrf.mxu0
        %v2020 = vadd.f32 %v1833, %v2019
        %2021 = vdwg.mxu0
        %v2023 = vsel %vm1765, %v1132, 0
        %2025 = vmatpush.msra.mxu0 0.0
        %2026 = vmatpush.msra.mxu0 0.0
        %2027 = vmatpush.msra.mxu0 0.0
        %2028 = vmatpush.msra.mxu0 0.0
        %2029 = vmatpush.msra.mxu0 0.0
        %2030 = vmatpush.msra.mxu0 0.0
        %2031 = vmatpush.msra.mxu0 0.0
        %2032 = vmatpush.msra.mxu0 0.0
        %2033 = vmatpush.msra.mxu0 0.0
        %2034 = vmatpush.msra.mxu0 0.0
        %2035 = vmatpush.msra.mxu0 0.0
        %2036 = vmatpush.msra.mxu0 0.0
        %2037 = vmatpush.msra.mxu0 0.0
        %2038 = vmatpush.msra.mxu0 0.0
        %2039 = vmatpush.msra.mxu0 0.0
        %2040 = vmatpush.msra.mxu0 %v2023
        %2041 = vmatmul.f32.gmra.mxu0 %v1951
        %v2042 = vpop.f32.mrf.mxu0
        %v2043 = vadd.f32 %v1856, %v2042
        %2044 = vdwg.mxu0
        %v2046 = vsel %vm1765, %v1133, 0
        %2048 = vmatpush.msra.mxu0 0.0
        %2049 = vmatpush.msra.mxu0 0.0
        %2050 = vmatpush.msra.mxu0 0.0
        %2051 = vmatpush.msra.mxu0 0.0
        %2052 = vmatpush.msra.mxu0 0.0
        %2053 = vmatpush.msra.mxu0 0.0
        %2054 = vmatpush.msra.mxu0 0.0
        %2055 = vmatpush.msra.mxu0 0.0
        %2056 = vmatpush.msra.mxu0 0.0
        %2057 = vmatpush.msra.mxu0 0.0
        %2058 = vmatpush.msra.mxu0 0.0
        %2059 = vmatpush.msra.mxu0 0.0
        %2060 = vmatpush.msra.mxu0 0.0
        %2061 = vmatpush.msra.mxu0 0.0
        %2062 = vmatpush.msra.mxu0 0.0
        %2063 = vmatpush.msra.mxu0 %v2046
        %2064 = vmatmul.f32.gmra.mxu0 %v1951
        %v2065 = vpop.f32.mrf.mxu0
        %v2066 = vadd.f32 %v1879, %v2065
        %2067 = vdwg.mxu0
        %v2069 = vsel %vm1765, %v1134, 0
        %2071 = vmatpush.msra.mxu0 0.0
        %2072 = vmatpush.msra.mxu0 0.0
        %2073 = vmatpush.msra.mxu0 0.0
        %2074 = vmatpush.msra.mxu0 0.0
        %2075 = vmatpush.msra.mxu0 0.0
        %2076 = vmatpush.msra.mxu0 0.0
        %2077 = vmatpush.msra.mxu0 0.0
        %2078 = vmatpush.msra.mxu0 0.0
        %2079 = vmatpush.msra.mxu0 0.0
        %2080 = vmatpush.msra.mxu0 0.0
        %2081 = vmatpush.msra.mxu0 0.0
        %2082 = vmatpush.msra.mxu0 0.0
        %2083 = vmatpush.msra.mxu0 0.0
        %2084 = vmatpush.msra.mxu0 0.0
        %2085 = vmatpush.msra.mxu0 0.0
        %2086 = vmatpush.msra.mxu0 %v2069
        %2087 = vmatmul.f32.gmra.mxu0 %v1951
        %v2088 = vpop.f32.mrf.mxu0
        %v2089 = vadd.f32 %v1902, %v2088
        %2090 = vdwg.mxu0
        %v2092 = vsel %vm1765, %v1135, 0
        %2094 = vmatpush.msra.mxu0 0.0
        %2095 = vmatpush.msra.mxu0 0.0
        %2096 = vmatpush.msra.mxu0 0.0
        %2097 = vmatpush.msra.mxu0 0.0
        %2098 = vmatpush.msra.mxu0 0.0
        %2099 = vmatpush.msra.mxu0 0.0
        %2100 = vmatpush.msra.mxu0 0.0
        %2101 = vmatpush.msra.mxu0 0.0
        %2102 = vmatpush.msra.mxu0 0.0
        %2103 = vmatpush.msra.mxu0 0.0
        %2104 = vmatpush.msra.mxu0 0.0
        %2105 = vmatpush.msra.mxu0 0.0
        %2106 = vmatpush.msra.mxu0 0.0
        %2107 = vmatpush.msra.mxu0 0.0
        %2108 = vmatpush.msra.mxu0 0.0
        %2109 = vmatpush.msra.mxu0 %v2092
        %2110 = vmatmul.f32.gmra.mxu0 %v1951
        %v2111 = vpop.f32.mrf.mxu0
        %v2112 = vadd.f32 %v1925, %v2111
        %2113 = vdwg.mxu0
        %v2115 = vsel %vm1765, %v1136, 0
        %2117 = vmatpush.msra.mxu0 0.0
        %2118 = vmatpush.msra.mxu0 0.0
        %2119 = vmatpush.msra.mxu0 0.0
        %2120 = vmatpush.msra.mxu0 0.0
        %2121 = vmatpush.msra.mxu0 0.0
        %2122 = vmatpush.msra.mxu0 0.0
        %2123 = vmatpush.msra.mxu0 0.0
        %2124 = vmatpush.msra.mxu0 0.0
        %2125 = vmatpush.msra.mxu0 0.0
        %2126 = vmatpush.msra.mxu0 0.0
        %2127 = vmatpush.msra.mxu0 0.0
        %2128 = vmatpush.msra.mxu0 0.0
        %2129 = vmatpush.msra.mxu0 0.0
        %2130 = vmatpush.msra.mxu0 0.0
        %2131 = vmatpush.msra.mxu0 0.0
        %2132 = vmatpush.msra.mxu0 %v2115
        %2133 = vmatmul.f32.gmra.mxu0 %v1951
        %v2134 = vpop.f32.mrf.mxu0
        %v2135 = vadd.f32 %v1948, %v2134
        %2136 = vdwg.mxu0
        %s2137 = scalar_lea.vmem %s1, 216
        %v2138 = vld [vmem:[%s2137] sm:$0xf]
        %2140 = vset.pattern.permute.xlu0 0
        %2141 = vperm.xlu0 %2140, %v2138
        %v2142 = vpop.permute.xlu0 %2141
        %v2144 = vmul.f32 %v153, %v2142
        %v2145 = vmul.f32 %v154, %v2142
        %v2146 = vmul.f32 %v155, %v2142
        %v2147 = vmul.f32 %v156, %v2142
        %v2148 = vmul.f32 %v157, %v2142
        %v2149 = vmul.f32 %v158, %v2142
        %v2150 = vmul.f32 %v159, %v2142
        %v2151 = vmul.f32 %v160, %v2142
        %v2152 = vadd.f32 %v2144, 0.0
        %v2153 = vadd.f32 %v2145, 0.0
        %v2154 = vadd.f32 %v2146, 0.0
        %v2155 = vadd.f32 %v2147, 0.0
        %v2156 = vadd.f32 %v2148, 0.0
        %v2157 = vadd.f32 %v2149, 0.0
        %v2158 = vadd.f32 %v2150, 0.0
        %v2159 = vadd.f32 %v2151, 0.0
        %s2160 = scalar_lea.vmem %s1, 220
        %v2161 = vld [vmem:[%s2160] sm:$0xf]
        %2163 = vset.pattern.permute.xlu0 0
        %2164 = vperm.xlu0 %2163, %v2161
        %v2165 = vpop.permute.xlu0 %2164
        %v2167 = vmul.f32 %v156, %v2165
        %v2168 = vmul.f32 %v157, %v2165
        %v2169 = vmul.f32 %v158, %v2165
        %v2170 = vmul.f32 %v159, %v2165
        %v2171 = vmul.f32 %v160, %v2165
        %v2172 = vmul.f32 %v161, %v2165
        %v2173 = vmul.f32 %v162, %v2165
        %v2174 = vmul.f32 %v163, %v2165
        %v2175 = vadd.f32 %v2152, %v2167
        %v2176 = vadd.f32 %v2153, %v2168
        %v2177 = vadd.f32 %v2154, %v2169
        %v2178 = vadd.f32 %v2155, %v2170
        %v2179 = vadd.f32 %v2156, %v2171
        %v2180 = vadd.f32 %v2157, %v2172
        %v2181 = vadd.f32 %v2158, %v2173
        %v2182 = vadd.f32 %v2159, %v2174
        %s2183 = scalar_lea.vmem %s1, 224
        %v2184 = vld [vmem:[%s2183] sm:$0xf]
        %2186 = vset.pattern.permute.xlu0 0
        %2187 = vperm.xlu0 %2186, %v2184
        %v2188 = vpop.permute.xlu0 %2187
        %v2190 = vmul.f32 %v159, %v2188
        %v2191 = vmul.f32 %v160, %v2188
        %v2192 = vmul.f32 %v161, %v2188
        %v2193 = vmul.f32 %v162, %v2188
        %v2194 = vmul.f32 %v163, %v2188
        %v2195 = vmul.f32 %v164, %v2188
        %v2196 = vmul.f32 %v165, %v2188
        %v2197 = vmul.f32 %v166, %v2188
        %v2198 = vadd.f32 %v2175, %v2190
        %v2199 = vadd.f32 %v2176, %v2191
        %v2200 = vadd.f32 %v2177, %v2192
        %v2201 = vadd.f32 %v2178, %v2193
        %v2202 = vadd.f32 %v2179, %v2194
        %v2203 = vadd.f32 %v2180, %v2195
        %v2204 = vadd.f32 %v2181, %v2196
        %v2205 = vadd.f32 %v2182, %v2197
        %s2206 = scalar_lea.vmem %s1, 228
        %v2207 = vld [vmem:[%s2206] sm:$0xf]
        %2209 = vset.pattern.permute.xlu0 0
        %2210 = vperm.xlu0 %2209, %v2207
        %v2211 = vpop.permute.xlu0 %2210
        %v2213 = vmul.f32 %v182, %v2211
        %v2214 = vmul.f32 %v184, %v2211
        %v2215 = vmul.f32 %v186, %v2211
        %v2216 = vmul.f32 %v188, %v2211
        %v2217 = vmul.f32 %v190, %v2211
        %v2218 = vmul.f32 %v192, %v2211
        %v2219 = vmul.f32 %v194, %v2211
        %v2220 = vmul.f32 %v196, %v2211
        %v2221 = vadd.f32 %v2198, %v2213
        %v2222 = vadd.f32 %v2199, %v2214
        %v2223 = vadd.f32 %v2200, %v2215
        %v2224 = vadd.f32 %v2201, %v2216
        %v2225 = vadd.f32 %v2202, %v2217
        %v2226 = vadd.f32 %v2203, %v2218
        %v2227 = vadd.f32 %v2204, %v2219
        %v2228 = vadd.f32 %v2205, %v2220
        %s2229 = scalar_lea.vmem %s1, 232
        %v2230 = vld [vmem:[%s2229] sm:$0xf]
        %2232 = vset.pattern.permute.xlu0 0
        %2233 = vperm.xlu0 %2232, %v2230
        %v2234 = vpop.permute.xlu0 %2233
        %v2236 = vmul.f32 %v188, %v2234
        %v2237 = vmul.f32 %v190, %v2234
        %v2238 = vmul.f32 %v192, %v2234
        %v2239 = vmul.f32 %v194, %v2234
        %v2240 = vmul.f32 %v196, %v2234
        %v2241 = vmul.f32 %v198, %v2234
        %v2242 = vmul.f32 %v200, %v2234
        %v2243 = vmul.f32 %v202, %v2234
        %v2244 = vadd.f32 %v2221, %v2236
        %v2245 = vadd.f32 %v2222, %v2237
        %v2246 = vadd.f32 %v2223, %v2238
        %v2247 = vadd.f32 %v2224, %v2239
        %v2248 = vadd.f32 %v2225, %v2240
        %v2249 = vadd.f32 %v2226, %v2241
        %v2250 = vadd.f32 %v2227, %v2242
        %v2251 = vadd.f32 %v2228, %v2243
        %s2252 = scalar_lea.vmem %s1, 236
        %v2253 = vld [vmem:[%s2252] sm:$0xf]
        %2255 = vset.pattern.permute.xlu0 0
        %2256 = vperm.xlu0 %2255, %v2253
        %v2257 = vpop.permute.xlu0 %2256
        %v2259 = vmul.f32 %v194, %v2257
        %v2260 = vmul.f32 %v196, %v2257
        %v2261 = vmul.f32 %v198, %v2257
        %v2262 = vmul.f32 %v200, %v2257
        %v2263 = vmul.f32 %v202, %v2257
        %v2264 = vmul.f32 %v204, %v2257
        %v2265 = vmul.f32 %v206, %v2257
        %v2266 = vmul.f32 %v208, %v2257
        %v2267 = vadd.f32 %v2244, %v2259
        %v2268 = vadd.f32 %v2245, %v2260
        %v2269 = vadd.f32 %v2246, %v2261
        %v2270 = vadd.f32 %v2247, %v2262
        %v2271 = vadd.f32 %v2248, %v2263
        %v2272 = vadd.f32 %v2249, %v2264
        %v2273 = vadd.f32 %v2250, %v2265
        %v2274 = vadd.f32 %v2251, %v2266
        %s2275 = scalar_lea.vmem %s1, 240
        %v2276 = vld [vmem:[%s2275] sm:$0xf]
        %2278 = vset.pattern.permute.xlu0 0
        %2279 = vperm.xlu0 %2278, %v2276
        %v2280 = vpop.permute.xlu0 %2279
        %v2282 = vmul.f32 %v224, %v2280
        %v2283 = vmul.f32 %v226, %v2280
        %v2284 = vmul.f32 %v228, %v2280
        %v2285 = vmul.f32 %v230, %v2280
        %v2286 = vmul.f32 %v232, %v2280
        %v2287 = vmul.f32 %v234, %v2280
        %v2288 = vmul.f32 %v236, %v2280
        %v2289 = vmul.f32 %v238, %v2280
        %v2290 = vadd.f32 %v2267, %v2282
        %v2291 = vadd.f32 %v2268, %v2283
        %v2292 = vadd.f32 %v2269, %v2284
        %v2293 = vadd.f32 %v2270, %v2285
        %v2294 = vadd.f32 %v2271, %v2286
        %v2295 = vadd.f32 %v2272, %v2287
        %v2296 = vadd.f32 %v2273, %v2288
        %v2297 = vadd.f32 %v2274, %v2289
        %s2298 = scalar_lea.vmem %s1, 244
        %v2299 = vld [vmem:[%s2298] sm:$0xf]
        %2301 = vset.pattern.permute.xlu0 0
        %2302 = vperm.xlu0 %2301, %v2299
        %v2303 = vpop.permute.xlu0 %2302
        %v2305 = vmul.f32 %v230, %v2303
        %v2306 = vmul.f32 %v232, %v2303
        %v2307 = vmul.f32 %v234, %v2303
        %v2308 = vmul.f32 %v236, %v2303
        %v2309 = vmul.f32 %v238, %v2303
        %v2310 = vmul.f32 %v240, %v2303
        %v2311 = vmul.f32 %v242, %v2303
        %v2312 = vmul.f32 %v244, %v2303
        %v2313 = vadd.f32 %v2290, %v2305
        %v2314 = vadd.f32 %v2291, %v2306
        %v2315 = vadd.f32 %v2292, %v2307
        %v2316 = vadd.f32 %v2293, %v2308
        %v2317 = vadd.f32 %v2294, %v2309
        %v2318 = vadd.f32 %v2295, %v2310
        %v2319 = vadd.f32 %v2296, %v2311
        %v2320 = vadd.f32 %v2297, %v2312
        %s2321 = scalar_lea.vmem %s1, 248
        %v2322 = vld [vmem:[%s2321] sm:$0xf]
        %2324 = vset.pattern.permute.xlu0 0
        %2325 = vperm.xlu0 %2324, %v2322
        %v2326 = vpop.permute.xlu0 %2325
        %v2328 = vmul.f32 %v236, %v2326
        %v2329 = vmul.f32 %v238, %v2326
        %v2330 = vmul.f32 %v240, %v2326
        %v2331 = vmul.f32 %v242, %v2326
        %v2332 = vmul.f32 %v244, %v2326
        %v2333 = vmul.f32 %v246, %v2326
        %v2334 = vmul.f32 %v248, %v2326
        %v2335 = vmul.f32 %v250, %v2326
        %v2336 = vadd.f32 %v2313, %v2328
        %v2337 = vadd.f32 %v2314, %v2329
        %v2338 = vadd.f32 %v2315, %v2330
        %v2339 = vadd.f32 %v2316, %v2331
        %v2340 = vadd.f32 %v2317, %v2332
        %v2341 = vadd.f32 %v2318, %v2333
        %v2342 = vadd.f32 %v2319, %v2334
        %v2343 = vadd.f32 %v2320, %v2335
        %s2344 = scalar_lea.vmem %s1, 252
        %v2345 = vld [vmem:[%s2344] sm:$0xf]
        %2347 = vset.pattern.permute.xlu0 0
        %2348 = vperm.xlu0 %2347, %v2345
        %v2349 = vpop.permute.xlu0 %2348
        %v2351 = vmul.f32 %v266, %v2349
        %v2352 = vmul.f32 %v268, %v2349
        %v2353 = vmul.f32 %v270, %v2349
        %v2354 = vmul.f32 %v272, %v2349
        %v2355 = vmul.f32 %v274, %v2349
        %v2356 = vmul.f32 %v276, %v2349
        %v2357 = vmul.f32 %v278, %v2349
        %v2358 = vmul.f32 %v280, %v2349
        %v2359 = vadd.f32 %v2336, %v2351
        %v2360 = vadd.f32 %v2337, %v2352
        %v2361 = vadd.f32 %v2338, %v2353
        %v2362 = vadd.f32 %v2339, %v2354
        %v2363 = vadd.f32 %v2340, %v2355
        %v2364 = vadd.f32 %v2341, %v2356
        %v2365 = vadd.f32 %v2342, %v2357
        %v2366 = vadd.f32 %v2343, %v2358
        %s2367 = scalar_lea.vmem %s1, 256
        %v2368 = vld [vmem:[%s2367] sm:$0xf]
        %2370 = vset.pattern.permute.xlu0 0
        %2371 = vperm.xlu0 %2370, %v2368
        %v2372 = vpop.permute.xlu0 %2371
        %v2374 = vmul.f32 %v272, %v2372
        %v2375 = vmul.f32 %v274, %v2372
        %v2376 = vmul.f32 %v276, %v2372
        %v2377 = vmul.f32 %v278, %v2372
        %v2378 = vmul.f32 %v280, %v2372
        %v2379 = vmul.f32 %v282, %v2372
        %v2380 = vmul.f32 %v284, %v2372
        %v2381 = vmul.f32 %v286, %v2372
        %v2382 = vadd.f32 %v2359, %v2374
        %v2383 = vadd.f32 %v2360, %v2375
        %v2384 = vadd.f32 %v2361, %v2376
        %v2385 = vadd.f32 %v2362, %v2377
        %v2386 = vadd.f32 %v2363, %v2378
        %v2387 = vadd.f32 %v2364, %v2379
        %v2388 = vadd.f32 %v2365, %v2380
        %v2389 = vadd.f32 %v2366, %v2381
        %s2390 = scalar_lea.vmem %s1, 260
        %v2391 = vld [vmem:[%s2390] sm:$0xf]
        %2393 = vset.pattern.permute.xlu0 0
        %2394 = vperm.xlu0 %2393, %v2391
        %v2395 = vpop.permute.xlu0 %2394
        %v2397 = vmul.f32 %v278, %v2395
        %v2398 = vmul.f32 %v280, %v2395
        %v2399 = vmul.f32 %v282, %v2395
        %v2400 = vmul.f32 %v284, %v2395
        %v2401 = vmul.f32 %v286, %v2395
        %v2402 = vmul.f32 %v288, %v2395
        %v2403 = vmul.f32 %v290, %v2395
        %v2404 = vmul.f32 %v292, %v2395
        %v2405 = vadd.f32 %v2382, %v2397
        %v2406 = vadd.f32 %v2383, %v2398
        %v2407 = vadd.f32 %v2384, %v2399
        %v2408 = vadd.f32 %v2385, %v2400
        %v2409 = vadd.f32 %v2386, %v2401
        %v2410 = vadd.f32 %v2387, %v2402
        %v2411 = vadd.f32 %v2388, %v2403
        %v2412 = vadd.f32 %v2389, %v2404
        %s2413 = scalar_lea.vmem %s1, 264
        %v2414 = vld [vmem:[%s2413] sm:$0xf]
        %2416 = vset.pattern.permute.xlu0 0
        %2417 = vperm.xlu0 %2416, %v2414
        %v2418 = vpop.permute.xlu0 %2417
        %v2420 = vmul.f32 %v308, %v2418
        %v2421 = vmul.f32 %v310, %v2418
        %v2422 = vmul.f32 %v312, %v2418
        %v2423 = vmul.f32 %v314, %v2418
        %v2424 = vmul.f32 %v316, %v2418
        %v2425 = vmul.f32 %v318, %v2418
        %v2426 = vmul.f32 %v320, %v2418
        %v2427 = vmul.f32 %v322, %v2418
        %v2428 = vadd.f32 %v2405, %v2420
        %v2429 = vadd.f32 %v2406, %v2421
        %v2430 = vadd.f32 %v2407, %v2422
        %v2431 = vadd.f32 %v2408, %v2423
        %v2432 = vadd.f32 %v2409, %v2424
        %v2433 = vadd.f32 %v2410, %v2425
        %v2434 = vadd.f32 %v2411, %v2426
        %v2435 = vadd.f32 %v2412, %v2427
        %s2436 = scalar_lea.vmem %s1, 268
        %v2437 = vld [vmem:[%s2436] sm:$0xf]
        %2439 = vset.pattern.permute.xlu0 0
        %2440 = vperm.xlu0 %2439, %v2437
        %v2441 = vpop.permute.xlu0 %2440
        %v2443 = vmul.f32 %v314, %v2441
        %v2444 = vmul.f32 %v316, %v2441
        %v2445 = vmul.f32 %v318, %v2441
        %v2446 = vmul.f32 %v320, %v2441
        %v2447 = vmul.f32 %v322, %v2441
        %v2448 = vmul.f32 %v324, %v2441
        %v2449 = vmul.f32 %v326, %v2441
        %v2450 = vmul.f32 %v328, %v2441
        %v2451 = vadd.f32 %v2428, %v2443
        %v2452 = vadd.f32 %v2429, %v2444
        %v2453 = vadd.f32 %v2430, %v2445
        %v2454 = vadd.f32 %v2431, %v2446
        %v2455 = vadd.f32 %v2432, %v2447
        %v2456 = vadd.f32 %v2433, %v2448
        %v2457 = vadd.f32 %v2434, %v2449
        %v2458 = vadd.f32 %v2435, %v2450
        %s2459 = scalar_lea.vmem %s1, 272
        %v2460 = vld [vmem:[%s2459] sm:$0xf]
        %2462 = vset.pattern.permute.xlu0 0
        %2463 = vperm.xlu0 %2462, %v2460
        %v2464 = vpop.permute.xlu0 %2463
        %v2466 = vmul.f32 %v320, %v2464
        %v2467 = vmul.f32 %v322, %v2464
        %v2468 = vmul.f32 %v324, %v2464
        %v2469 = vmul.f32 %v326, %v2464
        %v2470 = vmul.f32 %v328, %v2464
        %v2471 = vmul.f32 %v330, %v2464
        %v2472 = vmul.f32 %v332, %v2464
        %v2473 = vmul.f32 %v334, %v2464
        %v2474 = vadd.f32 %v2451, %v2466
        %v2475 = vadd.f32 %v2452, %v2467
        %v2476 = vadd.f32 %v2453, %v2468
        %v2477 = vadd.f32 %v2454, %v2469
        %v2478 = vadd.f32 %v2455, %v2470
        %v2479 = vadd.f32 %v2456, %v2471
        %v2480 = vadd.f32 %v2457, %v2472
        %v2481 = vadd.f32 %v2458, %v2473
        %s2482 = scalar_lea.vmem %s1, 276
        %v2483 = vld [vmem:[%s2482] sm:$0xf]
        %2485 = vset.pattern.permute.xlu0 0
        %2486 = vperm.xlu0 %2485, %v2483
        %v2487 = vpop.permute.xlu0 %2486
        %v2489 = vmul.f32 %v350, %v2487
        %v2490 = vmul.f32 %v352, %v2487
        %v2491 = vmul.f32 %v354, %v2487
        %v2492 = vmul.f32 %v356, %v2487
        %v2493 = vmul.f32 %v358, %v2487
        %v2494 = vmul.f32 %v360, %v2487
        %v2495 = vmul.f32 %v362, %v2487
        %v2496 = vmul.f32 %v364, %v2487
        %v2497 = vadd.f32 %v2474, %v2489
        %v2498 = vadd.f32 %v2475, %v2490
        %v2499 = vadd.f32 %v2476, %v2491
        %v2500 = vadd.f32 %v2477, %v2492
        %v2501 = vadd.f32 %v2478, %v2493
        %v2502 = vadd.f32 %v2479, %v2494
        %v2503 = vadd.f32 %v2480, %v2495
        %v2504 = vadd.f32 %v2481, %v2496
        %s2505 = scalar_lea.vmem %s1, 280
        %v2506 = vld [vmem:[%s2505] sm:$0xf]
        %2508 = vset.pattern.permute.xlu0 0
        %2509 = vperm.xlu0 %2508, %v2506
        %v2510 = vpop.permute.xlu0 %2509
        %v2512 = vmul.f32 %v356, %v2510
        %v2513 = vmul.f32 %v358, %v2510
        %v2514 = vmul.f32 %v360, %v2510
        %v2515 = vmul.f32 %v362, %v2510
        %v2516 = vmul.f32 %v364, %v2510
        %v2517 = vmul.f32 %v366, %v2510
        %v2518 = vmul.f32 %v368, %v2510
        %v2519 = vmul.f32 %v370, %v2510
        %v2520 = vadd.f32 %v2497, %v2512
        %v2521 = vadd.f32 %v2498, %v2513
        %v2522 = vadd.f32 %v2499, %v2514
        %v2523 = vadd.f32 %v2500, %v2515
        %v2524 = vadd.f32 %v2501, %v2516
        %v2525 = vadd.f32 %v2502, %v2517
        %v2526 = vadd.f32 %v2503, %v2518
        %v2527 = vadd.f32 %v2504, %v2519
        %s2528 = scalar_lea.vmem %s1, 284
        %v2529 = vld [vmem:[%s2528] sm:$0xf]
        %2531 = vset.pattern.permute.xlu0 0
        %2532 = vperm.xlu0 %2531, %v2529
        %v2533 = vpop.permute.xlu0 %2532
        %v2535 = vmul.f32 %v362, %v2533
        %v2536 = vmul.f32 %v364, %v2533
        %v2537 = vmul.f32 %v366, %v2533
        %v2538 = vmul.f32 %v368, %v2533
        %v2539 = vmul.f32 %v370, %v2533
        %v2540 = vmul.f32 %v372, %v2533
        %v2541 = vmul.f32 %v374, %v2533
        %v2542 = vmul.f32 %v376, %v2533
        %v2543 = vadd.f32 %v2520, %v2535
        %v2544 = vadd.f32 %v2521, %v2536
        %v2545 = vadd.f32 %v2522, %v2537
        %v2546 = vadd.f32 %v2523, %v2538
        %v2547 = vadd.f32 %v2524, %v2539
        %v2548 = vadd.f32 %v2525, %v2540
        %v2549 = vadd.f32 %v2526, %v2541
        %v2550 = vadd.f32 %v2527, %v2542
        %s2551 = scalar_lea.vmem %s1, 288
        %v2552 = vld [vmem:[%s2551] sm:$0xf]
        %2554 = vset.pattern.permute.xlu0 0
        %2555 = vperm.xlu0 %2554, %v2552
        %v2556 = vpop.permute.xlu0 %2555
        %v2558 = vmul.f32 %v392, %v2556
        %v2559 = vmul.f32 %v394, %v2556
        %v2560 = vmul.f32 %v396, %v2556
        %v2561 = vmul.f32 %v398, %v2556
        %v2562 = vmul.f32 %v400, %v2556
        %v2563 = vmul.f32 %v402, %v2556
        %v2564 = vmul.f32 %v404, %v2556
        %v2565 = vmul.f32 %v406, %v2556
        %v2566 = vadd.f32 %v2543, %v2558
        %v2567 = vadd.f32 %v2544, %v2559
        %v2568 = vadd.f32 %v2545, %v2560
        %v2569 = vadd.f32 %v2546, %v2561
        %v2570 = vadd.f32 %v2547, %v2562
        %v2571 = vadd.f32 %v2548, %v2563
        %v2572 = vadd.f32 %v2549, %v2564
        %v2573 = vadd.f32 %v2550, %v2565
        %s2574 = scalar_lea.vmem %s1, 292
        %v2575 = vld [vmem:[%s2574] sm:$0xf]
        %2577 = vset.pattern.permute.xlu0 0
        %2578 = vperm.xlu0 %2577, %v2575
        %v2579 = vpop.permute.xlu0 %2578
        %v2581 = vmul.f32 %v398, %v2579
        %v2582 = vmul.f32 %v400, %v2579
        %v2583 = vmul.f32 %v402, %v2579
        %v2584 = vmul.f32 %v404, %v2579
        %v2585 = vmul.f32 %v406, %v2579
        %v2586 = vmul.f32 %v408, %v2579
        %v2587 = vmul.f32 %v410, %v2579
        %v2588 = vmul.f32 %v412, %v2579
        %v2589 = vadd.f32 %v2566, %v2581
        %v2590 = vadd.f32 %v2567, %v2582
        %v2591 = vadd.f32 %v2568, %v2583
        %v2592 = vadd.f32 %v2569, %v2584
        %v2593 = vadd.f32 %v2570, %v2585
        %v2594 = vadd.f32 %v2571, %v2586
        %v2595 = vadd.f32 %v2572, %v2587
        %v2596 = vadd.f32 %v2573, %v2588
        %s2597 = scalar_lea.vmem %s1, 296
        %v2598 = vld [vmem:[%s2597] sm:$0xf]
        %2600 = vset.pattern.permute.xlu0 0
        %2601 = vperm.xlu0 %2600, %v2598
        %v2602 = vpop.permute.xlu0 %2601
        %v2604 = vmul.f32 %v404, %v2602
        %v2605 = vmul.f32 %v406, %v2602
        %v2606 = vmul.f32 %v408, %v2602
        %v2607 = vmul.f32 %v410, %v2602
        %v2608 = vmul.f32 %v412, %v2602
        %v2609 = vmul.f32 %v414, %v2602
        %v2610 = vmul.f32 %v416, %v2602
        %v2611 = vmul.f32 %v418, %v2602
        %v2612 = vadd.f32 %v2589, %v2604
        %v2613 = vadd.f32 %v2590, %v2605
        %v2614 = vadd.f32 %v2591, %v2606
        %v2615 = vadd.f32 %v2592, %v2607
        %v2616 = vadd.f32 %v2593, %v2608
        %v2617 = vadd.f32 %v2594, %v2609
        %v2618 = vadd.f32 %v2595, %v2610
        %v2619 = vadd.f32 %v2596, %v2611
        %s2620 = scalar_lea.vmem %s1, 300
        %v2621 = vld [vmem:[%s2620] sm:$0xf]
        %2623 = vset.pattern.permute.xlu0 0
        %2624 = vperm.xlu0 %2623, %v2621
        %v2625 = vpop.permute.xlu0 %2624
        %v2627 = vmul.f32 %v434, %v2625
        %v2628 = vmul.f32 %v436, %v2625
        %v2629 = vmul.f32 %v438, %v2625
        %v2630 = vmul.f32 %v440, %v2625
        %v2631 = vmul.f32 %v442, %v2625
        %v2632 = vmul.f32 %v444, %v2625
        %v2633 = vmul.f32 %v446, %v2625
        %v2634 = vmul.f32 %v448, %v2625
        %v2635 = vadd.f32 %v2612, %v2627
        %v2636 = vadd.f32 %v2613, %v2628
        %v2637 = vadd.f32 %v2614, %v2629
        %v2638 = vadd.f32 %v2615, %v2630
        %v2639 = vadd.f32 %v2616, %v2631
        %v2640 = vadd.f32 %v2617, %v2632
        %v2641 = vadd.f32 %v2618, %v2633
        %v2642 = vadd.f32 %v2619, %v2634
        %s2643 = scalar_lea.vmem %s1, 304
        %v2644 = vld [vmem:[%s2643] sm:$0xf]
        %2646 = vset.pattern.permute.xlu0 0
        %2647 = vperm.xlu0 %2646, %v2644
        %v2648 = vpop.permute.xlu0 %2647
        %v2650 = vmul.f32 %v440, %v2648
        %v2651 = vmul.f32 %v442, %v2648
        %v2652 = vmul.f32 %v444, %v2648
        %v2653 = vmul.f32 %v446, %v2648
        %v2654 = vmul.f32 %v448, %v2648
        %v2655 = vmul.f32 %v450, %v2648
        %v2656 = vmul.f32 %v452, %v2648
        %v2657 = vmul.f32 %v454, %v2648
        %v2658 = vadd.f32 %v2635, %v2650
        %v2659 = vadd.f32 %v2636, %v2651
        %v2660 = vadd.f32 %v2637, %v2652
        %v2661 = vadd.f32 %v2638, %v2653
        %v2662 = vadd.f32 %v2639, %v2654
        %v2663 = vadd.f32 %v2640, %v2655
        %v2664 = vadd.f32 %v2641, %v2656
        %v2665 = vadd.f32 %v2642, %v2657
        %s2666 = scalar_lea.vmem %s1, 308
        %v2667 = vld [vmem:[%s2666] sm:$0xf]
        %2669 = vset.pattern.permute.xlu0 0
        %2670 = vperm.xlu0 %2669, %v2667
        %v2671 = vpop.permute.xlu0 %2670
        %v2673 = vmul.f32 %v446, %v2671
        %v2674 = vmul.f32 %v448, %v2671
        %v2675 = vmul.f32 %v450, %v2671
        %v2676 = vmul.f32 %v452, %v2671
        %v2677 = vmul.f32 %v454, %v2671
        %v2678 = vmul.f32 %v456, %v2671
        %v2679 = vmul.f32 %v458, %v2671
        %v2680 = vmul.f32 %v460, %v2671
        %v2681 = vadd.f32 %v2658, %v2673
        %v2682 = vadd.f32 %v2659, %v2674
        %v2683 = vadd.f32 %v2660, %v2675
        %v2684 = vadd.f32 %v2661, %v2676
        %v2685 = vadd.f32 %v2662, %v2677
        %v2686 = vadd.f32 %v2663, %v2678
        %v2687 = vadd.f32 %v2664, %v2679
        %v2688 = vadd.f32 %v2665, %v2680
        %s2689 = scalar_lea.vmem %s1, 312
        %v2690 = vld [vmem:[%s2689] sm:$0xf]
        %2692 = vset.pattern.permute.xlu0 0
        %2693 = vperm.xlu0 %2692, %v2690
        %v2694 = vpop.permute.xlu0 %2693
        %v2696 = vmul.f32 %v476, %v2694
        %v2697 = vmul.f32 %v478, %v2694
        %v2698 = vmul.f32 %v480, %v2694
        %v2699 = vmul.f32 %v482, %v2694
        %v2700 = vmul.f32 %v484, %v2694
        %v2701 = vmul.f32 %v486, %v2694
        %v2702 = vmul.f32 %v488, %v2694
        %v2703 = vmul.f32 %v490, %v2694
        %v2704 = vadd.f32 %v2681, %v2696
        %v2705 = vadd.f32 %v2682, %v2697
        %v2706 = vadd.f32 %v2683, %v2698
        %v2707 = vadd.f32 %v2684, %v2699
        %v2708 = vadd.f32 %v2685, %v2700
        %v2709 = vadd.f32 %v2686, %v2701
        %v2710 = vadd.f32 %v2687, %v2702
        %v2711 = vadd.f32 %v2688, %v2703
        %s2712 = scalar_lea.vmem %s1, 316
        %v2713 = vld [vmem:[%s2712] sm:$0xf]
        %2715 = vset.pattern.permute.xlu0 0
        %2716 = vperm.xlu0 %2715, %v2713
        %v2717 = vpop.permute.xlu0 %2716
        %v2719 = vmul.f32 %v482, %v2717
        %v2720 = vmul.f32 %v484, %v2717
        %v2721 = vmul.f32 %v486, %v2717
        %v2722 = vmul.f32 %v488, %v2717
        %v2723 = vmul.f32 %v490, %v2717
        %v2724 = vmul.f32 %v492, %v2717
        %v2725 = vmul.f32 %v494, %v2717
        %v2726 = vmul.f32 %v496, %v2717
        %v2727 = vadd.f32 %v2704, %v2719
        %v2728 = vadd.f32 %v2705, %v2720
        %v2729 = vadd.f32 %v2706, %v2721
        %v2730 = vadd.f32 %v2707, %v2722
        %v2731 = vadd.f32 %v2708, %v2723
        %v2732 = vadd.f32 %v2709, %v2724
        %v2733 = vadd.f32 %v2710, %v2725
        %v2734 = vadd.f32 %v2711, %v2726
        %s2735 = scalar_lea.vmem %s1, 320
        %v2736 = vld [vmem:[%s2735] sm:$0xf]
        %2738 = vset.pattern.permute.xlu0 0
        %2739 = vperm.xlu0 %2738, %v2736
        %v2740 = vpop.permute.xlu0 %2739
        %v2742 = vmul.f32 %v488, %v2740
        %v2743 = vmul.f32 %v490, %v2740
        %v2744 = vmul.f32 %v492, %v2740
        %v2745 = vmul.f32 %v494, %v2740
        %v2746 = vmul.f32 %v496, %v2740
        %v2747 = vmul.f32 %v498, %v2740
        %v2748 = vmul.f32 %v500, %v2740
        %v2749 = vmul.f32 %v502, %v2740
        %v2750 = vadd.f32 %v2727, %v2742
        %v2751 = vadd.f32 %v2728, %v2743
        %v2752 = vadd.f32 %v2729, %v2744
        %v2753 = vadd.f32 %v2730, %v2745
        %v2754 = vadd.f32 %v2731, %v2746
        %v2755 = vadd.f32 %v2732, %v2747
        %v2756 = vadd.f32 %v2733, %v2748
        %v2757 = vadd.f32 %v2734, %v2749
        %s2758 = scalar_lea.vmem %s2, 16
        %v2759 = vld [vmem:[%s2758] sm:$0xff]
        %v2761 = vsel %vm1761, %v2759, 0
        %v2764 = vsel %vm1765, %v2750, 0
        %2766 = vmatpush.msra.mxu0 0.0
        %2767 = vmatpush.msra.mxu0 0.0
        %2768 = vmatpush.msra.mxu0 0.0
        %2769 = vmatpush.msra.mxu0 0.0
        %2770 = vmatpush.msra.mxu0 0.0
        %2771 = vmatpush.msra.mxu0 0.0
        %2772 = vmatpush.msra.mxu0 0.0
        %2773 = vmatpush.msra.mxu0 0.0
        %2774 = vmatpush.msra.mxu0 0.0
        %2775 = vmatpush.msra.mxu0 0.0
        %2776 = vmatpush.msra.mxu0 0.0
        %2777 = vmatpush.msra.mxu0 0.0
        %2778 = vmatpush.msra.mxu0 0.0
        %2779 = vmatpush.msra.mxu0 0.0
        %2780 = vmatpush.msra.mxu0 0.0
        %2781 = vmatpush.msra.mxu0 %v2764
        %2782 = vmatmul.f32.gmra.mxu0 %v2761
        %v2783 = vpop.f32.mrf.mxu0
        %v2784 = vadd.f32 0.0, %v2783
        %2785 = vdwg.mxu0
        %v2787 = vsel %vm1765, %v2751, 0
        %2789 = vmatpush.msra.mxu0 0.0
        %2790 = vmatpush.msra.mxu0 0.0
        %2791 = vmatpush.msra.mxu0 0.0
        %2792 = vmatpush.msra.mxu0 0.0
        %2793 = vmatpush.msra.mxu0 0.0
        %2794 = vmatpush.msra.mxu0 0.0
        %2795 = vmatpush.msra.mxu0 0.0
        %2796 = vmatpush.msra.mxu0 0.0
        %2797 = vmatpush.msra.mxu0 0.0
        %2798 = vmatpush.msra.mxu0 0.0
        %2799 = vmatpush.msra.mxu0 0.0
        %2800 = vmatpush.msra.mxu0 0.0
        %2801 = vmatpush.msra.mxu0 0.0
        %2802 = vmatpush.msra.mxu0 0.0
        %2803 = vmatpush.msra.mxu0 0.0
        %2804 = vmatpush.msra.mxu0 %v2787
        %2805 = vmatmul.f32.gmra.mxu0 %v2761
        %v2806 = vpop.f32.mrf.mxu0
        %v2807 = vadd.f32 0.0, %v2806
        %2808 = vdwg.mxu0
        %v2810 = vsel %vm1765, %v2752, 0
        %2812 = vmatpush.msra.mxu0 0.0
        %2813 = vmatpush.msra.mxu0 0.0
        %2814 = vmatpush.msra.mxu0 0.0
        %2815 = vmatpush.msra.mxu0 0.0
        %2816 = vmatpush.msra.mxu0 0.0
        %2817 = vmatpush.msra.mxu0 0.0
        %2818 = vmatpush.msra.mxu0 0.0
        %2819 = vmatpush.msra.mxu0 0.0
        %2820 = vmatpush.msra.mxu0 0.0
        %2821 = vmatpush.msra.mxu0 0.0
        %2822 = vmatpush.msra.mxu0 0.0
        %2823 = vmatpush.msra.mxu0 0.0
        %2824 = vmatpush.msra.mxu0 0.0
        %2825 = vmatpush.msra.mxu0 0.0
        %2826 = vmatpush.msra.mxu0 0.0
        %2827 = vmatpush.msra.mxu0 %v2810
        %2828 = vmatmul.f32.gmra.mxu0 %v2761
        %v2829 = vpop.f32.mrf.mxu0
        %v2830 = vadd.f32 0.0, %v2829
        %2831 = vdwg.mxu0
        %v2833 = vsel %vm1765, %v2753, 0
        %2835 = vmatpush.msra.mxu0 0.0
        %2836 = vmatpush.msra.mxu0 0.0
        %2837 = vmatpush.msra.mxu0 0.0
        %2838 = vmatpush.msra.mxu0 0.0
        %2839 = vmatpush.msra.mxu0 0.0
        %2840 = vmatpush.msra.mxu0 0.0
        %2841 = vmatpush.msra.mxu0 0.0
        %2842 = vmatpush.msra.mxu0 0.0
        %2843 = vmatpush.msra.mxu0 0.0
        %2844 = vmatpush.msra.mxu0 0.0
        %2845 = vmatpush.msra.mxu0 0.0
        %2846 = vmatpush.msra.mxu0 0.0
        %2847 = vmatpush.msra.mxu0 0.0
        %2848 = vmatpush.msra.mxu0 0.0
        %2849 = vmatpush.msra.mxu0 0.0
        %2850 = vmatpush.msra.mxu0 %v2833
        %2851 = vmatmul.f32.gmra.mxu0 %v2761
        %v2852 = vpop.f32.mrf.mxu0
        %v2853 = vadd.f32 0.0, %v2852
        %2854 = vdwg.mxu0
        %v2856 = vsel %vm1765, %v2754, 0
        %2858 = vmatpush.msra.mxu0 0.0
        %2859 = vmatpush.msra.mxu0 0.0
        %2860 = vmatpush.msra.mxu0 0.0
        %2861 = vmatpush.msra.mxu0 0.0
        %2862 = vmatpush.msra.mxu0 0.0
        %2863 = vmatpush.msra.mxu0 0.0
        %2864 = vmatpush.msra.mxu0 0.0
        %2865 = vmatpush.msra.mxu0 0.0
        %2866 = vmatpush.msra.mxu0 0.0
        %2867 = vmatpush.msra.mxu0 0.0
        %2868 = vmatpush.msra.mxu0 0.0
        %2869 = vmatpush.msra.mxu0 0.0
        %2870 = vmatpush.msra.mxu0 0.0
        %2871 = vmatpush.msra.mxu0 0.0
        %2872 = vmatpush.msra.mxu0 0.0
        %2873 = vmatpush.msra.mxu0 %v2856
        %2874 = vmatmul.f32.gmra.mxu0 %v2761
        %v2875 = vpop.f32.mrf.mxu0
        %v2876 = vadd.f32 0.0, %v2875
        %2877 = vdwg.mxu0
        %v2879 = vsel %vm1765, %v2755, 0
        %2881 = vmatpush.msra.mxu0 0.0
        %2882 = vmatpush.msra.mxu0 0.0
        %2883 = vmatpush.msra.mxu0 0.0
        %2884 = vmatpush.msra.mxu0 0.0
        %2885 = vmatpush.msra.mxu0 0.0
        %2886 = vmatpush.msra.mxu0 0.0
        %2887 = vmatpush.msra.mxu0 0.0
        %2888 = vmatpush.msra.mxu0 0.0
        %2889 = vmatpush.msra.mxu0 0.0
        %2890 = vmatpush.msra.mxu0 0.0
        %2891 = vmatpush.msra.mxu0 0.0
        %2892 = vmatpush.msra.mxu0 0.0
        %2893 = vmatpush.msra.mxu0 0.0
        %2894 = vmatpush.msra.mxu0 0.0
        %2895 = vmatpush.msra.mxu0 0.0
        %2896 = vmatpush.msra.mxu0 %v2879
        %2897 = vmatmul.f32.gmra.mxu0 %v2761
        %v2898 = vpop.f32.mrf.mxu0
        %v2899 = vadd.f32 0.0, %v2898
        %2900 = vdwg.mxu0
        %v2902 = vsel %vm1765, %v2756, 0
        %2904 = vmatpush.msra.mxu0 0.0
        %2905 = vmatpush.msra.mxu0 0.0
        %2906 = vmatpush.msra.mxu0 0.0
        %2907 = vmatpush.msra.mxu0 0.0
        %2908 = vmatpush.msra.mxu0 0.0
        %2909 = vmatpush.msra.mxu0 0.0
        %2910 = vmatpush.msra.mxu0 0.0
        %2911 = vmatpush.msra.mxu0 0.0
        %2912 = vmatpush.msra.mxu0 0.0
        %2913 = vmatpush.msra.mxu0 0.0
        %2914 = vmatpush.msra.mxu0 0.0
        %2915 = vmatpush.msra.mxu0 0.0
        %2916 = vmatpush.msra.mxu0 0.0
        %2917 = vmatpush.msra.mxu0 0.0
        %2918 = vmatpush.msra.mxu0 0.0
        %2919 = vmatpush.msra.mxu0 %v2902
        %2920 = vmatmul.f32.gmra.mxu0 %v2761
        %v2921 = vpop.f32.mrf.mxu0
        %v2922 = vadd.f32 0.0, %v2921
        %2923 = vdwg.mxu0
        %v2925 = vsel %vm1765, %v2757, 0
        %2927 = vmatpush.msra.mxu0 0.0
        %2928 = vmatpush.msra.mxu0 0.0
        %2929 = vmatpush.msra.mxu0 0.0
        %2930 = vmatpush.msra.mxu0 0.0
        %2931 = vmatpush.msra.mxu0 0.0
        %2932 = vmatpush.msra.mxu0 0.0
        %2933 = vmatpush.msra.mxu0 0.0
        %2934 = vmatpush.msra.mxu0 0.0
        %2935 = vmatpush.msra.mxu0 0.0
        %2936 = vmatpush.msra.mxu0 0.0
        %2937 = vmatpush.msra.mxu0 0.0
        %2938 = vmatpush.msra.mxu0 0.0
        %2939 = vmatpush.msra.mxu0 0.0
        %2940 = vmatpush.msra.mxu0 0.0
        %2941 = vmatpush.msra.mxu0 0.0
        %2942 = vmatpush.msra.mxu0 %v2925
        %2943 = vmatmul.f32.gmra.mxu0 %v2761
        %v2944 = vpop.f32.mrf.mxu0
        %v2945 = vadd.f32 0.0, %v2944
        %2946 = vdwg.mxu0
        %v2947 = vadd.f32 %v1974, %v2784
        %v2948 = vadd.f32 %v1997, %v2807
        %v2949 = vadd.f32 %v2020, %v2830
        %v2950 = vadd.f32 %v2043, %v2853
        %v2951 = vadd.f32 %v2066, %v2876
        %v2952 = vadd.f32 %v2089, %v2899
        %v2953 = vadd.f32 %v2112, %v2922
        %v2954 = vadd.f32 %v2135, %v2945
        %2955 = vst [vmem:[%s148] sm:$0xff] %v2947
        %2956 = vst [vmem:[%s148 + $0x8] sm:$0xff] %v2948
        %2957 = vst [vmem:[%s148 + $0x10] sm:$0xff] %v2949
        %2958 = vst [vmem:[%s148 + $0x18] sm:$0xff] %v2950
        %2959 = vst [vmem:[%s148 + $0x20] sm:$0xff] %v2951
        %2960 = vst [vmem:[%s148 + $0x28] sm:$0xff] %v2952
        %2961 = vst [vmem:[%s148 + $0x30] sm:$0xff] %v2953
        %2962 = vst [vmem:[%s148 + $0x38] sm:$0xff] %v2954
        %s2963 = sand.u32 %s88, 1
        %s2964 = scalar_lea.sflag [#allocation3], %s2963
        %s2965 = sand.u32 %s88, 1
        %s2966 = smul.addr %s2965, 64
        %s2967 = scalar_lea.vmem [#allocation2], %s2966
        // Predicated region
        $region33: #{tpu_custom_call.1} parent=31 // pred_check
          %p2968 = pneg %p98
        $region34: #{tpu_custom_call.1} parent=31 // pred_check_branch
          %2970 = sbr.rel (%p2968) target = $region36
        $region35: #{tpu_custom_call.1} parent=31 // pred_region
          %s2971 = smul.u32 8, %s17
          %2973 = vsyncadd %s2964, 0
          %s2974 = smul.addr %s2971, 8
          %s2975 = scalar_lea.hbm %s3, %s2974
          %s2976 = sshll.u32 %s2967, 4
          %s2977 = int_to_ptr.vmem [resolvable:$true] %s2976
          %s2978 = sshll.u32 %s2975, 4
          %s2979 = int_to_ptr.hbm [resolvable:$true] %s2978
          %2984 = dma.vmem_to_hbm [thread:$0]  %s2977, 1024, %s2979, %s2964, 128, 128, 8
        $region36: #{tpu_custom_call.1} parent=31 // pred_fallthru
          _
      $region32: #{tpu_custom_call.1} parent=5 // pred_fallthru
        _
      %p2985 = scmp.le.s32.totalorder 2, %s12
      // Predicated region
      $region37: #{tpu_custom_call.1} parent=5 // pred_check
        %p2986 = pneg %p2985
      $region38: #{tpu_custom_call.1} parent=5 // pred_check_branch
        %2988 = sbr.rel (%p2986) target = $region40
      $region39: #{tpu_custom_call.1} parent=5 // pred_region
        %s2989 = ssub.s32 %s12, 2
        // Predicated region
        $region41: #{tpu_custom_call.1} parent=39 // pred_check
          %p2990 = pneg %p104
        $region42: #{tpu_custom_call.1} parent=39 // pred_check_branch
          %2992 = sbr.rel (%p2990) target = $region44
        $region43: #{tpu_custom_call.1} parent=39 // pred_region
          %s2993 = sand.u32 %s89, 1
          %s2994 = scalar_lea.sflag [#allocation3], %s2993
          %s2995 = sand.u32 %s89, 1
          %s2996 = smul.addr %s2995, 64
          %s2997 = scalar_lea.vmem [#allocation2], %s2996
          %2999 = dma.done %s2994, 1024
        $region44: #{tpu_custom_call.1} parent=39 // pred_fallthru
          _
      $region40: #{tpu_custom_call.1} parent=5 // pred_fallthru
        _
    $region6: #{tpu_custom_call.1} parent=1 // loop_footer
      %s16 = sadd.s32 1, %s12
    $region7: #{tpu_custom_call.1} parent=1 // loop_footer_branch
      %11 = sbr.rel target = $region3
    $region8: #{tpu_custom_call.1} parent=1 // loop_exit
      _
    %3000 = vsyncpa [#allocation3], 1
    %s3001 = scalar_lea.sflag [#allocation3], 1
    %3002 = vsyncpa %s3001, 1

</llo_original>
